<compile_context>
chip_gen: v7x
topology: tpu7x:2x2x1
jax: 0.10.0
libtpu: 0.0.40
codegen_flags: <defaults>
</compile_context>

<pallas_src>
import functools

import jax
import jax.numpy as jnp
from jax import lax
from jax.experimental import pallas as pl
from jax.experimental.pallas import tpu as pltpu

# ---- fixed module hyper-parameters (from the PyTorch spec) -------------------
CIN1, COUT1, K1 = 50, 100, 2      # ConvTranspose2d(50, 100, 2, stride=2)
CIN2, COUT2, K2 = 100, 25, 2      # ConvTranspose2d(100, 25, 2, stride=1)
CIN3, COUT3, K3 = 25, 75, 3       # ConvTranspose2d(25, 75, 3, stride=1)
CPAD = 128                        # lane-dense channel padding
CINP = 64                         # layer-1 input-channel padding (50 -> 64)


def _round_up(x, m):
    return (x + m - 1) // m * m


# -----------------------------------------------------------------------------
# Parameter packing (done once, outside the forward pass).
# -----------------------------------------------------------------------------
def pack_params(params):
    """Repack PyTorch ConvTranspose2d params into the fused-kernel layout."""
    w1, b1 = params["w1"], params["b1"]   # (50,100,2,2), (100,)
    w2, b2 = params["w2"], params["b2"]   # (100,25,2,2), (25,)
    w3, b3 = params["w3"], params["b3"]   # (25,75,3,3),  (75,)

    # Layer 1 (k == stride): one fused matmul, columns grouped per tap (a,b):
    #   w1big[ci, (a*K1+b)*CPAD + co] = w1[ci, co, a, b]
    w1t = jnp.transpose(w1, (0, 2, 3, 1))                          # (ci,a,b,co)
    w1t = jnp.pad(w1t, ((0, CINP - CIN1), (0, 0), (0, 0), (0, CPAD - COUT1)))
    w1big = w1t.reshape(CINP, K1 * K1 * CPAD).astype(jnp.bfloat16)
    b1big = jnp.tile(jnp.pad(b1, (0, CPAD - COUT1)),
                     K1 * K1).reshape(1, K1 * K1 * CPAD).astype(jnp.float32)

    # Layers 2/3 (stride 1): flipped per-tap weights, (tap, ci, co).
    w2t = jnp.transpose(jnp.flip(w2, (2, 3)), (2, 3, 0, 1))        # (a,b,ci,co)
    w2t = jnp.pad(w2t, ((0, 0), (0, 0), (0, CPAD - CIN2), (0, CPAD - COUT2)))
    w2taps = w2t.reshape(K2 * K2, CPAD, CPAD).astype(jnp.bfloat16)
    b2p = jnp.pad(b2, (0, CPAD - COUT2)).reshape(1, CPAD).astype(jnp.float32)

    w3t = jnp.transpose(jnp.flip(w3, (2, 3)), (2, 3, 0, 1))
    w3t = jnp.pad(w3t, ((0, 0), (0, 0), (0, CPAD - CIN3), (0, CPAD - COUT3)))
    w3taps = w3t.reshape(K3 * K3, CPAD, CPAD).astype(jnp.bfloat16)
    b3p = jnp.pad(b3, (0, CPAD - COUT3)).reshape(1, CPAD).astype(jnp.float32)

    return dict(w1=w1big, b1=b1big, w2=w2taps, b2=b2p, w3=w3taps, b3=b3p)


# -----------------------------------------------------------------------------
# Fused kernel: B_blk batch elements per grid step, all layers in VMEM.
# -----------------------------------------------------------------------------
def _fused_kernel(x_ref, w1_ref, b1_ref, w2_ref, b2_ref, w3_ref, b3_ref,
                  o_ref, y1p_ref, y2p_ref, *, B, H, W):
    f32 = jnp.float32
    H1, W1 = H * K1, W * K1
    H2, W2 = H1 + K2 - 1, W1 + K2 - 1
    H3, W3 = H2 + K3 - 1, W2 + K3 - 1
    W2C = _round_up(W2, 8)             # padded compute width (layout preserving)
    W3C = _round_up(W3, 8)
    P2, P3 = K2 - 1, K3 - 1
    HW = H * W
    sdt = y1p_ref.dtype                # bf16 scratch / MXU-operand dtype

    # ---- layer 1: ConvTranspose2d(50,100,2,stride=2); k == stride ------------
    # one fused matmul, tap slabs are 128-lane-aligned slices of the result
    x2 = x_ref[...].reshape(B * HW, x_ref.shape[-1])               # bf16
    y1all = jnp.dot(x2, w1_ref[...], preferred_element_type=f32)   # (B*HW, 512)
    y1all = (y1all + b1_ref[...]).astype(sdt)

    # interleave taps (a,b) -> spatial (2i+a, 2j+b); store at padding offset P2
    rows = []
    for a in range(K1):
        cols = []
        for b in range(K1):
            t = a * K1 + b
            cols.append(y1all[:, t * CPAD:(t + 1) * CPAD].reshape(B * HW, 1, CPAD))
        ra = jnp.concatenate(cols, axis=1).reshape(B * H, W1, CPAD)
        rows.append(ra.reshape(B * H, 1, W1, CPAD))
    y1 = jnp.concatenate(rows, axis=1).reshape(B, H1, W1, CPAD)
    y1p_ref[:, P2:P2 + H1, P2:P2 + W1, :] = y1

    # Re-write only the thin zero frame that valid layer-2 outputs read
    # (cells of y1p outside [0, H2+P2) x [0, W2+P2) are junk and only feed the
    # padded/discarded output columns -- they never touch valid results).
    y1p_ref[:, 0:P2, 0:W2 + P2, :] = jnp.zeros((B, P2, W2 + P2, CPAD), sdt)
    y1p_ref[:, P2 + H1:P2 + H2, 0:W2 + P2, :] = jnp.zeros((B, P2, W2 + P2, CPAD), sdt)
    y1p_ref[:, P2:P2 + H1, 0:P2, :] = jnp.zeros((B, H1, P2, CPAD), sdt)
    y1p_ref[:, P2:P2 + H1, P2 + W1:P2 + W2, :] = jnp.zeros((B, H1, P2, CPAD), sdt)

    # ---- layer 2: ConvTranspose2d(100,25,2,stride=1): per-tap accumulation ---
    acc2 = None
    for a in range(K2):
        for b in range(K2):
            win = y1p_ref[:, a:a + H2, b:b + W2C, :].reshape(B * H2 * W2C, CPAD)
            d = jnp.dot(win, w2_ref[a * K2 + b], preferred_element_type=f32)
            acc2 = d if acc2 is None else acc2 + d
    y2 = (acc2 + b2_ref[...]).astype(sdt).reshape(B, H2, W2C, CPAD)

    # full padded-width store (cols >= W2 are junk); the frame zeroing below
    # (done AFTER the store) restores the K3-1 zero band read by valid outputs.
    y2p_ref[:, P3:P3 + H2, P3:P3 + W2C, :] = y2
    y2p_ref[:, 0:P3, 0:W3 + P3, :] = jnp.zeros((B, P3, W3 + P3, CPAD), sdt)
    y2p_ref[:, P3 + H2:P3 + H3, 0:W3 + P3, :] = jnp.zeros((B, P3, W3 + P3, CPAD), sdt)
    y2p_ref[:, P3:P3 + H2, 0:P3, :] = jnp.zeros((B, H2, P3, CPAD), sdt)
    y2p_ref[:, P3:P3 + H2, P3 + W2:P3 + W3, :] = jnp.zeros((B, H2, P3, CPAD), sdt)

    # ---- layer 3: ConvTranspose2d(25,75,3,stride=1): per-tap accumulation ----
    acc3 = None
    for a in range(K3):
        for b in range(K3):
            win = y2p_ref[:, a:a + H3, b:b + W3C, :].reshape(B * H3 * W3C, CPAD)
            d = jnp.dot(win, w3_ref[a * K3 + b], preferred_element_type=f32)
            acc3 = d if acc3 is None else acc3 + d
    o_ref[...] = (acc3 + b3_ref[...]).reshape(B, H3 * W3C, CPAD).astype(o_ref.dtype)


def _fused_pallas_call(N, H, W, B_blk):
    H1, W1 = H * K1, W * K1
    H2, W2 = H1 + K2 - 1, W1 + K2 - 1
    H3, W3 = H2 + K3 - 1, W2 + K3 - 1
    W2C, W3C = _round_up(W2, 8), _round_up(W3, 8)
    HW = H * W
    M3 = H3 * W3C                                   # lane/sublane-dense output rows
    S1H = (K2 - 1) + H2                             # scratch extents (rows)
    S2H = (K3 - 1) + H3
    SW = _round_up((K3 - 1) + max(W2C, W3C), 8)     # shared padded width

    flops = 2 * N * (HW * CINP * K1 * K1 * CPAD
                     + K2 * K2 * H2 * W2C * CPAD * CPAD
                     + K3 * K3 * H3 * W3C * CPAD * CPAD)
    bytes_accessed = (N * HW * CINP * 2 + N * M3 * CPAD * 4
                      + 2 * (CINP * K1 * K1 * CPAD
                             + (K2 * K2 + K3 * K3) * CPAD * CPAD))

    kernel = functools.partial(_fused_kernel, B=B_blk, H=H, W=W)
    return pl.pallas_call(
        kernel,
        out_shape=jax.ShapeDtypeStruct((N, M3, CPAD), jnp.float32),
        grid=(N // B_blk,),
        in_specs=[
            pl.BlockSpec((B_blk, HW, CINP), lambda n: (n, 0, 0)),        # x (bf16)
            pl.BlockSpec((CINP, K1 * K1 * CPAD), lambda n: (0, 0)),      # w1 fused
            pl.BlockSpec((1, K1 * K1 * CPAD), lambda n: (0, 0)),         # b1 tiled
            pl.BlockSpec((K2 * K2, CPAD, CPAD), lambda n: (0, 0, 0)),    # w2 taps
            pl.BlockSpec((1, CPAD), lambda n: (0, 0)),                   # b2
            pl.BlockSpec((K3 * K3, CPAD, CPAD), lambda n: (0, 0, 0)),    # w3 taps
            pl.BlockSpec((1, CPAD), lambda n: (0, 0)),                   # b3
        ],
        out_specs=pl.BlockSpec((B_blk, M3, CPAD), lambda n: (n, 0, 0)),
        scratch_shapes=[
            pltpu.VMEM((B_blk, S1H, SW, CPAD), jnp.bfloat16),  # padded layer-1 out
            pltpu.VMEM((B_blk, S2H, SW, CPAD), jnp.bfloat16),  # padded layer-2 out
        ],
        compiler_params=pltpu.CompilerParams(
            dimension_semantics=("parallel",)),
        cost_estimate=pl.CostEstimate(flops=flops, transcendentals=0,
                                      bytes_accessed=bytes_accessed),
    )


def model_forward(x_nchw, packed):
    """Fused Pallas forward of the 3-layer ConvTranspose model (NCHW in/out)."""
    N, cin, H, W = x_nchw.shape
    assert cin == CIN1, cin
    H1, W1 = H * K1, W * K1
    H2, W2 = H1 + K2 - 1, W1 + K2 - 1
    H3, W3 = H2 + K3 - 1, W2 + K3 - 1
    W3C = _round_up(W3, 8)
    B_blk = 2 if (N % 2 == 0 and N >= 4) else 1     # keep grid >= 2 for 2-TC chips

    x2d = jnp.transpose(x_nchw, (0, 2, 3, 1)).reshape(N, H * W, CIN1)
    x2d = jnp.pad(x2d, ((0, 0), (0, 0), (0, CINP - CIN1))).astype(jnp.bfloat16)

    out = _fused_pallas_call(N, H, W, B_blk)(
        x2d, packed["w1"], packed["b1"], packed["w2"], packed["b2"],
        packed["w3"], packed["b3"])
    y = out.reshape(N, H3, W3C, CPAD)[:, :, :W3, :COUT3]
    return jnp.transpose(y, (0, 3, 1, 2))                          # NHWC -> NCHW


# -----------------------------------------------------------------------------
# Pure-XLA reference (f32, HIGHEST precision) for the correctness check.
# -----------------------------------------------------------------------------
def _ref_conv_transpose2d_nhwc(x, w, b, *, stride):
    k = w.shape[2]
    wf = jnp.flip(w, axis=(2, 3)).transpose(2, 3, 0, 1)            # HWIO
    y = lax.conv_general_dilated(
        x, wf, window_strides=(1, 1),
        padding=[(k - 1, k - 1), (k - 1, k - 1)],
        lhs_dilation=(stride, stride),
        dimension_numbers=("NHWC", "HWIO", "NHWC"),
        precision=lax.Precision.HIGHEST)
    return y + b.reshape(1, 1, 1, -1)


def _ref_forward(x_nchw, params):
    x = jnp.transpose(x_nchw, (0, 2, 3, 1))
    x = _ref_conv_transpose2d_nhwc(x, params["w1"], params["b1"], stride=2)
    x = _ref_conv_transpose2d_nhwc(x, params["w2"], params["b2"], stride=1)
    x = _ref_conv_transpose2d_nhwc(x, params["w3"], params["b3"], stride=1)
    return jnp.transpose(x, (0, 3, 1, 2))


if __name__ == "__main__":
    key = jax.random.PRNGKey(0)
    ks = jax.random.split(key, 7)

    # Small shapes consistent with the module (first layer expects 50 channels).
    N, H, W = 2, 4, 4
    x = jax.random.normal(ks[0], (N, CIN1, H, W), dtype=jnp.float32)  # NCHW

    params = {
        # PyTorch ConvTranspose2d weight layout: (in_ch, out_ch, kH, kW)
        "w1": 0.1 * jax.random.normal(ks[1], (CIN1, COUT1, K1, K1), jnp.float32),
        "b1": 0.1 * jax.random.normal(ks[2], (COUT1,), jnp.float32),
        "w2": 0.1 * jax.random.normal(ks[3], (CIN2, COUT2, K2, K2), jnp.float32),
        "b2": 0.1 * jax.random.normal(ks[4], (COUT2,), jnp.float32),
        "w3": 0.1 * jax.random.normal(ks[5], (CIN3, COUT3, K3, K3), jnp.float32),
        "b3": 0.1 * jax.random.normal(ks[6], (COUT3,), jnp.float32),
    }

    # Weight repack (incl. bf16 cast) is hoisted out of the forward pass.
    packed = jax.tree_util.tree_map(jax.block_until_ready, pack_params(params))

    fwd = jax.jit(model_forward)
    y = jax.block_until_ready(fwd(x, packed))

    # Shape check: (N,50,4,4) -> (N,100,8,8) -> (N,25,9,9) -> (N,75,11,11)
    assert y.shape == (N, COUT3, 11, 11), y.shape

    # Numerical check vs f32 XLA reference.  Kernel runs bf16 MXU operands with
    # f32 accumulation, so compare with bf16-appropriate tolerances.
    y_ref = jax.block_until_ready(_ref_forward(x, params))
    max_err = float(jnp.max(jnp.abs(y - y_ref)))
    mean_err = float(jnp.mean(jnp.abs(y - y_ref)))
    scale = float(jnp.max(jnp.abs(y_ref)))
    assert max_err < 2e-2 * scale, (max_err, scale)
    assert mean_err < 2e-2, mean_err

    print("KERNEL_OK")
</pallas_src>

<mosaic_0001>
module attributes {stable_mosaic.version = 11 : i64} {
  func.func @_fused_kernel(%arg0: i32, %arg1: memref<1x16x64xbf16, #tpu.memory_space<vmem>>, %arg2: memref<64x512xbf16, #tpu.memory_space<vmem>>, %arg3: memref<1x512xf32, #tpu.memory_space<vmem>>, %arg4: memref<4x128x128xbf16, #tpu.memory_space<vmem>>, %arg5: memref<1x128xf32, #tpu.memory_space<vmem>>, %arg6: memref<9x128x128xbf16, #tpu.memory_space<vmem>>, %arg7: memref<1x128xf32, #tpu.memory_space<vmem>>, %arg8: memref<1x176x128xf32, #tpu.memory_space<vmem>>, %arg9: memref<1x10x24x128xbf16, #tpu.memory_space<vmem>>, %arg10: memref<1x13x24x128xbf16, #tpu.memory_space<vmem>>) attributes {dimension_semantics = [#tpu.dimension_semantics<parallel>], iteration_bounds = array<i64: 2>, scalar_prefetch = 0 : i64, scratch_operands = 2 : i64, tpu.core_type = #tpu.core_type<tc>, window_params = [{transform_indices = @transform_0, window_bounds = array<i64: 1, 16, 64>}, {pipeline_mode = #tpu.pipeline_mode<synchronous>, transform_indices = @transform_1, window_bounds = array<i64: 64, 512>}, {pipeline_mode = #tpu.pipeline_mode<synchronous>, transform_indices = @transform_2, window_bounds = array<i64: 1, 512>}, {pipeline_mode = #tpu.pipeline_mode<synchronous>, transform_indices = @transform_3, window_bounds = array<i64: 4, 128, 128>}, {pipeline_mode = #tpu.pipeline_mode<synchronous>, transform_indices = @transform_4, window_bounds = array<i64: 1, 128>}, {pipeline_mode = #tpu.pipeline_mode<synchronous>, transform_indices = @transform_5, window_bounds = array<i64: 9, 128, 128>}, {pipeline_mode = #tpu.pipeline_mode<synchronous>, transform_indices = @transform_6, window_bounds = array<i64: 1, 128>}, {transform_indices = @transform_7, window_bounds = array<i64: 1, 176, 128>}]} {
    %c0 = arith.constant 0 : index
    %c0_0 = arith.constant 0 : index
    %c0_1 = arith.constant 0 : index
    %0 = vector.load %arg1[%c0, %c0_0, %c0_1] : memref<1x16x64xbf16, #tpu.memory_space<vmem>>, vector<1x16x64xbf16>
    %1 = vector.shape_cast %0 : vector<1x16x64xbf16> to vector<16x64xbf16>
    %c0_2 = arith.constant 0 : index
    %c0_3 = arith.constant 0 : index
    %2 = vector.load %arg2[%c0_2, %c0_3] : memref<64x512xbf16, #tpu.memory_space<vmem>>, vector<64x512xbf16>
    %cst = arith.constant dense<0.000000e+00> : vector<16x512xf32>
    %3 = tpu.matmul %1, %2, %cst {dimension_numbers = #tpu.dot_dimension_numbers<[1], [0], [0], [1], [0, 0, 1, 1], [], []>} : vector<16x64xbf16>, vector<64x512xbf16>, vector<16x512xf32> -> vector<16x512xf32>
    %c0_4 = arith.constant 0 : index
    %c0_5 = arith.constant 0 : index
    %4 = vector.load %arg3[%c0_4, %c0_5] : memref<1x512xf32, #tpu.memory_space<vmem>>, vector<1x512xf32>
    %5 = vector.broadcast %4 : vector<1x512xf32> to vector<16x512xf32>
    %6 = arith.addf %3, %5 : vector<16x512xf32>
    %7 = arith.truncf %6 : vector<16x512xf32> to vector<16x512xbf16>
    %8 = vector.extract_strided_slice %7 {offsets = [0, 0], sizes = [16, 128], strides = [1, 1]} : vector<16x512xbf16> to vector<16x128xbf16>
    %9 = vector.shape_cast %8 : vector<16x128xbf16> to vector<16x1x128xbf16>
    %10 = vector.extract_strided_slice %7 {offsets = [0, 128], sizes = [16, 128], strides = [1, 1]} : vector<16x512xbf16> to vector<16x128xbf16>
    %11 = vector.shape_cast %10 : vector<16x128xbf16> to vector<16x1x128xbf16>
    %12 = tpu.concatenate %9, %11 in 1 : vector<16x1x128xbf16>, vector<16x1x128xbf16> -> vector<16x2x128xbf16>
    %13 = vector.shape_cast %12 : vector<16x2x128xbf16> to vector<4x8x128xbf16>
    %14 = vector.shape_cast %13 : vector<4x8x128xbf16> to vector<4x1x8x128xbf16>
    %15 = vector.extract_strided_slice %7 {offsets = [0, 256], sizes = [16, 128], strides = [1, 1]} : vector<16x512xbf16> to vector<16x128xbf16>
    %16 = vector.shape_cast %15 : vector<16x128xbf16> to vector<16x1x128xbf16>
    %17 = vector.extract_strided_slice %7 {offsets = [0, 384], sizes = [16, 128], strides = [1, 1]} : vector<16x512xbf16> to vector<16x128xbf16>
    %18 = vector.shape_cast %17 : vector<16x128xbf16> to vector<16x1x128xbf16>
    %19 = tpu.concatenate %16, %18 in 1 : vector<16x1x128xbf16>, vector<16x1x128xbf16> -> vector<16x2x128xbf16>
    %20 = vector.shape_cast %19 : vector<16x2x128xbf16> to vector<4x8x128xbf16>
    %21 = vector.shape_cast %20 : vector<4x8x128xbf16> to vector<4x1x8x128xbf16>
    %22 = tpu.concatenate %14, %21 in 1 : vector<4x1x8x128xbf16>, vector<4x1x8x128xbf16> -> vector<4x2x8x128xbf16>
    %23 = vector.shape_cast %22 : vector<4x2x8x128xbf16> to vector<1x8x8x128xbf16>
    %c0_6 = arith.constant 0 : index
    %c1 = arith.constant 1 : index
    %c1_7 = arith.constant 1 : index
    %c0_8 = arith.constant 0 : index
    %24 = vector.load %arg9[%c0_6, %c1, %c1_7, %c0_8] : memref<1x10x24x128xbf16, #tpu.memory_space<vmem>>, vector<1x8x8x128xbf16>
    tpu.vector_store %arg9[%c0_6, %c1, %c1_7, %c0_8], %23 {strides = array<i32>} : memref<1x10x24x128xbf16, #tpu.memory_space<vmem>>, vector<1x8x8x128xbf16>,
    %cst_9 = arith.constant 0.000000e+00 : bf16
    %25 = vector.broadcast %cst_9 : bf16 to vector<1x1x10x128xbf16>
    %c0_10 = arith.constant 0 : index
    %c0_11 = arith.constant 0 : index
    %c0_12 = arith.constant 0 : index
    %c0_13 = arith.constant 0 : index
    %26 = vector.load %arg9[%c0_10, %c0_11, %c0_12, %c0_13] : memref<1x10x24x128xbf16, #tpu.memory_space<vmem>>, vector<1x1x10x128xbf16>
    tpu.vector_store %arg9[%c0_10, %c0_11, %c0_12, %c0_13], %25 {strides = array<i32>} : memref<1x10x24x128xbf16, #tpu.memory_space<vmem>>, vector<1x1x10x128xbf16>,
    %cst_14 = arith.constant 0.000000e+00 : bf16
    %27 = vector.broadcast %cst_14 : bf16 to vector<1x1x10x128xbf16>
    %c0_15 = arith.constant 0 : index
    %c9 = arith.constant 9 : index
    %c0_16 = arith.constant 0 : index
    %c0_17 = arith.constant 0 : index
    %28 = vector.load %arg9[%c0_15, %c9, %c0_16, %c0_17] : memref<1x10x24x128xbf16, #tpu.memory_space<vmem>>, vector<1x1x10x128xbf16>
    tpu.vector_store %arg9[%c0_15, %c9, %c0_16, %c0_17], %27 {strides = array<i32>} : memref<1x10x24x128xbf16, #tpu.memory_space<vmem>>, vector<1x1x10x128xbf16>,
    %cst_18 = arith.constant 0.000000e+00 : bf16
    %29 = vector.broadcast %cst_18 : bf16 to vector<1x8x1x128xbf16>
    %c0_19 = arith.constant 0 : index
    %c1_20 = arith.constant 1 : index
    %c0_21 = arith.constant 0 : index
    %c0_22 = arith.constant 0 : index
    %30 = vector.load %arg9[%c0_19, %c1_20, %c0_21, %c0_22] : memref<1x10x24x128xbf16, #tpu.memory_space<vmem>>, vector<1x8x1x128xbf16>
    tpu.vector_store %arg9[%c0_19, %c1_20, %c0_21, %c0_22], %29 {strides = array<i32>} : memref<1x10x24x128xbf16, #tpu.memory_space<vmem>>, vector<1x8x1x128xbf16>,
    %cst_23 = arith.constant 0.000000e+00 : bf16
    %31 = vector.broadcast %cst_23 : bf16 to vector<1x8x1x128xbf16>
    %c0_24 = arith.constant 0 : index
    %c1_25 = arith.constant 1 : index
    %c9_26 = arith.constant 9 : index
    %c0_27 = arith.constant 0 : index
    %32 = vector.load %arg9[%c0_24, %c1_25, %c9_26, %c0_27] : memref<1x10x24x128xbf16, #tpu.memory_space<vmem>>, vector<1x8x1x128xbf16>
    tpu.vector_store %arg9[%c0_24, %c1_25, %c9_26, %c0_27], %31 {strides = array<i32>} : memref<1x10x24x128xbf16, #tpu.memory_space<vmem>>, vector<1x8x1x128xbf16>,
    %c0_28 = arith.constant 0 : index
    %c0_29 = arith.constant 0 : index
    %c0_30 = arith.constant 0 : index
    %c0_31 = arith.constant 0 : index
    %33 = vector.load %arg9[%c0_28, %c0_29, %c0_30, %c0_31] : memref<1x10x24x128xbf16, #tpu.memory_space<vmem>>, vector<1x9x16x128xbf16>
    %34 = vector.shape_cast %33 : vector<1x9x16x128xbf16> to vector<144x128xbf16>
    %c0_32 = arith.constant 0 : index
    %c0_33 = arith.constant 0 : index
    %c0_34 = arith.constant 0 : index
    %35 = vector.load %arg4[%c0_32, %c0_33, %c0_34] : memref<4x128x128xbf16, #tpu.memory_space<vmem>>, vector<1x128x128xbf16>
    %36 = vector.shape_cast %35 : vector<1x128x128xbf16> to vector<128x128xbf16>
    %cst_35 = arith.constant dense<0.000000e+00> : vector<144x128xf32>
    %37 = tpu.matmul %34, %36, %cst_35 {dimension_numbers = #tpu.dot_dimension_numbers<[1], [0], [0], [1], [0, 0, 1, 1], [], []>} : vector<144x128xbf16>, vector<128x128xbf16>, vector<144x128xf32> -> vector<144x128xf32>
    %c0_36 = arith.constant 0 : index
    %c0_37 = arith.constant 0 : index
    %c1_38 = arith.constant 1 : index
    %c0_39 = arith.constant 0 : index
    %38 = vector.load %arg9[%c0_36, %c0_37, %c1_38, %c0_39] : memref<1x10x24x128xbf16, #tpu.memory_space<vmem>>, vector<1x9x16x128xbf16>
    %39 = vector.shape_cast %38 : vector<1x9x16x128xbf16> to vector<144x128xbf16>
    %c1_40 = arith.constant 1 : index
    %c0_41 = arith.constant 0 : index
    %c0_42 = arith.constant 0 : index
    %40 = vector.load %arg4[%c1_40, %c0_41, %c0_42] : memref<4x128x128xbf16, #tpu.memory_space<vmem>>, vector<1x128x128xbf16>
    %41 = vector.shape_cast %40 : vector<1x128x128xbf16> to vector<128x128xbf16>
    %cst_43 = arith.constant dense<0.000000e+00> : vector<144x128xf32>
    %42 = tpu.matmul %39, %41, %cst_43 {dimension_numbers = #tpu.dot_dimension_numbers<[1], [0], [0], [1], [0, 0, 1, 1], [], []>} : vector<144x128xbf16>, vector<128x128xbf16>, vector<144x128xf32> -> vector<144x128xf32>
    %43 = arith.addf %37, %42 : vector<144x128xf32>
    %c0_44 = arith.constant 0 : index
    %c1_45 = arith.constant 1 : index
    %c0_46 = arith.constant 0 : index
    %c0_47 = arith.constant 0 : index
    %44 = vector.load %arg9[%c0_44, %c1_45, %c0_46, %c0_47] : memref<1x10x24x128xbf16, #tpu.memory_space<vmem>>, vector<1x9x16x128xbf16>
    %45 = vector.shape_cast %44 : vector<1x9x16x128xbf16> to vector<144x128xbf16>
    %c2 = arith.constant 2 : index
    %c0_48 = arith.constant 0 : index
    %c0_49 = arith.constant 0 : index
    %46 = vector.load %arg4[%c2, %c0_48, %c0_49] : memref<4x128x128xbf16, #tpu.memory_space<vmem>>, vector<1x128x128xbf16>
    %47 = vector.shape_cast %46 : vector<1x128x128xbf16> to vector<128x128xbf16>
    %cst_50 = arith.constant dense<0.000000e+00> : vector<144x128xf32>
    %48 = tpu.matmul %45, %47, %cst_50 {dimension_numbers = #tpu.dot_dimension_numbers<[1], [0], [0], [1], [0, 0, 1, 1], [], []>} : vector<144x128xbf16>, vector<128x128xbf16>, vector<144x128xf32> -> vector<144x128xf32>
    %49 = arith.addf %43, %48 : vector<144x128xf32>
    %c0_51 = arith.constant 0 : index
    %c1_52 = arith.constant 1 : index
    %c1_53 = arith.constant 1 : index
    %c0_54 = arith.constant 0 : index
    %50 = vector.load %arg9[%c0_51, %c1_52, %c1_53, %c0_54] : memref<1x10x24x128xbf16, #tpu.memory_space<vmem>>, vector<1x9x16x128xbf16>
    %51 = vector.shape_cast %50 : vector<1x9x16x128xbf16> to vector<144x128xbf16>
    %c3 = arith.constant 3 : index
    %c0_55 = arith.constant 0 : index
    %c0_56 = arith.constant 0 : index
    %52 = vector.load %arg4[%c3, %c0_55, %c0_56] : memref<4x128x128xbf16, #tpu.memory_space<vmem>>, vector<1x128x128xbf16>
    %53 = vector.shape_cast %52 : vector<1x128x128xbf16> to vector<128x128xbf16>
    %cst_57 = arith.constant dense<0.000000e+00> : vector<144x128xf32>
    %54 = tpu.matmul %51, %53, %cst_57 {dimension_numbers = #tpu.dot_dimension_numbers<[1], [0], [0], [1], [0, 0, 1, 1], [], []>} : vector<144x128xbf16>, vector<128x128xbf16>, vector<144x128xf32> -> vector<144x128xf32>
    %55 = arith.addf %49, %54 : vector<144x128xf32>
    %c0_58 = arith.constant 0 : index
    %c0_59 = arith.constant 0 : index
    %56 = vector.load %arg5[%c0_58, %c0_59] : memref<1x128xf32, #tpu.memory_space<vmem>>, vector<1x128xf32>
    %57 = vector.broadcast %56 : vector<1x128xf32> to vector<144x128xf32>
    %58 = arith.addf %55, %57 : vector<144x128xf32>
    %59 = arith.truncf %58 : vector<144x128xf32> to vector<144x128xbf16>
    %60 = vector.shape_cast %59 : vector<144x128xbf16> to vector<1x9x16x128xbf16>
    %c0_60 = arith.constant 0 : index
    %c2_61 = arith.constant 2 : index
    %c2_62 = arith.constant 2 : index
    %c0_63 = arith.constant 0 : index
    %61 = vector.load %arg10[%c0_60, %c2_61, %c2_62, %c0_63] : memref<1x13x24x128xbf16, #tpu.memory_space<vmem>>, vector<1x9x16x128xbf16>
    tpu.vector_store %arg10[%c0_60, %c2_61, %c2_62, %c0_63], %60 {strides = array<i32>} : memref<1x13x24x128xbf16, #tpu.memory_space<vmem>>, vector<1x9x16x128xbf16>,
    %cst_64 = arith.constant 0.000000e+00 : bf16
    %62 = vector.broadcast %cst_64 : bf16 to vector<1x2x13x128xbf16>
    %c0_65 = arith.constant 0 : index
    %c0_66 = arith.constant 0 : index
    %c0_67 = arith.constant 0 : index
    %c0_68 = arith.constant 0 : index
    %63 = vector.load %arg10[%c0_65, %c0_66, %c0_67, %c0_68] : memref<1x13x24x128xbf16, #tpu.memory_space<vmem>>, vector<1x2x13x128xbf16>
    tpu.vector_store %arg10[%c0_65, %c0_66, %c0_67, %c0_68], %62 {strides = array<i32>} : memref<1x13x24x128xbf16, #tpu.memory_space<vmem>>, vector<1x2x13x128xbf16>,
    %cst_69 = arith.constant 0.000000e+00 : bf16
    %64 = vector.broadcast %cst_69 : bf16 to vector<1x2x13x128xbf16>
    %c0_70 = arith.constant 0 : index
    %c11 = arith.constant 11 : index
    %c0_71 = arith.constant 0 : index
    %c0_72 = arith.constant 0 : index
    %65 = vector.load %arg10[%c0_70, %c11, %c0_71, %c0_72] : memref<1x13x24x128xbf16, #tpu.memory_space<vmem>>, vector<1x2x13x128xbf16>
    tpu.vector_store %arg10[%c0_70, %c11, %c0_71, %c0_72], %64 {strides = array<i32>} : memref<1x13x24x128xbf16, #tpu.memory_space<vmem>>, vector<1x2x13x128xbf16>,
    %cst_73 = arith.constant 0.000000e+00 : bf16
    %66 = vector.broadcast %cst_73 : bf16 to vector<1x9x2x128xbf16>
    %c0_74 = arith.constant 0 : index
    %c2_75 = arith.constant 2 : index
    %c0_76 = arith.constant 0 : index
    %c0_77 = arith.constant 0 : index
    %67 = vector.load %arg10[%c0_74, %c2_75, %c0_76, %c0_77] : memref<1x13x24x128xbf16, #tpu.memory_space<vmem>>, vector<1x9x2x128xbf16>
    tpu.vector_store %arg10[%c0_74, %c2_75, %c0_76, %c0_77], %66 {strides = array<i32>} : memref<1x13x24x128xbf16, #tpu.memory_space<vmem>>, vector<1x9x2x128xbf16>,
    %cst_78 = arith.constant 0.000000e+00 : bf16
    %68 = vector.broadcast %cst_78 : bf16 to vector<1x9x2x128xbf16>
    %c0_79 = arith.constant 0 : index
    %c2_80 = arith.constant 2 : index
    %c11_81 = arith.constant 11 : index
    %c0_82 = arith.constant 0 : index
    %69 = vector.load %arg10[%c0_79, %c2_80, %c11_81, %c0_82] : memref<1x13x24x128xbf16, #tpu.memory_space<vmem>>, vector<1x9x2x128xbf16>
    tpu.vector_store %arg10[%c0_79, %c2_80, %c11_81, %c0_82], %68 {strides = array<i32>} : memref<1x13x24x128xbf16, #tpu.memory_space<vmem>>, vector<1x9x2x128xbf16>,
    %c0_83 = arith.constant 0 : index
    %c0_84 = arith.constant 0 : index
    %c0_85 = arith.constant 0 : index
    %c0_86 = arith.constant 0 : index
    %70 = vector.load %arg10[%c0_83, %c0_84, %c0_85, %c0_86] : memref<1x13x24x128xbf16, #tpu.memory_space<vmem>>, vector<1x11x16x128xbf16>
    %71 = vector.shape_cast %70 : vector<1x11x16x128xbf16> to vector<176x128xbf16>
    %c0_87 = arith.constant 0 : index
    %c0_88 = arith.constant 0 : index
    %c0_89 = arith.constant 0 : index
    %72 = vector.load %arg6[%c0_87, %c0_88, %c0_89] : memref<9x128x128xbf16, #tpu.memory_space<vmem>>, vector<1x128x128xbf16>
    %73 = vector.shape_cast %72 : vector<1x128x128xbf16> to vector<128x128xbf16>
    %cst_90 = arith.constant dense<0.000000e+00> : vector<176x128xf32>
    %74 = tpu.matmul %71, %73, %cst_90 {dimension_numbers = #tpu.dot_dimension_numbers<[1], [0], [0], [1], [0, 0, 1, 1], [], []>} : vector<176x128xbf16>, vector<128x128xbf16>, vector<176x128xf32> -> vector<176x128xf32>
    %c0_91 = arith.constant 0 : index
    %c0_92 = arith.constant 0 : index
    %c1_93 = arith.constant 1 : index
    %c0_94 = arith.constant 0 : index
    %75 = vector.load %arg10[%c0_91, %c0_92, %c1_93, %c0_94] : memref<1x13x24x128xbf16, #tpu.memory_space<vmem>>, vector<1x11x16x128xbf16>
    %76 = vector.shape_cast %75 : vector<1x11x16x128xbf16> to vector<176x128xbf16>
    %c1_95 = arith.constant 1 : index
    %c0_96 = arith.constant 0 : index
    %c0_97 = arith.constant 0 : index
    %77 = vector.load %arg6[%c1_95, %c0_96, %c0_97] : memref<9x128x128xbf16, #tpu.memory_space<vmem>>, vector<1x128x128xbf16>
    %78 = vector.shape_cast %77 : vector<1x128x128xbf16> to vector<128x128xbf16>
    %cst_98 = arith.constant dense<0.000000e+00> : vector<176x128xf32>
    %79 = tpu.matmul %76, %78, %cst_98 {dimension_numbers = #tpu.dot_dimension_numbers<[1], [0], [0], [1], [0, 0, 1, 1], [], []>} : vector<176x128xbf16>, vector<128x128xbf16>, vector<176x128xf32> -> vector<176x128xf32>
    %80 = arith.addf %74, %79 : vector<176x128xf32>
    %c0_99 = arith.constant 0 : index
    %c0_100 = arith.constant 0 : index
    %c2_101 = arith.constant 2 : index
    %c0_102 = arith.constant 0 : index
    %81 = vector.load %arg10[%c0_99, %c0_100, %c2_101, %c0_102] : memref<1x13x24x128xbf16, #tpu.memory_space<vmem>>, vector<1x11x16x128xbf16>
    %82 = vector.shape_cast %81 : vector<1x11x16x128xbf16> to vector<176x128xbf16>
    %c2_103 = arith.constant 2 : index
    %c0_104 = arith.constant 0 : index
    %c0_105 = arith.constant 0 : index
    %83 = vector.load %arg6[%c2_103, %c0_104, %c0_105] : memref<9x128x128xbf16, #tpu.memory_space<vmem>>, vector<1x128x128xbf16>
    %84 = vector.shape_cast %83 : vector<1x128x128xbf16> to vector<128x128xbf16>
    %cst_106 = arith.constant dense<0.000000e+00> : vector<176x128xf32>
    %85 = tpu.matmul %82, %84, %cst_106 {dimension_numbers = #tpu.dot_dimension_numbers<[1], [0], [0], [1], [0, 0, 1, 1], [], []>} : vector<176x128xbf16>, vector<128x128xbf16>, vector<176x128xf32> -> vector<176x128xf32>
    %86 = arith.addf %80, %85 : vector<176x128xf32>
    %c0_107 = arith.constant 0 : index
    %c1_108 = arith.constant 1 : index
    %c0_109 = arith.constant 0 : index
    %c0_110 = arith.constant 0 : index
    %87 = vector.load %arg10[%c0_107, %c1_108, %c0_109, %c0_110] : memref<1x13x24x128xbf16, #tpu.memory_space<vmem>>, vector<1x11x16x128xbf16>
    %88 = vector.shape_cast %87 : vector<1x11x16x128xbf16> to vector<176x128xbf16>
    %c3_111 = arith.constant 3 : index
    %c0_112 = arith.constant 0 : index
    %c0_113 = arith.constant 0 : index
    %89 = vector.load %arg6[%c3_111, %c0_112, %c0_113] : memref<9x128x128xbf16, #tpu.memory_space<vmem>>, vector<1x128x128xbf16>
    %90 = vector.shape_cast %89 : vector<1x128x128xbf16> to vector<128x128xbf16>
    %cst_114 = arith.constant dense<0.000000e+00> : vector<176x128xf32>
    %91 = tpu.matmul %88, %90, %cst_114 {dimension_numbers = #tpu.dot_dimension_numbers<[1], [0], [0], [1], [0, 0, 1, 1], [], []>} : vector<176x128xbf16>, vector<128x128xbf16>, vector<176x128xf32> -> vector<176x128xf32>
    %92 = arith.addf %86, %91 : vector<176x128xf32>
    %c0_115 = arith.constant 0 : index
    %c1_116 = arith.constant 1 : index
    %c1_117 = arith.constant 1 : index
    %c0_118 = arith.constant 0 : index
    %93 = vector.load %arg10[%c0_115, %c1_116, %c1_117, %c0_118] : memref<1x13x24x128xbf16, #tpu.memory_space<vmem>>, vector<1x11x16x128xbf16>
    %94 = vector.shape_cast %93 : vector<1x11x16x128xbf16> to vector<176x128xbf16>
    %c4 = arith.constant 4 : index
    %c0_119 = arith.constant 0 : index
    %c0_120 = arith.constant 0 : index
    %95 = vector.load %arg6[%c4, %c0_119, %c0_120] : memref<9x128x128xbf16, #tpu.memory_space<vmem>>, vector<1x128x128xbf16>
    %96 = vector.shape_cast %95 : vector<1x128x128xbf16> to vector<128x128xbf16>
    %cst_121 = arith.constant dense<0.000000e+00> : vector<176x128xf32>
    %97 = tpu.matmul %94, %96, %cst_121 {dimension_numbers = #tpu.dot_dimension_numbers<[1], [0], [0], [1], [0, 0, 1, 1], [], []>} : vector<176x128xbf16>, vector<128x128xbf16>, vector<176x128xf32> -> vector<176x128xf32>
    %98 = arith.addf %92, %97 : vector<176x128xf32>
    %c0_122 = arith.constant 0 : index
    %c1_123 = arith.constant 1 : index
    %c2_124 = arith.constant 2 : index
    %c0_125 = arith.constant 0 : index
    %99 = vector.load %arg10[%c0_122, %c1_123, %c2_124, %c0_125] : memref<1x13x24x128xbf16, #tpu.memory_space<vmem>>, vector<1x11x16x128xbf16>
    %100 = vector.shape_cast %99 : vector<1x11x16x128xbf16> to vector<176x128xbf16>
    %c5 = arith.constant 5 : index
    %c0_126 = arith.constant 0 : index
    %c0_127 = arith.constant 0 : index
    %101 = vector.load %arg6[%c5, %c0_126, %c0_127] : memref<9x128x128xbf16, #tpu.memory_space<vmem>>, vector<1x128x128xbf16>
    %102 = vector.shape_cast %101 : vector<1x128x128xbf16> to vector<128x128xbf16>
    %cst_128 = arith.constant dense<0.000000e+00> : vector<176x128xf32>
    %103 = tpu.matmul %100, %102, %cst_128 {dimension_numbers = #tpu.dot_dimension_numbers<[1], [0], [0], [1], [0, 0, 1, 1], [], []>} : vector<176x128xbf16>, vector<128x128xbf16>, vector<176x128xf32> -> vector<176x128xf32>
    %104 = arith.addf %98, %103 : vector<176x128xf32>
    %c0_129 = arith.constant 0 : index
    %c2_130 = arith.constant 2 : index
    %c0_131 = arith.constant 0 : index
    %c0_132 = arith.constant 0 : index
    %105 = vector.load %arg10[%c0_129, %c2_130, %c0_131, %c0_132] : memref<1x13x24x128xbf16, #tpu.memory_space<vmem>>, vector<1x11x16x128xbf16>
    %106 = vector.shape_cast %105 : vector<1x11x16x128xbf16> to vector<176x128xbf16>
    %c6 = arith.constant 6 : index
    %c0_133 = arith.constant 0 : index
    %c0_134 = arith.constant 0 : index
    %107 = vector.load %arg6[%c6, %c0_133, %c0_134] : memref<9x128x128xbf16, #tpu.memory_space<vmem>>, vector<1x128x128xbf16>
    %108 = vector.shape_cast %107 : vector<1x128x128xbf16> to vector<128x128xbf16>
    %cst_135 = arith.constant dense<0.000000e+00> : vector<176x128xf32>
    %109 = tpu.matmul %106, %108, %cst_135 {dimension_numbers = #tpu.dot_dimension_numbers<[1], [0], [0], [1], [0, 0, 1, 1], [], []>} : vector<176x128xbf16>, vector<128x128xbf16>, vector<176x128xf32> -> vector<176x128xf32>
    %110 = arith.addf %104, %109 : vector<176x128xf32>
    %c0_136 = arith.constant 0 : index
    %c2_137 = arith.constant 2 : index
    %c1_138 = arith.constant 1 : index
    %c0_139 = arith.constant 0 : index
    %111 = vector.load %arg10[%c0_136, %c2_137, %c1_138, %c0_139] : memref<1x13x24x128xbf16, #tpu.memory_space<vmem>>, vector<1x11x16x128xbf16>
    %112 = vector.shape_cast %111 : vector<1x11x16x128xbf16> to vector<176x128xbf16>
    %c7 = arith.constant 7 : index
    %c0_140 = arith.constant 0 : index
    %c0_141 = arith.constant 0 : index
    %113 = vector.load %arg6[%c7, %c0_140, %c0_141] : memref<9x128x128xbf16, #tpu.memory_space<vmem>>, vector<1x128x128xbf16>
    %114 = vector.shape_cast %113 : vector<1x128x128xbf16> to vector<128x128xbf16>
    %cst_142 = arith.constant dense<0.000000e+00> : vector<176x128xf32>
    %115 = tpu.matmul %112, %114, %cst_142 {dimension_numbers = #tpu.dot_dimension_numbers<[1], [0], [0], [1], [0, 0, 1, 1], [], []>} : vector<176x128xbf16>, vector<128x128xbf16>, vector<176x128xf32> -> vector<176x128xf32>
    %116 = arith.addf %110, %115 : vector<176x128xf32>
    %c0_143 = arith.constant 0 : index
    %c2_144 = arith.constant 2 : index
    %c2_145 = arith.constant 2 : index
    %c0_146 = arith.constant 0 : index
    %117 = vector.load %arg10[%c0_143, %c2_144, %c2_145, %c0_146] : memref<1x13x24x128xbf16, #tpu.memory_space<vmem>>, vector<1x11x16x128xbf16>
    %118 = vector.shape_cast %117 : vector<1x11x16x128xbf16> to vector<176x128xbf16>
    %c8 = arith.constant 8 : index
    %c0_147 = arith.constant 0 : index
    %c0_148 = arith.constant 0 : index
    %119 = vector.load %arg6[%c8, %c0_147, %c0_148] : memref<9x128x128xbf16, #tpu.memory_space<vmem>>, vector<1x128x128xbf16>
    %120 = vector.shape_cast %119 : vector<1x128x128xbf16> to vector<128x128xbf16>
    %cst_149 = arith.constant dense<0.000000e+00> : vector<176x128xf32>
    %121 = tpu.matmul %118, %120, %cst_149 {dimension_numbers = #tpu.dot_dimension_numbers<[1], [0], [0], [1], [0, 0, 1, 1], [], []>} : vector<176x128xbf16>, vector<128x128xbf16>, vector<176x128xf32> -> vector<176x128xf32>
    %122 = arith.addf %116, %121 : vector<176x128xf32>
    %c0_150 = arith.constant 0 : index
    %c0_151 = arith.constant 0 : index
    %123 = vector.load %arg7[%c0_150, %c0_151] : memref<1x128xf32, #tpu.memory_space<vmem>>, vector<1x128xf32>
    %124 = vector.broadcast %123 : vector<1x128xf32> to vector<176x128xf32>
    %125 = arith.addf %122, %124 : vector<176x128xf32>
    %126 = vector.shape_cast %125 : vector<176x128xf32> to vector<1x176x128xf32>
    %c0_152 = arith.constant 0 : index
    %c0_153 = arith.constant 0 : index
    %c0_154 = arith.constant 0 : index
    %127 = vector.load %arg8[%c0_152, %c0_153, %c0_154] : memref<1x176x128xf32, #tpu.memory_space<vmem>>, vector<1x176x128xf32>
    tpu.vector_store %arg8[%c0_152, %c0_153, %c0_154], %126 {strides = array<i32>} : memref<1x176x128xf32, #tpu.memory_space<vmem>>, vector<1x176x128xf32>,
    return
  }
  func.func @transform_0(%arg0: i32) -> (i32, i32, i32) {
    %c0_i32 = arith.constant 0 : i32
    %c0_i32_0 = arith.constant 0 : i32
    %c0_i32_1 = arith.constant 0 : i32
    return %arg0, %c0_i32, %c0_i32_0 : i32, i32, i32
  }
  func.func @transform_1(%arg0: i32) -> (i32, i32) {
    %c0_i32 = arith.constant 0 : i32
    %c0_i32_0 = arith.constant 0 : i32
    %c0_i32_1 = arith.constant 0 : i32
    return %c0_i32, %c0_i32_0 : i32, i32
  }
  func.func @transform_2(%arg0: i32) -> (i32, i32) {
    %c0_i32 = arith.constant 0 : i32
    %c0_i32_0 = arith.constant 0 : i32
    %c0_i32_1 = arith.constant 0 : i32
    return %c0_i32, %c0_i32_0 : i32, i32
  }
  func.func @transform_3(%arg0: i32) -> (i32, i32, i32) {
    %c0_i32 = arith.constant 0 : i32
    %c0_i32_0 = arith.constant 0 : i32
    %c0_i32_1 = arith.constant 0 : i32
    %c0_i32_2 = arith.constant 0 : i32
    return %c0_i32, %c0_i32_0, %c0_i32_1 : i32, i32, i32
  }
  func.func @transform_4(%arg0: i32) -> (i32, i32) {
    %c0_i32 = arith.constant 0 : i32
    %c0_i32_0 = arith.constant 0 : i32
    %c0_i32_1 = arith.constant 0 : i32
    return %c0_i32, %c0_i32_0 : i32, i32
  }
  func.func @transform_5(%arg0: i32) -> (i32, i32, i32) {
    %c0_i32 = arith.constant 0 : i32
    %c0_i32_0 = arith.constant 0 : i32
    %c0_i32_1 = arith.constant 0 : i32
    %c0_i32_2 = arith.constant 0 : i32
    return %c0_i32, %c0_i32_0, %c0_i32_1 : i32, i32, i32
  }
  func.func @transform_6(%arg0: i32) -> (i32, i32) {
    %c0_i32 = arith.constant 0 : i32
    %c0_i32_0 = arith.constant 0 : i32
    %c0_i32_1 = arith.constant 0 : i32
    return %c0_i32, %c0_i32_0 : i32, i32
  }
  func.func @transform_7(%arg0: i32) -> (i32, i32, i32) {
    %c0_i32 = arith.constant 0 : i32
    %c0_i32_0 = arith.constant 0 : i32
    %c0_i32_1 = arith.constant 0 : i32
    return %arg0, %c0_i32, %c0_i32_0 : i32, i32, i32
  }
}

</mosaic_0001>

<llo_original>
// kernel: model_forward.1
$region0: #{model_forward.1}
  #allocation0 [shape = 'u32[]', space=smem, size = 0x4, offset = 0x4, fixed_abs, tag = 'smem constant byte address 0x4 - core index']
  #allocation1 [shape = 'u32[144,128]{1,0:T(1,128)}', space=vmem, size = 0x12000, scoped, tag = 'internal scratch']
  #allocation2 [shape = 'bf16[1,10,24,128]{3,2,1,0:T(8,128)(2,1)}', space=vmem, size = 0xf000, scoped, tag = 'scratch operand']
  #allocation3 [shape = 'bf16[1,13,24,128]{3,2,1,0:T(8,128)(2,1)}', space=vmem, size = 0x13800, scoped, tag = 'scratch operand']
  %s0 = inlined_call_operand.vmem [shape: bf16[2,16,64], index: 0, kind: input, shape index: {}]
  %s1 = inlined_call_operand.hbm [shape: bf16[64,512], index: 1, kind: input, shape index: {}]
  %s2 = inlined_call_operand.vmem [shape: f32[1,512], index: 2, kind: input, shape index: {}]
  %s3 = inlined_call_operand.hbm [shape: bf16[4,128,128], index: 3, kind: input, shape index: {}]
  %s4 = inlined_call_operand.vmem [shape: f32[1,128], index: 4, kind: input, shape index: {}]
  %s5 = inlined_call_operand.hbm [shape: bf16[9,128,128], index: 5, kind: input, shape index: {}]
  %s6 = inlined_call_operand.vmem [shape: f32[1,128], index: 6, kind: input, shape index: {}]
  %s7 = inlined_call_operand.vmem [shape: f32[2,176,128], index: 7, kind: output, shape index: {}]
  %s8 = sld [smem:[#allocation0]]
  $region73: #{model_forward.1} parent=0
    _
  %s10 = ssub.s32 1, %s8
  %s11 = scalar_select 0, %s10, %s8
  $region1: #{model_forward.1} parent=0
    #allocation4 [shape = 'u8[65536]{0}', space=vmem, size = 0x10000, scoped, tag = 'input window, operand 1, single buffered']
    #allocation5 [shape = 's32[2]{0}', space=sflag, size = 0x8, scoped, tag = 'scoped memory for model_forward.1']
    #allocation6 [shape = 'u8[131072]{0}', space=vmem, size = 0x20000, scoped, tag = 'input window, operand 3, single buffered']
    #allocation7 [shape = 's32[1]{0}', space=sflag, size = 0x4, scoped, tag = 'scoped memory for model_forward.1']
    #allocation8 [shape = 'u8[294912]{0}', space=vmem, size = 0x48000, scoped, tag = 'input window, operand 5, single buffered']
    %12 = vsyncpa [#allocation5], 0
    %13 = vsyncpa [#allocation7], 0
    loop: start=0, step=1, limit=4
    $region2: #{model_forward.1} parent=1 // loop_pre_header
      _
    $region3: #{model_forward.1} parent=1 // loop_header
      %s15 = sphi 0, %s19
      %p16 = scmp.ge.s32.totalorder %s15, 4
      %s25 = sphi 0, %s27
      %s28 = sphi 0, %s25
      %s29 = sphi 0, %s28
      %s45 = sphi 0, %s29
      %s49 = sphi 0, %s49
      %s51 = sphi 0, %s49
      %s52 = sphi 0, %s51
      %s66 = sphi 0, %s52
      %s70 = sphi 0, %s70
      %s72 = sphi 0, %s70
      %s73 = sphi 0, %s72
      %s87 = sphi 0, %s73
      %s91 = sphi 0, %s91
      %s93 = sphi 0, %s91
      %s94 = sphi 0, %s93
      %s108 = sphi 0, %s94
      %s112 = sphi 0, %s112
      %s114 = sphi 0, %s112
      %s115 = sphi 0, %s114
      %s129 = sphi 0, %s115
      %s133 = sphi 0, %s133
      %s135 = sphi 0, %s133
      %s136 = sphi 0, %s135
      %s150 = sphi 0, %s136
      %s154 = sphi 0, %s154
      %s156 = sphi 0, %s154
      %s157 = sphi 0, %s156
      %s171 = sphi 0, %s157
      %s177 = sphi 0, %s179
      %s180 = sphi 0, %s177
      %s181 = sphi 0, %s180
      %s197 = sphi 0, %s181
    $region4: #{model_forward.1} parent=1 // loop_header_branch
      %18 = sbr.rel (%p16) target = $region8
    $region5: #{model_forward.1} parent=1 // loop_body
      %s20 = ssub.s32 %s15, 1
      %s21 = ssub.s32 %s15, 2
      %s22 = sadd.s32 %s15, 1
      %s23 = ssub.s32 %s15, %s22
      %p24 = scmp.eq.s32.totalorder %s23, 0
      %s26 = sadd.s32 %s25, 1
      %s27 = scalar_select %p24, %s25, %s26
      %p30 = pneg %p24
      %p31 = scmp.eq.s32.totalorder %s15, 1
      %p32 = por %p30, %p31
      %p33 = scmp.ne.s32.totalorder %s25, %s28
      %p34 = scmp.eq.s32.totalorder %s15, 0
      %p35 = por %p33, %p34
      %p36 = scmp.ne.s32.totalorder %s25, %s28
      %p37 = scmp.eq.s32.totalorder %s20, 1
      %p38 = por %p36, %p37
      %p39 = scmp.ne.s32.totalorder %s28, %s29
      %p40 = scmp.eq.s32.totalorder %s20, 0
      %p41 = por %p39, %p40
      %p42 = scmp.ne.s32.totalorder %s28, %s29
      %p43 = scmp.eq.s32.totalorder %s21, 1
      %p44 = por %p42, %p43
      %p46 = scmp.ne.s32.totalorder %s29, %s45
      %p47 = scmp.eq.s32.totalorder %s21, 0
      %p48 = por %p46, %p47
      %s50 = sadd.s32 %s49, 1
      %p53 = scmp.eq.s32.totalorder %s15, 1
      %p54 = scmp.ne.s32.totalorder %s49, %s51
      %p55 = scmp.eq.s32.totalorder %s15, 0
      %p56 = por %p54, %p55
      %p57 = scmp.ne.s32.totalorder %s49, %s51
      %p58 = scmp.eq.s32.totalorder %s20, 1
      %p59 = por %p57, %p58
      %p60 = scmp.ne.s32.totalorder %s51, %s52
      %p61 = scmp.eq.s32.totalorder %s20, 0
      %p62 = por %p60, %p61
      %p63 = scmp.ne.s32.totalorder %s51, %s52
      %p64 = scmp.eq.s32.totalorder %s21, 1
      %p65 = por %p63, %p64
      %p67 = scmp.ne.s32.totalorder %s52, %s66
      %p68 = scmp.eq.s32.totalorder %s21, 0
      %p69 = por %p67, %p68
      %s71 = sadd.s32 %s70, 1
      %p74 = scmp.eq.s32.totalorder %s15, 1
      %p75 = scmp.ne.s32.totalorder %s70, %s72
      %p76 = scmp.eq.s32.totalorder %s15, 0
      %p77 = por %p75, %p76
      %p78 = scmp.ne.s32.totalorder %s70, %s72
      %p79 = scmp.eq.s32.totalorder %s20, 1
      %p80 = por %p78, %p79
      %p81 = scmp.ne.s32.totalorder %s72, %s73
      %p82 = scmp.eq.s32.totalorder %s20, 0
      %p83 = por %p81, %p82
      %p84 = scmp.ne.s32.totalorder %s72, %s73
      %p85 = scmp.eq.s32.totalorder %s21, 1
      %p86 = por %p84, %p85
      %p88 = scmp.ne.s32.totalorder %s73, %s87
      %p89 = scmp.eq.s32.totalorder %s21, 0
      %p90 = por %p88, %p89
      %s92 = sadd.s32 %s91, 1
      %p95 = scmp.eq.s32.totalorder %s15, 1
      %p96 = scmp.ne.s32.totalorder %s91, %s93
      %p97 = scmp.eq.s32.totalorder %s15, 0
      %p98 = por %p96, %p97
      %p99 = scmp.ne.s32.totalorder %s91, %s93
      %p100 = scmp.eq.s32.totalorder %s20, 1
      %p101 = por %p99, %p100
      %p102 = scmp.ne.s32.totalorder %s93, %s94
      %p103 = scmp.eq.s32.totalorder %s20, 0
      %p104 = por %p102, %p103
      %p105 = scmp.ne.s32.totalorder %s93, %s94
      %p106 = scmp.eq.s32.totalorder %s21, 1
      %p107 = por %p105, %p106
      %p109 = scmp.ne.s32.totalorder %s94, %s108
      %p110 = scmp.eq.s32.totalorder %s21, 0
      %p111 = por %p109, %p110
      %s113 = sadd.s32 %s112, 1
      %p116 = scmp.eq.s32.totalorder %s15, 1
      %p117 = scmp.ne.s32.totalorder %s112, %s114
      %p118 = scmp.eq.s32.totalorder %s15, 0
      %p119 = por %p117, %p118
      %p120 = scmp.ne.s32.totalorder %s112, %s114
      %p121 = scmp.eq.s32.totalorder %s20, 1
      %p122 = por %p120, %p121
      %p123 = scmp.ne.s32.totalorder %s114, %s115
      %p124 = scmp.eq.s32.totalorder %s20, 0
      %p125 = por %p123, %p124
      %p126 = scmp.ne.s32.totalorder %s114, %s115
      %p127 = scmp.eq.s32.totalorder %s21, 1
      %p128 = por %p126, %p127
      %p130 = scmp.ne.s32.totalorder %s115, %s129
      %p131 = scmp.eq.s32.totalorder %s21, 0
      %p132 = por %p130, %p131
      %s134 = sadd.s32 %s133, 1
      %p137 = scmp.eq.s32.totalorder %s15, 1
      %p138 = scmp.ne.s32.totalorder %s133, %s135
      %p139 = scmp.eq.s32.totalorder %s15, 0
      %p140 = por %p138, %p139
      %p141 = scmp.ne.s32.totalorder %s133, %s135
      %p142 = scmp.eq.s32.totalorder %s20, 1
      %p143 = por %p141, %p142
      %p144 = scmp.ne.s32.totalorder %s135, %s136
      %p145 = scmp.eq.s32.totalorder %s20, 0
      %p146 = por %p144, %p145
      %p147 = scmp.ne.s32.totalorder %s135, %s136
      %p148 = scmp.eq.s32.totalorder %s21, 1
      %p149 = por %p147, %p148
      %p151 = scmp.ne.s32.totalorder %s136, %s150
      %p152 = scmp.eq.s32.totalorder %s21, 0
      %p153 = por %p151, %p152
      %s155 = sadd.s32 %s154, 1
      %p158 = scmp.eq.s32.totalorder %s15, 1
      %p159 = scmp.ne.s32.totalorder %s154, %s156
      %p160 = scmp.eq.s32.totalorder %s15, 0
      %p161 = por %p159, %p160
      %p162 = scmp.ne.s32.totalorder %s154, %s156
      %p163 = scmp.eq.s32.totalorder %s20, 1
      %p164 = por %p162, %p163
      %p165 = scmp.ne.s32.totalorder %s156, %s157
      %p166 = scmp.eq.s32.totalorder %s20, 0
      %p167 = por %p165, %p166
      %p168 = scmp.ne.s32.totalorder %s156, %s157
      %p169 = scmp.eq.s32.totalorder %s21, 1
      %p170 = por %p168, %p169
      %p172 = scmp.ne.s32.totalorder %s157, %s171
      %p173 = scmp.eq.s32.totalorder %s21, 0
      %p174 = por %p172, %p173
      %s175 = ssub.s32 %s15, %s22
      %p176 = scmp.eq.s32.totalorder %s175, 0
      %s178 = sadd.s32 %s177, 1
      %s179 = scalar_select %p176, %s177, %s178
      %p182 = pneg %p176
      %p183 = scmp.eq.s32.totalorder %s15, 1
      %p184 = por %p182, %p183
      %p185 = scmp.ne.s32.totalorder %s177, %s180
      %p186 = scmp.eq.s32.totalorder %s15, 0
      %p187 = por %p185, %p186
      %p188 = scmp.ne.s32.totalorder %s177, %s180
      %p189 = scmp.eq.s32.totalorder %s20, 1
      %p190 = por %p188, %p189
      %p191 = scmp.ne.s32.totalorder %s180, %s181
      %p192 = scmp.eq.s32.totalorder %s20, 0
      %p193 = por %p191, %p192
      %p194 = scmp.ne.s32.totalorder %s180, %s181
      %p195 = scmp.eq.s32.totalorder %s21, 1
      %p196 = por %p194, %p195
      %p198 = scmp.ne.s32.totalorder %s181, %s197
      %p199 = scmp.eq.s32.totalorder %s21, 0
      %p200 = por %p198, %p199
      %p201 = scmp.le.s32.totalorder 1, %s15
      %p202 = scmp.lt.s32.totalorder %s15, 3
      %p203 = pnand %p201, %p202
      %p204 = pneg %p203
      // Predicated region
      $region9: #{model_forward.1} parent=5 // pred_check
        _
      $region10: #{model_forward.1} parent=5 // pred_check_branch
        %206 = sbr.rel (%p203) target = $region12
      $region11: #{model_forward.1} parent=5 // pred_region
        %s207 = ssub.s32 %s15, 1
        // Predicated region
        $region13: #{model_forward.1} parent=11 // pred_check
          %p208 = pneg %p62
        $region14: #{model_forward.1} parent=11 // pred_check_branch
          %210 = sbr.rel (%p208) target = $region16
        $region15: #{model_forward.1} parent=11 // pred_region
          %s212 = ssub.s32 2048, 2048
          %213 = vsyncadd [#allocation5], %s212
          %s214 = sshll.u32 [#allocation4], 4
          %s215 = int_to_ptr.vmem [resolvable:$true] %s214
          %220 = dma.hbm_to_vmem [thread:$0]  %s1, 2048, %s215, [#allocation5], 256, 256, 16
        $region16: #{model_forward.1} parent=11 // pred_fallthru
          _
        // Predicated region
        $region17: #{model_forward.1} parent=11 // pred_check
          %p221 = pneg %p83
        $region18: #{model_forward.1} parent=11 // pred_check_branch
          %223 = sbr.rel (%p221) target = $region20
        $region19: #{model_forward.1} parent=11 // pred_region
          _
        $region20: #{model_forward.1} parent=11 // pred_fallthru
          _
        // Predicated region
        $region21: #{model_forward.1} parent=11 // pred_check
          %p224 = pneg %p104
        $region22: #{model_forward.1} parent=11 // pred_check_branch
          %226 = sbr.rel (%p224) target = $region24
        $region23: #{model_forward.1} parent=11 // pred_region
          %s228 = ssub.s32 4096, 4096
          %229 = vsyncadd [#allocation7], %s228
          %s230 = sshll.u32 [#allocation6], 4
          %s231 = int_to_ptr.vmem [resolvable:$true] %s230
          %236 = dma.hbm_to_vmem [thread:$0]  %s3, 4096, %s231, [#allocation7], 64, 64, 4
        $region24: #{model_forward.1} parent=11 // pred_fallthru
          _
        // Predicated region
        $region25: #{model_forward.1} parent=11 // pred_check
          %p237 = pneg %p125
        $region26: #{model_forward.1} parent=11 // pred_check_branch
          %239 = sbr.rel (%p237) target = $region28
        $region27: #{model_forward.1} parent=11 // pred_region
          _
        $region28: #{model_forward.1} parent=11 // pred_fallthru
          _
        // Predicated region
        $region29: #{model_forward.1} parent=11 // pred_check
          %p240 = pneg %p146
        $region30: #{model_forward.1} parent=11 // pred_check_branch
          %242 = sbr.rel (%p240) target = $region32
        $region31: #{model_forward.1} parent=11 // pred_region
          %s244 = ssub.s32 9216, 9216
          %245 = vsyncadd [#allocation7], %s244
          %s246 = sshll.u32 [#allocation8], 4
          %s247 = int_to_ptr.vmem [resolvable:$true] %s246
          %252 = dma.hbm_to_vmem [thread:$0]  %s5, 9216, %s247, [#allocation7], 64, 64, 4
        $region32: #{model_forward.1} parent=11 // pred_fallthru
          _
        // Predicated region
        $region33: #{model_forward.1} parent=11 // pred_check
          %p253 = pneg %p167
        $region34: #{model_forward.1} parent=11 // pred_check_branch
          %255 = sbr.rel (%p253) target = $region36
        $region35: #{model_forward.1} parent=11 // pred_region
          _
        $region36: #{model_forward.1} parent=11 // pred_fallthru
          _
      $region12: #{model_forward.1} parent=5 // pred_fallthru
        _
      %p256 = scmp.lt.s32.totalorder %s15, 2
      // Predicated region
      $region37: #{model_forward.1} parent=5 // pred_check
        %p257 = pneg %p256
      $region38: #{model_forward.1} parent=5 // pred_check_branch
        %259 = sbr.rel (%p257) target = $region40
      $region39: #{model_forward.1} parent=5 // pred_region
        // Predicated region
        $region41: #{model_forward.1} parent=39 // pred_check
          %p260 = pneg %p35
        $region42: #{model_forward.1} parent=39 // pred_check_branch
          %262 = sbr.rel (%p260) target = $region44
        $region43: #{model_forward.1} parent=39 // pred_region
          %p263 = scmp.lt.s32.totalorder %s15, 1
          %s264 = scalar_select %p263, %s15, 1
          %s265 = smul.addr %s264, 2
          %s266 = smul.addr %s265, 4
          %s267 = scalar_lea.vmem %s0, %s266
        $region44: #{model_forward.1} parent=39 // pred_fallthru
          _
      $region40: #{model_forward.1} parent=5 // pred_fallthru
        _
      %p268 = scmp.le.s32.totalorder 1, %s15
      %p269 = scmp.lt.s32.totalorder %s15, 3
      %p270 = pnand %p268, %p269
      %p271 = pneg %p270
      // Predicated region
      $region45: #{model_forward.1} parent=5 // pred_check
        _
      $region46: #{model_forward.1} parent=5 // pred_check_branch
        %273 = sbr.rel (%p270) target = $region48
      $region47: #{model_forward.1} parent=5 // pred_region
        %s274 = ssub.s32 %s15, 1
        // Predicated region
        $region49: #{model_forward.1} parent=47 // pred_check
          %p275 = pneg %p62
        $region50: #{model_forward.1} parent=47 // pred_check_branch
          %277 = sbr.rel (%p275) target = $region52
        $region51: #{model_forward.1} parent=47 // pred_region
          %278 = dma.done [#allocation5], 2048
        $region52: #{model_forward.1} parent=47 // pred_fallthru
          _
        // Predicated region
        $region53: #{model_forward.1} parent=47 // pred_check
          %p279 = pneg %p104
        $region54: #{model_forward.1} parent=47 // pred_check_branch
          %281 = sbr.rel (%p279) target = $region56
        $region55: #{model_forward.1} parent=47 // pred_region
          %282 = dma.done [#allocation7], 4096
        $region56: #{model_forward.1} parent=47 // pred_fallthru
          _
        // Predicated region
        $region57: #{model_forward.1} parent=47 // pred_check
          %p283 = pneg %p146
        $region58: #{model_forward.1} parent=47 // pred_check_branch
          %285 = sbr.rel (%p283) target = $region60
        $region59: #{model_forward.1} parent=47 // pred_region
          %286 = dma.done [#allocation7], 9216
        $region60: #{model_forward.1} parent=47 // pred_fallthru
          _
        %p287 = scmp.lt.s32.totalorder %s20, 1
        %s288 = scalar_select %p287, %s20, 1
        %s289 = smul.addr %s288, 2
        %s290 = smul.addr %s289, 4
        %s291 = scalar_lea.vmem %s0, %s290
        %p292 = pneg %p41
        %p293 = pneg %p38
        %p294 = pneg %p62
        %p295 = pneg %p59
        %p296 = pneg %p83
        %p297 = pneg %p80
        %p298 = pneg %p104
        %p299 = pneg %p101
        %p300 = pneg %p125
        %p301 = pneg %p122
        %p302 = pneg %p146
        %p303 = pneg %p143
        %p304 = pneg %p167
        %p305 = pneg %p164
        %p306 = pneg %p193
        %p307 = pneg %p190
        %p308 = scmp.lt.s32.totalorder %s20, 1
        %s309 = scalar_select %p308, %s20, 1
        %s310 = smul.addr %s309, 22
        %s311 = smul.addr %s310, 8
        %s312 = scalar_lea.vmem %s7, %s311
        %p313 = scmp.lt.s32.totalorder %s20, 1
        %s314 = scalar_select %p313, %s20, 1
        %s315 = smul.addr %s314, 2
        %s316 = smul.addr %s315, 4
        %s317 = scalar_lea.vmem %s0, %s316
        %p318 = scmp.lt.s32.totalorder %s20, 1
        %s319 = scalar_select %p318, %s20, 1
        %s320 = smul.addr %s319, 22
        %s321 = smul.addr %s320, 8
        %s322 = scalar_lea.vmem %s7, %s321
        %v324 = vld [vmem:[%s317] sm:$0xf]
        %v325 = vld [vmem:[%s317 + $0x4] sm:$0xf]
        %v326 = vld [vmem:[#allocation4] sm:$0xff]
        %v327 = vld [vmem:[#allocation4 + $0x8] sm:$0xff]
        %v328 = vld [vmem:[#allocation4 + $0x10] sm:$0xff]
        %v329 = vld [vmem:[#allocation4 + $0x18] sm:$0xff]
        %v330 = vld [vmem:[#allocation4 + $0x20] sm:$0xff]
        %v331 = vld [vmem:[#allocation4 + $0x28] sm:$0xff]
        %v332 = vld [vmem:[#allocation4 + $0x30] sm:$0xff]
        %v333 = vld [vmem:[#allocation4 + $0x38] sm:$0xff]
        %v334 = vld [vmem:[#allocation4 + $0x40] sm:$0xff]
        %v335 = vld [vmem:[#allocation4 + $0x48] sm:$0xff]
        %v336 = vld [vmem:[#allocation4 + $0x50] sm:$0xff]
        %v337 = vld [vmem:[#allocation4 + $0x58] sm:$0xff]
        %v338 = vld [vmem:[#allocation4 + $0x60] sm:$0xff]
        %v339 = vld [vmem:[#allocation4 + $0x68] sm:$0xff]
        %v340 = vld [vmem:[#allocation4 + $0x70] sm:$0xff]
        %v341 = vld [vmem:[#allocation4 + $0x78] sm:$0xff]
        %v342 = vld [vmem:[%s2] sm:$0xf]
        %v344 = vlaneseq
        %v345 = vshrl.u32 %v344, 7
        %v346 = vsub.s32 0, %v345
        %v347 = vrot.slane %v342, %v346
        %v348 = vlaneseq
        %v349 = vshrl.u32 %v348, 7
        %v350 = vsub.s32 1, %v349
        %v351 = vrot.slane %v342, %v350
        %v352 = vlaneseq
        %v353 = vshrl.u32 %v352, 7
        %v354 = vsub.s32 2, %v353
        %v355 = vrot.slane %v342, %v354
        %v356 = vlaneseq
        %v357 = vshrl.u32 %v356, 7
        %v358 = vsub.s32 3, %v357
        %v359 = vrot.slane %v342, %v358
        %v366 = vunpack.c.l.b16 %v324
        %v367 = vunpack.c.l.b16 %v325
        %v368 = vpack.c.b16 %v367, %v366
        %v385 = vunpack.c.l.b16 %v326
        %v386 = vunpack.c.h.b16 %v326
        %v387 = vunpack.c.l.b16 %v327
        %v388 = vunpack.c.h.b16 %v327
        %v389 = vunpack.c.l.b16 %v328
        %v390 = vunpack.c.h.b16 %v328
        %v391 = vunpack.c.l.b16 %v329
        %v392 = vunpack.c.h.b16 %v329
        %v393 = vunpack.c.l.b16 %v330
        %v394 = vunpack.c.h.b16 %v330
        %v395 = vunpack.c.l.b16 %v331
        %v396 = vunpack.c.h.b16 %v331
        %v397 = vunpack.c.l.b16 %v332
        %v398 = vunpack.c.h.b16 %v332
        %v399 = vunpack.c.l.b16 %v333
        %v400 = vunpack.c.h.b16 %v333
        %v401 = vunpack.c.l.b16 %v334
        %v402 = vunpack.c.h.b16 %v334
        %v403 = vunpack.c.l.b16 %v335
        %v404 = vunpack.c.h.b16 %v335
        %v405 = vunpack.c.l.b16 %v336
        %v406 = vunpack.c.h.b16 %v336
        %v407 = vunpack.c.l.b16 %v337
        %v408 = vunpack.c.h.b16 %v337
        %v409 = vunpack.c.l.b16 %v338
        %v410 = vunpack.c.h.b16 %v338
        %v411 = vunpack.c.l.b16 %v339
        %v412 = vunpack.c.h.b16 %v339
        %v413 = vunpack.c.l.b16 %v340
        %v414 = vunpack.c.h.b16 %v340
        %v415 = vunpack.c.l.b16 %v341
        %v416 = vunpack.c.h.b16 %v341
        %v417 = vpack.c.b16 %v389, %v385
        %v418 = vpack.c.b16 %v390, %v386
        %v419 = vpack.c.b16 %v391, %v387
        %v420 = vpack.c.b16 %v392, %v388
        %v421 = vpack.c.b16 %v397, %v393
        %v422 = vpack.c.b16 %v398, %v394
        %v423 = vpack.c.b16 %v399, %v395
        %v424 = vpack.c.b16 %v400, %v396
        %v425 = vpack.c.b16 %v405, %v401
        %v426 = vpack.c.b16 %v406, %v402
        %v427 = vpack.c.b16 %v407, %v403
        %v428 = vpack.c.b16 %v408, %v404
        %v429 = vpack.c.b16 %v413, %v409
        %v430 = vpack.c.b16 %v414, %v410
        %v431 = vpack.c.b16 %v415, %v411
        %v432 = vpack.c.b16 %v416, %v412
        %vm449 = vcmask 523264
        %v451 = vsel %vm449, %v368, 0
        %453 = vmatprep.subr.bf16.mxu0 %v418
        %454 = vmatpush1.bf16.msra.mxu0 %v417
        %455 = vmatprep.subr.bf16.mxu0 %v422
        %456 = vmatpush1.bf16.msra.mxu0 %v421
        %457 = vmatprep.subr.bf16.mxu0 %v426
        %458 = vmatpush1.bf16.msra.mxu0 %v425
        %459 = vmatprep.subr.bf16.mxu0 %v430
        %460 = vmatpush1.bf16.msra.mxu0 %v429
        %461 = vmatprep.subr.bf16.mxu0 0
        %462 = vmatpush1.bf16.msra.mxu0 0
        %463 = vmatprep.subr.bf16.mxu0 0
        %464 = vmatpush1.bf16.msra.mxu0 0
        %465 = vmatprep.subr.bf16.mxu0 0
        %466 = vmatpush1.bf16.msra.mxu0 0
        %467 = vmatprep.subr.bf16.mxu0 0
        %468 = vmatpush1.bf16.msra.mxu0 0
        %469 = vmatprep.subr.bf16.mxu0 0
        %470 = vmatpush1.bf16.msra.mxu0 0
        %471 = vmatprep.subr.bf16.mxu0 0
        %472 = vmatpush1.bf16.msra.mxu0 0
        %473 = vmatprep.subr.bf16.mxu0 0
        %474 = vmatpush1.bf16.msra.mxu0 0
        %475 = vmatprep.subr.bf16.mxu0 0
        %476 = vmatpush1.bf16.msra.mxu0 0
        %477 = vmatprep.subr.bf16.mxu0 0
        %478 = vmatpush1.bf16.msra.mxu0 0
        %479 = vmatprep.subr.bf16.mxu0 0
        %480 = vmatpush1.bf16.msra.mxu0 0
        %481 = vmatprep.subr.bf16.mxu0 0
        %482 = vmatpush1.bf16.msra.mxu0 0
        %483 = vmatprep.subr.bf16.mxu0 0
        %484 = vmatpush1.bf16.msra.mxu0 0
        %485 = vmatprep.mubr.bf16.mxu0 0
        %486 = vmatmul.mubr.bf16.gmra.mrb[0].mxu0 %v451
        %v487 = vpop.f32.mrb[0].mxu0
        %v488 = vadd.f32 %v347, %v487
        %v489 = vpop.f32.mrb[0].mxu0
        %v490 = vadd.f32 %v351, %v489
        %v491 = vpop.f32.mrb[0].mxu0
        %v492 = vadd.f32 %v347, %v491
        %v493 = vpop.f32.mrb[0].mxu0
        %v494 = vadd.f32 %v351, %v493
        %495 = vdwg.mxu0
        %496 = vmatprep.subr.bf16.mxu0 %v420
        %497 = vmatpush1.bf16.msra.mxu0 %v419
        %498 = vmatprep.subr.bf16.mxu0 %v424
        %499 = vmatpush1.bf16.msra.mxu0 %v423
        %500 = vmatprep.subr.bf16.mxu0 %v428
        %501 = vmatpush1.bf16.msra.mxu0 %v427
        %502 = vmatprep.subr.bf16.mxu0 %v432
        %503 = vmatpush1.bf16.msra.mxu0 %v431
        %504 = vmatprep.subr.bf16.mxu0 0
        %505 = vmatpush1.bf16.msra.mxu0 0
        %506 = vmatprep.subr.bf16.mxu0 0
        %507 = vmatpush1.bf16.msra.mxu0 0
        %508 = vmatprep.subr.bf16.mxu0 0
        %509 = vmatpush1.bf16.msra.mxu0 0
        %510 = vmatprep.subr.bf16.mxu0 0
        %511 = vmatpush1.bf16.msra.mxu0 0
        %512 = vmatprep.subr.bf16.mxu0 0
        %513 = vmatpush1.bf16.msra.mxu0 0
        %514 = vmatprep.subr.bf16.mxu0 0
        %515 = vmatpush1.bf16.msra.mxu0 0
        %516 = vmatprep.subr.bf16.mxu0 0
        %517 = vmatpush1.bf16.msra.mxu0 0
        %518 = vmatprep.subr.bf16.mxu0 0
        %519 = vmatpush1.bf16.msra.mxu0 0
        %520 = vmatprep.subr.bf16.mxu0 0
        %521 = vmatpush1.bf16.msra.mxu0 0
        %522 = vmatprep.subr.bf16.mxu0 0
        %523 = vmatpush1.bf16.msra.mxu0 0
        %524 = vmatprep.subr.bf16.mxu0 0
        %525 = vmatpush1.bf16.msra.mxu0 0
        %526 = vmatprep.subr.bf16.mxu0 0
        %527 = vmatpush1.bf16.msra.mxu0 0
        %528 = vmatprep.mubr.bf16.mxu0 0
        %529 = vmatmul.mubr.bf16.gmra.mrb[0].mxu0 %v451
        %v530 = vpop.f32.mrb[0].mxu0
        %v531 = vadd.f32 %v355, %v530
        %v532 = vpop.f32.mrb[0].mxu0
        %v533 = vadd.f32 %v359, %v532
        %v534 = vpop.f32.mrb[0].mxu0
        %v535 = vadd.f32 %v355, %v534
        %v536 = vpop.f32.mrb[0].mxu0
        %v537 = vadd.f32 %v359, %v536
        %538 = vdwg.mxu0
        %v539 = vpack.c.bf16 %v492, %v488
        %v540 = vpack.c.bf16 %v494, %v490
        %v541 = vpack.c.bf16 %v535, %v531
        %v542 = vpack.c.bf16 %v537, %v533
        %v544 = vcombine.high %v539, %v539
        %v546 = vunpack.c.l.s4 1966171168
        %v547 = vunpack.c.0.s8 %v546
        %v548 = vlaneseq
        %v549 = vshrl.u32 %v548, 7
        %v550 = vsub.s32 %v547, %v549
        %v551 = vrot.slane %v539, %v550
        %v553 = vunpack.c.l.s4 1966171168
        %v554 = vunpack.c.0.s8 %v553
        %v555 = vlaneseq
        %v556 = vshrl.u32 %v555, 7
        %v557 = vsub.s32 %v554, %v556
        %v558 = vrot.slane %v544, %v557
        %v559 = vcombine.high %v551, %v551
        %v560 = vcombine.high %v558, %v558
        %v562 = vunpack.c.l.s4 1966171168
        %v563 = vunpack.c.0.s8 %v562
        %v564 = vlaneseq
        %v565 = vshrl.u32 %v564, 7
        %v566 = vsub.s32 %v563, %v565
        %v567 = vrot.slane %v551, %v566
        %v569 = vunpack.c.l.s4 1966171168
        %v570 = vunpack.c.0.s8 %v569
        %v571 = vlaneseq
        %v572 = vshrl.u32 %v571, 7
        %v573 = vsub.s32 %v570, %v572
        %v574 = vrot.slane %v558, %v573
        %v576 = vunpack.c.l.s4 1966171168
        %v577 = vunpack.c.0.s8 %v576
        %v578 = vlaneseq
        %v579 = vshrl.u32 %v578, 7
        %v580 = vsub.s32 %v577, %v579
        %v581 = vrot.slane %v559, %v580
        %v583 = vunpack.c.l.s4 1966171168
        %v584 = vunpack.c.0.s8 %v583
        %v585 = vlaneseq
        %v586 = vshrl.u32 %v585, 7
        %v587 = vsub.s32 %v584, %v586
        %v588 = vrot.slane %v560, %v587
        %v589 = vcombine.high %v567, %v567
        %v590 = vcombine.high %v574, %v574
        %v591 = vcombine.high %v581, %v581
        %v592 = vcombine.high %v588, %v588
        %v593 = vunpack.i.l.s16 %v567
        %v594 = vunpack.i.h.s16 %v567
        %v595 = vunpack.i.l.s16 %v581
        %v596 = vunpack.i.h.s16 %v581
        %v597 = vunpack.i.l.s16 %v589
        %v598 = vunpack.i.h.s16 %v589
        %v599 = vunpack.i.l.s16 %v591
        %v600 = vunpack.i.h.s16 %v591
        %v601 = vunpack.i.l.s16 %v574
        %v602 = vunpack.i.h.s16 %v574
        %v603 = vunpack.i.l.s16 %v588
        %v604 = vunpack.i.h.s16 %v588
        %v605 = vunpack.i.l.s16 %v590
        %v606 = vunpack.i.h.s16 %v590
        %v607 = vunpack.i.l.s16 %v592
        %v608 = vunpack.i.h.s16 %v592
        %v610 = vcombine.high %v540, %v540
        %v612 = vunpack.c.l.s4 1966171168
        %v613 = vunpack.c.0.s8 %v612
        %v614 = vlaneseq
        %v615 = vshrl.u32 %v614, 7
        %v616 = vsub.s32 %v613, %v615
        %v617 = vrot.slane %v540, %v616
        %v619 = vunpack.c.l.s4 1966171168
        %v620 = vunpack.c.0.s8 %v619
        %v621 = vlaneseq
        %v622 = vshrl.u32 %v621, 7
        %v623 = vsub.s32 %v620, %v622
        %v624 = vrot.slane %v610, %v623
        %v625 = vcombine.high %v617, %v617
        %v626 = vcombine.high %v624, %v624
        %v628 = vunpack.c.l.s4 1966171168
        %v629 = vunpack.c.0.s8 %v628
        %v630 = vlaneseq
        %v631 = vshrl.u32 %v630, 7
        %v632 = vsub.s32 %v629, %v631
        %v633 = vrot.slane %v617, %v632
        %v635 = vunpack.c.l.s4 1966171168
        %v636 = vunpack.c.0.s8 %v635
        %v637 = vlaneseq
        %v638 = vshrl.u32 %v637, 7
        %v639 = vsub.s32 %v636, %v638
        %v640 = vrot.slane %v624, %v639
        %v642 = vunpack.c.l.s4 1966171168
        %v643 = vunpack.c.0.s8 %v642
        %v644 = vlaneseq
        %v645 = vshrl.u32 %v644, 7
        %v646 = vsub.s32 %v643, %v645
        %v647 = vrot.slane %v625, %v646
        %v649 = vunpack.c.l.s4 1966171168
        %v650 = vunpack.c.0.s8 %v649
        %v651 = vlaneseq
        %v652 = vshrl.u32 %v651, 7
        %v653 = vsub.s32 %v650, %v652
        %v654 = vrot.slane %v626, %v653
        %v655 = vcombine.high %v633, %v633
        %v656 = vcombine.high %v640, %v640
        %v657 = vcombine.high %v647, %v647
        %v658 = vcombine.high %v654, %v654
        %v659 = vunpack.i.l.s16 %v633
        %v660 = vunpack.i.h.s16 %v633
        %v661 = vunpack.i.l.s16 %v647
        %v662 = vunpack.i.h.s16 %v647
        %v663 = vunpack.i.l.s16 %v655
        %v664 = vunpack.i.h.s16 %v655
        %v665 = vunpack.i.l.s16 %v657
        %v666 = vunpack.i.h.s16 %v657
        %v667 = vunpack.i.l.s16 %v640
        %v668 = vunpack.i.h.s16 %v640
        %v669 = vunpack.i.l.s16 %v654
        %v670 = vunpack.i.h.s16 %v654
        %v671 = vunpack.i.l.s16 %v656
        %v672 = vunpack.i.h.s16 %v656
        %v673 = vunpack.i.l.s16 %v658
        %v674 = vunpack.i.h.s16 %v658
        %v675 = vpack.i.b16 %v593, %v593
        %v676 = vpack.i.b16 %v594, %v594
        %v677 = vpack.i.b16 %v595, %v595
        %v678 = vpack.i.b16 %v596, %v596
        %v679 = vpack.i.b16 %v597, %v597
        %v680 = vpack.i.b16 %v598, %v598
        %v681 = vpack.i.b16 %v599, %v599
        %v682 = vpack.i.b16 %v600, %v600
        %v683 = vpack.i.b16 %v601, %v601
        %v684 = vpack.i.b16 %v602, %v602
        %v685 = vpack.i.b16 %v603, %v603
        %v686 = vpack.i.b16 %v604, %v604
        %v687 = vpack.i.b16 %v605, %v605
        %v688 = vpack.i.b16 %v606, %v606
        %v689 = vpack.i.b16 %v607, %v607
        %v690 = vpack.i.b16 %v608, %v608
        %v691 = vlaneseq
        %v692 = vshrl.u32 %v691, 7
        %v693 = vsub.s32 0, %v692
        %v694 = vrot.slane %v675, %v693
        %v695 = vlaneseq
        %v696 = vshrl.u32 %v695, 7
        %v697 = vsub.s32 0, %v696
        %v698 = vrot.slane %v676, %v697
        %v699 = vlaneseq
        %v700 = vshrl.u32 %v699, 7
        %v701 = vsub.s32 0, %v700
        %v702 = vrot.slane %v677, %v701
        %v703 = vlaneseq
        %v704 = vshrl.u32 %v703, 7
        %v705 = vsub.s32 0, %v704
        %v706 = vrot.slane %v678, %v705
        %v707 = vlaneseq
        %v708 = vshrl.u32 %v707, 7
        %v709 = vsub.s32 0, %v708
        %v710 = vrot.slane %v679, %v709
        %v711 = vlaneseq
        %v712 = vshrl.u32 %v711, 7
        %v713 = vsub.s32 0, %v712
        %v714 = vrot.slane %v680, %v713
        %v715 = vlaneseq
        %v716 = vshrl.u32 %v715, 7
        %v717 = vsub.s32 0, %v716
        %v718 = vrot.slane %v681, %v717
        %v719 = vlaneseq
        %v720 = vshrl.u32 %v719, 7
        %v721 = vsub.s32 0, %v720
        %v722 = vrot.slane %v682, %v721
        %v723 = vlaneseq
        %v724 = vshrl.u32 %v723, 7
        %v725 = vsub.s32 0, %v724
        %v726 = vrot.slane %v683, %v725
        %v727 = vlaneseq
        %v728 = vshrl.u32 %v727, 7
        %v729 = vsub.s32 0, %v728
        %v730 = vrot.slane %v684, %v729
        %v731 = vlaneseq
        %v732 = vshrl.u32 %v731, 7
        %v733 = vsub.s32 0, %v732
        %v734 = vrot.slane %v685, %v733
        %v735 = vlaneseq
        %v736 = vshrl.u32 %v735, 7
        %v737 = vsub.s32 0, %v736
        %v738 = vrot.slane %v686, %v737
        %v739 = vlaneseq
        %v740 = vshrl.u32 %v739, 7
        %v741 = vsub.s32 0, %v740
        %v742 = vrot.slane %v687, %v741
        %v743 = vlaneseq
        %v744 = vshrl.u32 %v743, 7
        %v745 = vsub.s32 0, %v744
        %v746 = vrot.slane %v688, %v745
        %v747 = vlaneseq
        %v748 = vshrl.u32 %v747, 7
        %v749 = vsub.s32 0, %v748
        %v750 = vrot.slane %v689, %v749
        %v751 = vlaneseq
        %v752 = vshrl.u32 %v751, 7
        %v753 = vsub.s32 0, %v752
        %v754 = vrot.slane %v690, %v753
        %v771 = vpack.i.b16 %v659, %v659
        %v772 = vpack.i.b16 %v660, %v660
        %v773 = vpack.i.b16 %v661, %v661
        %v774 = vpack.i.b16 %v662, %v662
        %v775 = vpack.i.b16 %v663, %v663
        %v776 = vpack.i.b16 %v664, %v664
        %v777 = vpack.i.b16 %v665, %v665
        %v778 = vpack.i.b16 %v666, %v666
        %v779 = vpack.i.b16 %v667, %v667
        %v780 = vpack.i.b16 %v668, %v668
        %v781 = vpack.i.b16 %v669, %v669
        %v782 = vpack.i.b16 %v670, %v670
        %v783 = vpack.i.b16 %v671, %v671
        %v784 = vpack.i.b16 %v672, %v672
        %v785 = vpack.i.b16 %v673, %v673
        %v786 = vpack.i.b16 %v674, %v674
        %v787 = vlaneseq
        %v788 = vshrl.u32 %v787, 7
        %v789 = vsub.s32 0, %v788
        %v790 = vrot.slane %v771, %v789
        %v791 = vlaneseq
        %v792 = vshrl.u32 %v791, 7
        %v793 = vsub.s32 0, %v792
        %v794 = vrot.slane %v772, %v793
        %v795 = vlaneseq
        %v796 = vshrl.u32 %v795, 7
        %v797 = vsub.s32 0, %v796
        %v798 = vrot.slane %v773, %v797
        %v799 = vlaneseq
        %v800 = vshrl.u32 %v799, 7
        %v801 = vsub.s32 0, %v800
        %v802 = vrot.slane %v774, %v801
        %v803 = vlaneseq
        %v804 = vshrl.u32 %v803, 7
        %v805 = vsub.s32 0, %v804
        %v806 = vrot.slane %v775, %v805
        %v807 = vlaneseq
        %v808 = vshrl.u32 %v807, 7
        %v809 = vsub.s32 0, %v808
        %v810 = vrot.slane %v776, %v809
        %v811 = vlaneseq
        %v812 = vshrl.u32 %v811, 7
        %v813 = vsub.s32 0, %v812
        %v814 = vrot.slane %v777, %v813
        %v815 = vlaneseq
        %v816 = vshrl.u32 %v815, 7
        %v817 = vsub.s32 0, %v816
        %v818 = vrot.slane %v778, %v817
        %v819 = vlaneseq
        %v820 = vshrl.u32 %v819, 7
        %v821 = vsub.s32 0, %v820
        %v822 = vrot.slane %v779, %v821
        %v823 = vlaneseq
        %v824 = vshrl.u32 %v823, 7
        %v825 = vsub.s32 0, %v824
        %v826 = vrot.slane %v780, %v825
        %v827 = vlaneseq
        %v828 = vshrl.u32 %v827, 7
        %v829 = vsub.s32 0, %v828
        %v830 = vrot.slane %v781, %v829
        %v831 = vlaneseq
        %v832 = vshrl.u32 %v831, 7
        %v833 = vsub.s32 0, %v832
        %v834 = vrot.slane %v782, %v833
        %v835 = vlaneseq
        %v836 = vshrl.u32 %v835, 7
        %v837 = vsub.s32 0, %v836
        %v838 = vrot.slane %v783, %v837
        %v839 = vlaneseq
        %v840 = vshrl.u32 %v839, 7
        %v841 = vsub.s32 0, %v840
        %v842 = vrot.slane %v784, %v841
        %v843 = vlaneseq
        %v844 = vshrl.u32 %v843, 7
        %v845 = vsub.s32 0, %v844
        %v846 = vrot.slane %v785, %v845
        %v847 = vlaneseq
        %v848 = vshrl.u32 %v847, 7
        %v849 = vsub.s32 0, %v848
        %v850 = vrot.slane %v786, %v849
        %vm867 = vcmask 1040384
        %vm868 = vsmask.f32 256
        %vm869 = vmand %vm867, %vm868
        %v870 = vsel %vm869, %v694, %v790
        %v871 = vsel %vm869, %v698, %v794
        %v872 = vsel %vm869, %v702, %v798
        %v873 = vsel %vm869, %v706, %v802
        %v874 = vsel %vm869, %v710, %v806
        %v875 = vsel %vm869, %v714, %v810
        %v876 = vsel %vm869, %v718, %v814
        %v877 = vsel %vm869, %v722, %v818
        %v878 = vsel %vm869, %v726, %v822
        %v879 = vsel %vm869, %v730, %v826
        %v880 = vsel %vm869, %v734, %v830
        %v881 = vsel %vm869, %v738, %v834
        %v882 = vsel %vm869, %v742, %v838
        %v883 = vsel %vm869, %v746, %v842
        %v884 = vsel %vm869, %v750, %v846
        %v885 = vsel %vm869, %v754, %v850
        %v887 = vcombine.high %v541, %v541
        %v889 = vunpack.c.l.s4 1966171168
        %v890 = vunpack.c.0.s8 %v889
        %v891 = vlaneseq
        %v892 = vshrl.u32 %v891, 7
        %v893 = vsub.s32 %v890, %v892
        %v894 = vrot.slane %v541, %v893
        %v896 = vunpack.c.l.s4 1966171168
        %v897 = vunpack.c.0.s8 %v896
        %v898 = vlaneseq
        %v899 = vshrl.u32 %v898, 7
        %v900 = vsub.s32 %v897, %v899
        %v901 = vrot.slane %v887, %v900
        %v902 = vcombine.high %v894, %v894
        %v903 = vcombine.high %v901, %v901
        %v905 = vunpack.c.l.s4 1966171168
        %v906 = vunpack.c.0.s8 %v905
        %v907 = vlaneseq
        %v908 = vshrl.u32 %v907, 7
        %v909 = vsub.s32 %v906, %v908
        %v910 = vrot.slane %v894, %v909
        %v912 = vunpack.c.l.s4 1966171168
        %v913 = vunpack.c.0.s8 %v912
        %v914 = vlaneseq
        %v915 = vshrl.u32 %v914, 7
        %v916 = vsub.s32 %v913, %v915
        %v917 = vrot.slane %v901, %v916
        %v919 = vunpack.c.l.s4 1966171168
        %v920 = vunpack.c.0.s8 %v919
        %v921 = vlaneseq
        %v922 = vshrl.u32 %v921, 7
        %v923 = vsub.s32 %v920, %v922
        %v924 = vrot.slane %v902, %v923
        %v926 = vunpack.c.l.s4 1966171168
        %v927 = vunpack.c.0.s8 %v926
        %v928 = vlaneseq
        %v929 = vshrl.u32 %v928, 7
        %v930 = vsub.s32 %v927, %v929
        %v931 = vrot.slane %v903, %v930
        %v932 = vcombine.high %v910, %v910
        %v933 = vcombine.high %v917, %v917
        %v934 = vcombine.high %v924, %v924
        %v935 = vcombine.high %v931, %v931
        %v936 = vunpack.i.l.s16 %v910
        %v937 = vunpack.i.h.s16 %v910
        %v938 = vunpack.i.l.s16 %v924
        %v939 = vunpack.i.h.s16 %v924
        %v940 = vunpack.i.l.s16 %v932
        %v941 = vunpack.i.h.s16 %v932
        %v942 = vunpack.i.l.s16 %v934
        %v943 = vunpack.i.h.s16 %v934
        %v944 = vunpack.i.l.s16 %v917
        %v945 = vunpack.i.h.s16 %v917
        %v946 = vunpack.i.l.s16 %v931
        %v947 = vunpack.i.h.s16 %v931
        %v948 = vunpack.i.l.s16 %v933
        %v949 = vunpack.i.h.s16 %v933
        %v950 = vunpack.i.l.s16 %v935
        %v951 = vunpack.i.h.s16 %v935
        %v953 = vcombine.high %v542, %v542
        %v955 = vunpack.c.l.s4 1966171168
        %v956 = vunpack.c.0.s8 %v955
        %v957 = vlaneseq
        %v958 = vshrl.u32 %v957, 7
        %v959 = vsub.s32 %v956, %v958
        %v960 = vrot.slane %v542, %v959
        %v962 = vunpack.c.l.s4 1966171168
        %v963 = vunpack.c.0.s8 %v962
        %v964 = vlaneseq
        %v965 = vshrl.u32 %v964, 7
        %v966 = vsub.s32 %v963, %v965
        %v967 = vrot.slane %v953, %v966
        %v968 = vcombine.high %v960, %v960
        %v969 = vcombine.high %v967, %v967
        %v971 = vunpack.c.l.s4 1966171168
        %v972 = vunpack.c.0.s8 %v971
        %v973 = vlaneseq
        %v974 = vshrl.u32 %v973, 7
        %v975 = vsub.s32 %v972, %v974
        %v976 = vrot.slane %v960, %v975
        %v978 = vunpack.c.l.s4 1966171168
        %v979 = vunpack.c.0.s8 %v978
        %v980 = vlaneseq
        %v981 = vshrl.u32 %v980, 7
        %v982 = vsub.s32 %v979, %v981
        %v983 = vrot.slane %v967, %v982
        %v985 = vunpack.c.l.s4 1966171168
        %v986 = vunpack.c.0.s8 %v985
        %v987 = vlaneseq
        %v988 = vshrl.u32 %v987, 7
        %v989 = vsub.s32 %v986, %v988
        %v990 = vrot.slane %v968, %v989
        %v992 = vunpack.c.l.s4 1966171168
        %v993 = vunpack.c.0.s8 %v992
        %v994 = vlaneseq
        %v995 = vshrl.u32 %v994, 7
        %v996 = vsub.s32 %v993, %v995
        %v997 = vrot.slane %v969, %v996
        %v998 = vcombine.high %v976, %v976
        %v999 = vcombine.high %v983, %v983
        %v1000 = vcombine.high %v990, %v990
        %v1001 = vcombine.high %v997, %v997
        %v1002 = vunpack.i.l.s16 %v976
        %v1003 = vunpack.i.h.s16 %v976
        %v1004 = vunpack.i.l.s16 %v990
        %v1005 = vunpack.i.h.s16 %v990
        %v1006 = vunpack.i.l.s16 %v998
        %v1007 = vunpack.i.h.s16 %v998
        %v1008 = vunpack.i.l.s16 %v1000
        %v1009 = vunpack.i.h.s16 %v1000
        %v1010 = vunpack.i.l.s16 %v983
        %v1011 = vunpack.i.h.s16 %v983
        %v1012 = vunpack.i.l.s16 %v997
        %v1013 = vunpack.i.h.s16 %v997
        %v1014 = vunpack.i.l.s16 %v999
        %v1015 = vunpack.i.h.s16 %v999
        %v1016 = vunpack.i.l.s16 %v1001
        %v1017 = vunpack.i.h.s16 %v1001
        %v1018 = vpack.i.b16 %v936, %v936
        %v1019 = vpack.i.b16 %v937, %v937
        %v1020 = vpack.i.b16 %v938, %v938
        %v1021 = vpack.i.b16 %v939, %v939
        %v1022 = vpack.i.b16 %v940, %v940
        %v1023 = vpack.i.b16 %v941, %v941
        %v1024 = vpack.i.b16 %v942, %v942
        %v1025 = vpack.i.b16 %v943, %v943
        %v1026 = vpack.i.b16 %v944, %v944
        %v1027 = vpack.i.b16 %v945, %v945
        %v1028 = vpack.i.b16 %v946, %v946
        %v1029 = vpack.i.b16 %v947, %v947
        %v1030 = vpack.i.b16 %v948, %v948
        %v1031 = vpack.i.b16 %v949, %v949
        %v1032 = vpack.i.b16 %v950, %v950
        %v1033 = vpack.i.b16 %v951, %v951
        %v1034 = vlaneseq
        %v1035 = vshrl.u32 %v1034, 7
        %v1036 = vsub.s32 0, %v1035
        %v1037 = vrot.slane %v1018, %v1036
        %v1038 = vlaneseq
        %v1039 = vshrl.u32 %v1038, 7
        %v1040 = vsub.s32 0, %v1039
        %v1041 = vrot.slane %v1019, %v1040
        %v1042 = vlaneseq
        %v1043 = vshrl.u32 %v1042, 7
        %v1044 = vsub.s32 0, %v1043
        %v1045 = vrot.slane %v1020, %v1044
        %v1046 = vlaneseq
        %v1047 = vshrl.u32 %v1046, 7
        %v1048 = vsub.s32 0, %v1047
        %v1049 = vrot.slane %v1021, %v1048
        %v1050 = vlaneseq
        %v1051 = vshrl.u32 %v1050, 7
        %v1052 = vsub.s32 0, %v1051
        %v1053 = vrot.slane %v1022, %v1052
        %v1054 = vlaneseq
        %v1055 = vshrl.u32 %v1054, 7
        %v1056 = vsub.s32 0, %v1055
        %v1057 = vrot.slane %v1023, %v1056
        %v1058 = vlaneseq
        %v1059 = vshrl.u32 %v1058, 7
        %v1060 = vsub.s32 0, %v1059
        %v1061 = vrot.slane %v1024, %v1060
        %v1062 = vlaneseq
        %v1063 = vshrl.u32 %v1062, 7
        %v1064 = vsub.s32 0, %v1063
        %v1065 = vrot.slane %v1025, %v1064
        %v1066 = vlaneseq
        %v1067 = vshrl.u32 %v1066, 7
        %v1068 = vsub.s32 0, %v1067
        %v1069 = vrot.slane %v1026, %v1068
        %v1070 = vlaneseq
        %v1071 = vshrl.u32 %v1070, 7
        %v1072 = vsub.s32 0, %v1071
        %v1073 = vrot.slane %v1027, %v1072
        %v1074 = vlaneseq
        %v1075 = vshrl.u32 %v1074, 7
        %v1076 = vsub.s32 0, %v1075
        %v1077 = vrot.slane %v1028, %v1076
        %v1078 = vlaneseq
        %v1079 = vshrl.u32 %v1078, 7
        %v1080 = vsub.s32 0, %v1079
        %v1081 = vrot.slane %v1029, %v1080
        %v1082 = vlaneseq
        %v1083 = vshrl.u32 %v1082, 7
        %v1084 = vsub.s32 0, %v1083
        %v1085 = vrot.slane %v1030, %v1084
        %v1086 = vlaneseq
        %v1087 = vshrl.u32 %v1086, 7
        %v1088 = vsub.s32 0, %v1087
        %v1089 = vrot.slane %v1031, %v1088
        %v1090 = vlaneseq
        %v1091 = vshrl.u32 %v1090, 7
        %v1092 = vsub.s32 0, %v1091
        %v1093 = vrot.slane %v1032, %v1092
        %v1094 = vlaneseq
        %v1095 = vshrl.u32 %v1094, 7
        %v1096 = vsub.s32 0, %v1095
        %v1097 = vrot.slane %v1033, %v1096
        %v1114 = vpack.i.b16 %v1002, %v1002
        %v1115 = vpack.i.b16 %v1003, %v1003
        %v1116 = vpack.i.b16 %v1004, %v1004
        %v1117 = vpack.i.b16 %v1005, %v1005
        %v1118 = vpack.i.b16 %v1006, %v1006
        %v1119 = vpack.i.b16 %v1007, %v1007
        %v1120 = vpack.i.b16 %v1008, %v1008
        %v1121 = vpack.i.b16 %v1009, %v1009
        %v1122 = vpack.i.b16 %v1010, %v1010
        %v1123 = vpack.i.b16 %v1011, %v1011
        %v1124 = vpack.i.b16 %v1012, %v1012
        %v1125 = vpack.i.b16 %v1013, %v1013
        %v1126 = vpack.i.b16 %v1014, %v1014
        %v1127 = vpack.i.b16 %v1015, %v1015
        %v1128 = vpack.i.b16 %v1016, %v1016
        %v1129 = vpack.i.b16 %v1017, %v1017
        %v1130 = vlaneseq
        %v1131 = vshrl.u32 %v1130, 7
        %v1132 = vsub.s32 0, %v1131
        %v1133 = vrot.slane %v1114, %v1132
        %v1134 = vlaneseq
        %v1135 = vshrl.u32 %v1134, 7
        %v1136 = vsub.s32 0, %v1135
        %v1137 = vrot.slane %v1115, %v1136
        %v1138 = vlaneseq
        %v1139 = vshrl.u32 %v1138, 7
        %v1140 = vsub.s32 0, %v1139
        %v1141 = vrot.slane %v1116, %v1140
        %v1142 = vlaneseq
        %v1143 = vshrl.u32 %v1142, 7
        %v1144 = vsub.s32 0, %v1143
        %v1145 = vrot.slane %v1117, %v1144
        %v1146 = vlaneseq
        %v1147 = vshrl.u32 %v1146, 7
        %v1148 = vsub.s32 0, %v1147
        %v1149 = vrot.slane %v1118, %v1148
        %v1150 = vlaneseq
        %v1151 = vshrl.u32 %v1150, 7
        %v1152 = vsub.s32 0, %v1151
        %v1153 = vrot.slane %v1119, %v1152
        %v1154 = vlaneseq
        %v1155 = vshrl.u32 %v1154, 7
        %v1156 = vsub.s32 0, %v1155
        %v1157 = vrot.slane %v1120, %v1156
        %v1158 = vlaneseq
        %v1159 = vshrl.u32 %v1158, 7
        %v1160 = vsub.s32 0, %v1159
        %v1161 = vrot.slane %v1121, %v1160
        %v1162 = vlaneseq
        %v1163 = vshrl.u32 %v1162, 7
        %v1164 = vsub.s32 0, %v1163
        %v1165 = vrot.slane %v1122, %v1164
        %v1166 = vlaneseq
        %v1167 = vshrl.u32 %v1166, 7
        %v1168 = vsub.s32 0, %v1167
        %v1169 = vrot.slane %v1123, %v1168
        %v1170 = vlaneseq
        %v1171 = vshrl.u32 %v1170, 7
        %v1172 = vsub.s32 0, %v1171
        %v1173 = vrot.slane %v1124, %v1172
        %v1174 = vlaneseq
        %v1175 = vshrl.u32 %v1174, 7
        %v1176 = vsub.s32 0, %v1175
        %v1177 = vrot.slane %v1125, %v1176
        %v1178 = vlaneseq
        %v1179 = vshrl.u32 %v1178, 7
        %v1180 = vsub.s32 0, %v1179
        %v1181 = vrot.slane %v1126, %v1180
        %v1182 = vlaneseq
        %v1183 = vshrl.u32 %v1182, 7
        %v1184 = vsub.s32 0, %v1183
        %v1185 = vrot.slane %v1127, %v1184
        %v1186 = vlaneseq
        %v1187 = vshrl.u32 %v1186, 7
        %v1188 = vsub.s32 0, %v1187
        %v1189 = vrot.slane %v1128, %v1188
        %v1190 = vlaneseq
        %v1191 = vshrl.u32 %v1190, 7
        %v1192 = vsub.s32 0, %v1191
        %v1193 = vrot.slane %v1129, %v1192
        %v1210 = vsel %vm869, %v1037, %v1133
        %v1211 = vsel %vm869, %v1041, %v1137
        %v1212 = vsel %vm869, %v1045, %v1141
        %v1213 = vsel %vm869, %v1049, %v1145
        %v1214 = vsel %vm869, %v1053, %v1149
        %v1215 = vsel %vm869, %v1057, %v1153
        %v1216 = vsel %vm869, %v1061, %v1157
        %v1217 = vsel %vm869, %v1065, %v1161
        %v1218 = vsel %vm869, %v1069, %v1165
        %v1219 = vsel %vm869, %v1073, %v1169
        %v1220 = vsel %vm869, %v1077, %v1173
        %v1221 = vsel %vm869, %v1081, %v1177
        %v1222 = vsel %vm869, %v1085, %v1181
        %v1223 = vsel %vm869, %v1089, %v1185
        %v1224 = vsel %vm869, %v1093, %v1189
        %v1225 = vsel %vm869, %v1097, %v1193
        %v1258 = vcombine.low %v870, %v872
        %v1259 = vcombine.low %v871, %v873
        %v1261 = vunpack.c.l.s4 1935823168
        %v1262 = vunpack.c.0.s8 %v1261
        %v1263 = vlaneseq
        %v1264 = vshrl.u32 %v1263, 7
        %v1265 = vsub.s32 %v1262, %v1264
        %v1266 = vrot.slane %v1258, %v1265
        %v1268 = vunpack.c.l.s4 1935823168
        %v1269 = vunpack.c.0.s8 %v1268
        %v1270 = vlaneseq
        %v1271 = vshrl.u32 %v1270, 7
        %v1272 = vsub.s32 %v1269, %v1271
        %v1273 = vrot.slane %v1259, %v1272
        %v1274 = vcombine.low %v1266, %v1273
        %v1276 = vunpack.c.l.s4 1935823168
        %v1277 = vunpack.c.0.s8 %v1276
        %v1278 = vlaneseq
        %v1279 = vshrl.u32 %v1278, 7
        %v1280 = vsub.s32 %v1277, %v1279
        %v1281 = vrot.slane %v1274, %v1280
        %v1282 = vcombine.low %v1210, %v1212
        %v1283 = vcombine.low %v1211, %v1213
        %v1285 = vunpack.c.l.s4 1935823168
        %v1286 = vunpack.c.0.s8 %v1285
        %v1287 = vlaneseq
        %v1288 = vshrl.u32 %v1287, 7
        %v1289 = vsub.s32 %v1286, %v1288
        %v1290 = vrot.slane %v1282, %v1289
        %v1292 = vunpack.c.l.s4 1935823168
        %v1293 = vunpack.c.0.s8 %v1292
        %v1294 = vlaneseq
        %v1295 = vshrl.u32 %v1294, 7
        %v1296 = vsub.s32 %v1293, %v1295
        %v1297 = vrot.slane %v1283, %v1296
        %v1298 = vcombine.low %v1290, %v1297
        %v1300 = vunpack.c.l.s4 1935823168
        %v1301 = vunpack.c.0.s8 %v1300
        %v1302 = vlaneseq
        %v1303 = vshrl.u32 %v1302, 7
        %v1304 = vsub.s32 %v1301, %v1303
        %v1305 = vrot.slane %v1298, %v1304
        %v1306 = vcombine.low %v874, %v876
        %v1307 = vcombine.low %v875, %v877
        %v1309 = vunpack.c.l.s4 1935823168
        %v1310 = vunpack.c.0.s8 %v1309
        %v1311 = vlaneseq
        %v1312 = vshrl.u32 %v1311, 7
        %v1313 = vsub.s32 %v1310, %v1312
        %v1314 = vrot.slane %v1306, %v1313
        %v1316 = vunpack.c.l.s4 1935823168
        %v1317 = vunpack.c.0.s8 %v1316
        %v1318 = vlaneseq
        %v1319 = vshrl.u32 %v1318, 7
        %v1320 = vsub.s32 %v1317, %v1319
        %v1321 = vrot.slane %v1307, %v1320
        %v1322 = vcombine.low %v1314, %v1321
        %v1324 = vunpack.c.l.s4 1935823168
        %v1325 = vunpack.c.0.s8 %v1324
        %v1326 = vlaneseq
        %v1327 = vshrl.u32 %v1326, 7
        %v1328 = vsub.s32 %v1325, %v1327
        %v1329 = vrot.slane %v1322, %v1328
        %v1330 = vcombine.low %v1214, %v1216
        %v1331 = vcombine.low %v1215, %v1217
        %v1333 = vunpack.c.l.s4 1935823168
        %v1334 = vunpack.c.0.s8 %v1333
        %v1335 = vlaneseq
        %v1336 = vshrl.u32 %v1335, 7
        %v1337 = vsub.s32 %v1334, %v1336
        %v1338 = vrot.slane %v1330, %v1337
        %v1340 = vunpack.c.l.s4 1935823168
        %v1341 = vunpack.c.0.s8 %v1340
        %v1342 = vlaneseq
        %v1343 = vshrl.u32 %v1342, 7
        %v1344 = vsub.s32 %v1341, %v1343
        %v1345 = vrot.slane %v1331, %v1344
        %v1346 = vcombine.low %v1338, %v1345
        %v1348 = vunpack.c.l.s4 1935823168
        %v1349 = vunpack.c.0.s8 %v1348
        %v1350 = vlaneseq
        %v1351 = vshrl.u32 %v1350, 7
        %v1352 = vsub.s32 %v1349, %v1351
        %v1353 = vrot.slane %v1346, %v1352
        %v1354 = vcombine.low %v878, %v880
        %v1355 = vcombine.low %v879, %v881
        %v1357 = vunpack.c.l.s4 1935823168
        %v1358 = vunpack.c.0.s8 %v1357
        %v1359 = vlaneseq
        %v1360 = vshrl.u32 %v1359, 7
        %v1361 = vsub.s32 %v1358, %v1360
        %v1362 = vrot.slane %v1354, %v1361
        %v1364 = vunpack.c.l.s4 1935823168
        %v1365 = vunpack.c.0.s8 %v1364
        %v1366 = vlaneseq
        %v1367 = vshrl.u32 %v1366, 7
        %v1368 = vsub.s32 %v1365, %v1367
        %v1369 = vrot.slane %v1355, %v1368
        %v1370 = vcombine.low %v1362, %v1369
        %v1372 = vunpack.c.l.s4 1935823168
        %v1373 = vunpack.c.0.s8 %v1372
        %v1374 = vlaneseq
        %v1375 = vshrl.u32 %v1374, 7
        %v1376 = vsub.s32 %v1373, %v1375
        %v1377 = vrot.slane %v1370, %v1376
        %v1378 = vcombine.low %v1218, %v1220
        %v1379 = vcombine.low %v1219, %v1221
        %v1381 = vunpack.c.l.s4 1935823168
        %v1382 = vunpack.c.0.s8 %v1381
        %v1383 = vlaneseq
        %v1384 = vshrl.u32 %v1383, 7
        %v1385 = vsub.s32 %v1382, %v1384
        %v1386 = vrot.slane %v1378, %v1385
        %v1388 = vunpack.c.l.s4 1935823168
        %v1389 = vunpack.c.0.s8 %v1388
        %v1390 = vlaneseq
        %v1391 = vshrl.u32 %v1390, 7
        %v1392 = vsub.s32 %v1389, %v1391
        %v1393 = vrot.slane %v1379, %v1392
        %v1394 = vcombine.low %v1386, %v1393
        %v1396 = vunpack.c.l.s4 1935823168
        %v1397 = vunpack.c.0.s8 %v1396
        %v1398 = vlaneseq
        %v1399 = vshrl.u32 %v1398, 7
        %v1400 = vsub.s32 %v1397, %v1399
        %v1401 = vrot.slane %v1394, %v1400
        %v1402 = vcombine.low %v882, %v884
        %v1403 = vcombine.low %v883, %v885
        %v1405 = vunpack.c.l.s4 1935823168
        %v1406 = vunpack.c.0.s8 %v1405
        %v1407 = vlaneseq
        %v1408 = vshrl.u32 %v1407, 7
        %v1409 = vsub.s32 %v1406, %v1408
        %v1410 = vrot.slane %v1402, %v1409
        %v1412 = vunpack.c.l.s4 1935823168
        %v1413 = vunpack.c.0.s8 %v1412
        %v1414 = vlaneseq
        %v1415 = vshrl.u32 %v1414, 7
        %v1416 = vsub.s32 %v1413, %v1415
        %v1417 = vrot.slane %v1403, %v1416
        %v1418 = vcombine.low %v1410, %v1417
        %v1420 = vunpack.c.l.s4 1935823168
        %v1421 = vunpack.c.0.s8 %v1420
        %v1422 = vlaneseq
        %v1423 = vshrl.u32 %v1422, 7
        %v1424 = vsub.s32 %v1421, %v1423
        %v1425 = vrot.slane %v1418, %v1424
        %v1426 = vcombine.low %v1222, %v1224
        %v1427 = vcombine.low %v1223, %v1225
        %v1429 = vunpack.c.l.s4 1935823168
        %v1430 = vunpack.c.0.s8 %v1429
        %v1431 = vlaneseq
        %v1432 = vshrl.u32 %v1431, 7
        %v1433 = vsub.s32 %v1430, %v1432
        %v1434 = vrot.slane %v1426, %v1433
        %v1436 = vunpack.c.l.s4 1935823168
        %v1437 = vunpack.c.0.s8 %v1436
        %v1438 = vlaneseq
        %v1439 = vshrl.u32 %v1438, 7
        %v1440 = vsub.s32 %v1437, %v1439
        %v1441 = vrot.slane %v1427, %v1440
        %v1442 = vcombine.low %v1434, %v1441
        %v1444 = vunpack.c.l.s4 1935823168
        %v1445 = vunpack.c.0.s8 %v1444
        %v1446 = vlaneseq
        %v1447 = vshrl.u32 %v1446, 7
        %v1448 = vsub.s32 %v1445, %v1447
        %v1449 = vrot.slane %v1442, %v1448
        %v1451 = vshrl.u32 %v1281, 16
        %v1453 = vrot.slane %v1451, 7
        %v1454 = vshll.u32 %v1281, 16
        %v1456 = vor.u32 %v1453, %v1454
        %v1457 = vrot.slane %v1453, 4
        %v1459 = vshrl.u32 %v1305, 16
        %v1461 = vrot.slane %v1459, 7
        %v1462 = vshll.u32 %v1305, 16
        %v1464 = vor.u32 %v1461, %v1462
        %v1465 = vrot.slane %v1461, 4
        %v1467 = vshrl.u32 %v1329, 16
        %v1469 = vrot.slane %v1467, 7
        %v1470 = vshll.u32 %v1329, 16
        %v1472 = vor.u32 %v1469, %v1470
        %v1473 = vrot.slane %v1469, 4
        %v1475 = vshrl.u32 %v1353, 16
        %v1477 = vrot.slane %v1475, 7
        %v1478 = vshll.u32 %v1353, 16
        %v1480 = vor.u32 %v1477, %v1478
        %v1481 = vrot.slane %v1477, 4
        %v1483 = vshrl.u32 %v1377, 16
        %v1485 = vrot.slane %v1483, 7
        %v1486 = vshll.u32 %v1377, 16
        %v1488 = vor.u32 %v1485, %v1486
        %v1489 = vrot.slane %v1485, 4
        %v1491 = vshrl.u32 %v1401, 16
        %v1493 = vrot.slane %v1491, 7
        %v1494 = vshll.u32 %v1401, 16
        %v1496 = vor.u32 %v1493, %v1494
        %v1497 = vrot.slane %v1493, 4
        %v1499 = vshrl.u32 %v1425, 16
        %v1501 = vrot.slane %v1499, 7
        %v1502 = vshll.u32 %v1425, 16
        %v1504 = vor.u32 %v1501, %v1502
        %v1505 = vrot.slane %v1501, 4
        %v1507 = vshrl.u32 %v1449, 16
        %v1509 = vrot.slane %v1507, 7
        %v1510 = vshll.u32 %v1449, 16
        %v1512 = vor.u32 %v1509, %v1510
        %v1513 = vrot.slane %v1509, 4
        %s1530 = scalar_lea.vmem [#allocation2], 12
        %vm1531 = vcmask 1043456
        %vm1532 = vsmask.f32 7938
        %vm1533 = vmand %vm1531, %vm1532
        %v1534 = vld [vmem:[%s1530] sm:$0xf]
        %v1535 = vsel %vm1533, %v1456, %v1534
        %1536 = vst [vmem:[%s1530] sm:$0xf] %v1535
        %v1537 = vld [vmem:[%s1530 + $0x4] sm:$0x1]
        %v1538 = vsel %vm869, %v1457, %v1537
        %1539 = vst [vmem:[%s1530 + $0x4] sm:$0x1] %v1538
        %v1540 = vld [vmem:[%s1530 + $0xc] sm:$0xf]
        %v1541 = vsel %vm1533, %v1464, %v1540
        %1542 = vst [vmem:[%s1530 + $0xc] sm:$0xf] %v1541
        %v1543 = vld [vmem:[%s1530 + $0x10] sm:$0x1]
        %v1544 = vsel %vm869, %v1465, %v1543
        %1545 = vst [vmem:[%s1530 + $0x10] sm:$0x1] %v1544
        %v1546 = vld [vmem:[%s1530 + $0x18] sm:$0xf]
        %v1547 = vsel %vm1533, %v1472, %v1546
        %1548 = vst [vmem:[%s1530 + $0x18] sm:$0xf] %v1547
        %v1549 = vld [vmem:[%s1530 + $0x1c] sm:$0x1]
        %v1550 = vsel %vm869, %v1473, %v1549
        %1551 = vst [vmem:[%s1530 + $0x1c] sm:$0x1] %v1550
        %v1552 = vld [vmem:[%s1530 + $0x24] sm:$0xf]
        %v1553 = vsel %vm1533, %v1480, %v1552
        %1554 = vst [vmem:[%s1530 + $0x24] sm:$0xf] %v1553
        %v1555 = vld [vmem:[%s1530 + $0x28] sm:$0x1]
        %v1556 = vsel %vm869, %v1481, %v1555
        %1557 = vst [vmem:[%s1530 + $0x28] sm:$0x1] %v1556
        %v1558 = vld [vmem:[%s1530 + $0x30] sm:$0xf]
        %v1559 = vsel %vm1533, %v1488, %v1558
        %1560 = vst [vmem:[%s1530 + $0x30] sm:$0xf] %v1559
        %v1561 = vld [vmem:[%s1530 + $0x34] sm:$0x1]
        %v1562 = vsel %vm869, %v1489, %v1561
        %1563 = vst [vmem:[%s1530 + $0x34] sm:$0x1] %v1562
        %v1564 = vld [vmem:[%s1530 + $0x3c] sm:$0xf]
        %v1565 = vsel %vm1533, %v1496, %v1564
        %1566 = vst [vmem:[%s1530 + $0x3c] sm:$0xf] %v1565
        %v1567 = vld [vmem:[%s1530 + $0x40] sm:$0x1]
        %v1568 = vsel %vm869, %v1497, %v1567
        %1569 = vst [vmem:[%s1530 + $0x40] sm:$0x1] %v1568
        %v1570 = vld [vmem:[%s1530 + $0x48] sm:$0xf]
        %v1571 = vsel %vm1533, %v1504, %v1570
        %1572 = vst [vmem:[%s1530 + $0x48] sm:$0xf] %v1571
        %v1573 = vld [vmem:[%s1530 + $0x4c] sm:$0x1]
        %v1574 = vsel %vm869, %v1505, %v1573
        %1575 = vst [vmem:[%s1530 + $0x4c] sm:$0x1] %v1574
        %v1576 = vld [vmem:[%s1530 + $0x54] sm:$0xf]
        %v1577 = vsel %vm1533, %v1512, %v1576
        %1578 = vst [vmem:[%s1530 + $0x54] sm:$0xf] %v1577
        %v1579 = vld [vmem:[%s1530 + $0x58] sm:$0x1]
        %v1580 = vsel %vm869, %v1513, %v1579
        %1581 = vst [vmem:[%s1530 + $0x58] sm:$0x1] %v1580
        %1582 = vst [vmem:[#allocation2] sm:$0xf] 0
        %1583 = vst [vmem:[#allocation2 + $0x4] sm:$0x1] 0
        %s1584 = scalar_lea.vmem [#allocation2], 108
        %1585 = vst [vmem:[%s1584] sm:$0xf] 0
        %1586 = vst [vmem:[%s1584 + $0x4] sm:$0x1] 0
        %v1587 = vld [vmem:[%s1530] sm:$0x1]
        %v1588 = vsel %vm869, 0, %v1587
        %1589 = vst [vmem:[%s1530] sm:$0x1] %v1588
        %v1590 = vld [vmem:[%s1530 + $0xc] sm:$0x1]
        %v1591 = vsel %vm869, 0, %v1590
        %1592 = vst [vmem:[%s1530 + $0xc] sm:$0x1] %v1591
        %v1593 = vld [vmem:[%s1530 + $0x18] sm:$0x1]
        %v1594 = vsel %vm869, 0, %v1593
        %1595 = vst [vmem:[%s1530 + $0x18] sm:$0x1] %v1594
        %v1596 = vld [vmem:[%s1530 + $0x24] sm:$0x1]
        %v1597 = vsel %vm869, 0, %v1596
        %1598 = vst [vmem:[%s1530 + $0x24] sm:$0x1] %v1597
        %v1599 = vld [vmem:[%s1530 + $0x30] sm:$0x1]
        %v1600 = vsel %vm869, 0, %v1599
        %1601 = vst [vmem:[%s1530 + $0x30] sm:$0x1] %v1600
        %v1602 = vld [vmem:[%s1530 + $0x3c] sm:$0x1]
        %v1603 = vsel %vm869, 0, %v1602
        %1604 = vst [vmem:[%s1530 + $0x3c] sm:$0x1] %v1603
        %v1605 = vld [vmem:[%s1530 + $0x48] sm:$0x1]
        %v1606 = vsel %vm869, 0, %v1605
        %1607 = vst [vmem:[%s1530 + $0x48] sm:$0x1] %v1606
        %v1608 = vld [vmem:[%s1530 + $0x54] sm:$0x1]
        %v1609 = vsel %vm869, 0, %v1608
        %1610 = vst [vmem:[%s1530 + $0x54] sm:$0x1] %v1609
        %vm1611 = vmand %vm867, %vm1532
        %v1612 = vld [vmem:[%s1530 + $0x4] sm:$0x1]
        %v1613 = vsel %vm1611, 0, %v1612
        %1614 = vst [vmem:[%s1530 + $0x4] sm:$0x1] %v1613
        %v1615 = vld [vmem:[%s1530 + $0x10] sm:$0x1]
        %v1616 = vsel %vm1611, 0, %v1615
        %1617 = vst [vmem:[%s1530 + $0x10] sm:$0x1] %v1616
        %v1618 = vld [vmem:[%s1530 + $0x1c] sm:$0x1]
        %v1619 = vsel %vm1611, 0, %v1618
        %1620 = vst [vmem:[%s1530 + $0x1c] sm:$0x1] %v1619
        %v1621 = vld [vmem:[%s1530 + $0x28] sm:$0x1]
        %v1622 = vsel %vm1611, 0, %v1621
        %1623 = vst [vmem:[%s1530 + $0x28] sm:$0x1] %v1622
        %v1624 = vld [vmem:[%s1530 + $0x34] sm:$0x1]
        %v1625 = vsel %vm1611, 0, %v1624
        %1626 = vst [vmem:[%s1530 + $0x34] sm:$0x1] %v1625
        %v1627 = vld [vmem:[%s1530 + $0x40] sm:$0x1]
        %v1628 = vsel %vm1611, 0, %v1627
        %1629 = vst [vmem:[%s1530 + $0x40] sm:$0x1] %v1628
        %v1630 = vld [vmem:[%s1530 + $0x4c] sm:$0x1]
        %v1631 = vsel %vm1611, 0, %v1630
        %1632 = vst [vmem:[%s1530 + $0x4c] sm:$0x1] %v1631
        %v1633 = vld [vmem:[%s1530 + $0x58] sm:$0x1]
        %v1634 = vsel %vm1611, 0, %v1633
        %1635 = vst [vmem:[%s1530 + $0x58] sm:$0x1] %v1634
        %v1636 = vld [vmem:[#allocation2] sm:$0xf]
        %v1637 = vld [vmem:[#allocation2 + $0x4] sm:$0xf]
        %v1638 = vld [vmem:[#allocation2 + $0xc] sm:$0xf]
        %v1639 = vld [vmem:[#allocation2 + $0x10] sm:$0xf]
        %v1640 = vld [vmem:[#allocation2 + $0x18] sm:$0xf]
        %v1641 = vld [vmem:[#allocation2 + $0x1c] sm:$0xf]
        %v1642 = vld [vmem:[#allocation2 + $0x24] sm:$0xf]
        %v1643 = vld [vmem:[#allocation2 + $0x28] sm:$0xf]
        %v1644 = vld [vmem:[#allocation2 + $0x30] sm:$0xf]
        %v1645 = vld [vmem:[#allocation2 + $0x34] sm:$0xf]
        %v1646 = vld [vmem:[#allocation2 + $0x3c] sm:$0xf]
        %v1647 = vld [vmem:[#allocation2 + $0x40] sm:$0xf]
        %v1648 = vld [vmem:[#allocation2 + $0x48] sm:$0xf]
        %v1649 = vld [vmem:[#allocation2 + $0x4c] sm:$0xf]
        %v1650 = vld [vmem:[#allocation2 + $0x54] sm:$0xf]
        %v1651 = vld [vmem:[#allocation2 + $0x58] sm:$0xf]
        %v1652 = vld [vmem:[#allocation2 + $0x60] sm:$0xf]
        %v1653 = vld [vmem:[#allocation2 + $0x64] sm:$0xf]
        %v1654 = vld [vmem:[#allocation6] sm:$0xf]
        %v1655 = vld [vmem:[#allocation6 + $0x4] sm:$0xf]
        %v1656 = vld [vmem:[#allocation6 + $0x8] sm:$0xf]
        %v1657 = vld [vmem:[#allocation6 + $0xc] sm:$0xf]
        %v1658 = vld [vmem:[#allocation6 + $0x10] sm:$0xf]
        %v1659 = vld [vmem:[#allocation6 + $0x14] sm:$0xf]
        %v1660 = vld [vmem:[#allocation6 + $0x18] sm:$0xf]
        %v1661 = vld [vmem:[#allocation6 + $0x1c] sm:$0xf]
        %v1662 = vld [vmem:[#allocation6 + $0x20] sm:$0xf]
        %v1663 = vld [vmem:[#allocation6 + $0x24] sm:$0xf]
        %v1664 = vld [vmem:[#allocation6 + $0x28] sm:$0xf]
        %v1665 = vld [vmem:[#allocation6 + $0x2c] sm:$0xf]
        %v1666 = vld [vmem:[#allocation6 + $0x30] sm:$0xf]
        %v1667 = vld [vmem:[#allocation6 + $0x34] sm:$0xf]
        %v1668 = vld [vmem:[#allocation6 + $0x38] sm:$0xf]
        %v1669 = vld [vmem:[#allocation6 + $0x3c] sm:$0xf]
        %v1670 = vld [vmem:[#allocation2 + $0x8] sm:$0x1]
        %v1671 = vld [vmem:[#allocation2 + $0x14] sm:$0x1]
        %v1672 = vld [vmem:[#allocation2 + $0x20] sm:$0x1]
        %v1673 = vld [vmem:[#allocation2 + $0x2c] sm:$0x1]
        %v1674 = vld [vmem:[#allocation2 + $0x38] sm:$0x1]
        %v1675 = vld [vmem:[#allocation2 + $0x44] sm:$0x1]
        %v1676 = vld [vmem:[#allocation2 + $0x50] sm:$0x1]
        %v1677 = vld [vmem:[#allocation2 + $0x5c] sm:$0x1]
        %v1678 = vld [vmem:[#allocation2 + $0x68] sm:$0x1]
        %vm1679 = vsmask.f32 3328
        %vm1680 = vsmask.f32 7440
        %vm1681 = vmor %vm1679, %vm1680
        %v1683 = vshrl.u32 %v1636, 16
        %v1685 = vrot.slane %v1683, 4
        %v1686 = vshll.u32 %v1636, 16
        %v1688 = vrot.slane %v1686, 5
        %v1689 = vor.u32 %v1685, %v1688
        %v1690 = vrot.slane %v1689, 4
        %v1692 = vshll.u32 %v1637, 16
        %v1694 = vrot.slane %v1692, 5
        %v1695 = vsel %vm1681, %v1690, %v1694
        %v1696 = vshrl.u32 %v1637, 16
        %v1698 = vrot.slane %v1696, 4
        %v1699 = vor.u32 %v1698, %v1694
        %v1700 = vrot.slane %v1699, 4
        %v1702 = vshll.u32 %v1670, 16
        %v1704 = vrot.slane %v1702, 5
        %v1705 = vsel %vm1681, %v1700, %v1704
        %v1707 = vshrl.u32 %v1638, 16
        %v1709 = vrot.slane %v1707, 4
        %v1710 = vshll.u32 %v1638, 16
        %v1712 = vrot.slane %v1710, 5
        %v1713 = vor.u32 %v1709, %v1712
        %v1714 = vrot.slane %v1713, 4
        %v1716 = vshll.u32 %v1639, 16
        %v1718 = vrot.slane %v1716, 5
        %v1719 = vsel %vm1681, %v1714, %v1718
        %v1720 = vshrl.u32 %v1639, 16
        %v1722 = vrot.slane %v1720, 4
        %v1723 = vor.u32 %v1722, %v1718
        %v1724 = vrot.slane %v1723, 4
        %v1726 = vshll.u32 %v1671, 16
        %v1728 = vrot.slane %v1726, 5
        %v1729 = vsel %vm1681, %v1724, %v1728
        %v1731 = vshrl.u32 %v1640, 16
        %v1733 = vrot.slane %v1731, 4
        %v1734 = vshll.u32 %v1640, 16
        %v1736 = vrot.slane %v1734, 5
        %v1737 = vor.u32 %v1733, %v1736
        %v1738 = vrot.slane %v1737, 4
        %v1740 = vshll.u32 %v1641, 16
        %v1742 = vrot.slane %v1740, 5
        %v1743 = vsel %vm1681, %v1738, %v1742
        %v1744 = vshrl.u32 %v1641, 16
        %v1746 = vrot.slane %v1744, 4
        %v1747 = vor.u32 %v1746, %v1742
        %v1748 = vrot.slane %v1747, 4
        %v1750 = vshll.u32 %v1672, 16
        %v1752 = vrot.slane %v1750, 5
        %v1753 = vsel %vm1681, %v1748, %v1752
        %v1755 = vshrl.u32 %v1642, 16
        %v1757 = vrot.slane %v1755, 4
        %v1758 = vshll.u32 %v1642, 16
        %v1760 = vrot.slane %v1758, 5
        %v1761 = vor.u32 %v1757, %v1760
        %v1762 = vrot.slane %v1761, 4
        %v1764 = vshll.u32 %v1643, 16
        %v1766 = vrot.slane %v1764, 5
        %v1767 = vsel %vm1681, %v1762, %v1766
        %v1768 = vshrl.u32 %v1643, 16
        %v1770 = vrot.slane %v1768, 4
        %v1771 = vor.u32 %v1770, %v1766
        %v1772 = vrot.slane %v1771, 4
        %v1774 = vshll.u32 %v1673, 16
        %v1776 = vrot.slane %v1774, 5
        %v1777 = vsel %vm1681, %v1772, %v1776
        %v1779 = vshrl.u32 %v1644, 16
        %v1781 = vrot.slane %v1779, 4
        %v1782 = vshll.u32 %v1644, 16
        %v1784 = vrot.slane %v1782, 5
        %v1785 = vor.u32 %v1781, %v1784
        %v1786 = vrot.slane %v1785, 4
        %v1788 = vshll.u32 %v1645, 16
        %v1790 = vrot.slane %v1788, 5
        %v1791 = vsel %vm1681, %v1786, %v1790
        %v1792 = vshrl.u32 %v1645, 16
        %v1794 = vrot.slane %v1792, 4
        %v1795 = vor.u32 %v1794, %v1790
        %v1796 = vrot.slane %v1795, 4
        %v1798 = vshll.u32 %v1674, 16
        %v1800 = vrot.slane %v1798, 5
        %v1801 = vsel %vm1681, %v1796, %v1800
        %v1803 = vshrl.u32 %v1646, 16
        %v1805 = vrot.slane %v1803, 4
        %v1806 = vshll.u32 %v1646, 16
        %v1808 = vrot.slane %v1806, 5
        %v1809 = vor.u32 %v1805, %v1808
        %v1810 = vrot.slane %v1809, 4
        %v1812 = vshll.u32 %v1647, 16
        %v1814 = vrot.slane %v1812, 5
        %v1815 = vsel %vm1681, %v1810, %v1814
        %v1816 = vshrl.u32 %v1647, 16
        %v1818 = vrot.slane %v1816, 4
        %v1819 = vor.u32 %v1818, %v1814
        %v1820 = vrot.slane %v1819, 4
        %v1822 = vshll.u32 %v1675, 16
        %v1824 = vrot.slane %v1822, 5
        %v1825 = vsel %vm1681, %v1820, %v1824
        %v1827 = vshrl.u32 %v1648, 16
        %v1829 = vrot.slane %v1827, 4
        %v1830 = vshll.u32 %v1648, 16
        %v1832 = vrot.slane %v1830, 5
        %v1833 = vor.u32 %v1829, %v1832
        %v1834 = vrot.slane %v1833, 4
        %v1836 = vshll.u32 %v1649, 16
        %v1838 = vrot.slane %v1836, 5
        %v1839 = vsel %vm1681, %v1834, %v1838
        %v1840 = vshrl.u32 %v1649, 16
        %v1842 = vrot.slane %v1840, 4
        %v1843 = vor.u32 %v1842, %v1838
        %v1844 = vrot.slane %v1843, 4
        %v1846 = vshll.u32 %v1676, 16
        %v1848 = vrot.slane %v1846, 5
        %v1849 = vsel %vm1681, %v1844, %v1848
        %v1851 = vshrl.u32 %v1650, 16
        %v1853 = vrot.slane %v1851, 4
        %v1854 = vshll.u32 %v1650, 16
        %v1856 = vrot.slane %v1854, 5
        %v1857 = vor.u32 %v1853, %v1856
        %v1858 = vrot.slane %v1857, 4
        %v1860 = vshll.u32 %v1651, 16
        %v1862 = vrot.slane %v1860, 5
        %v1863 = vsel %vm1681, %v1858, %v1862
        %v1864 = vshrl.u32 %v1651, 16
        %v1866 = vrot.slane %v1864, 4
        %v1867 = vor.u32 %v1866, %v1862
        %v1868 = vrot.slane %v1867, 4
        %v1870 = vshll.u32 %v1677, 16
        %v1872 = vrot.slane %v1870, 5
        %v1873 = vsel %vm1681, %v1868, %v1872
        %v1875 = vshrl.u32 %v1652, 16
        %v1877 = vrot.slane %v1875, 4
        %v1878 = vshll.u32 %v1652, 16
        %v1880 = vrot.slane %v1878, 5
        %v1881 = vor.u32 %v1877, %v1880
        %v1882 = vrot.slane %v1881, 4
        %v1884 = vshll.u32 %v1653, 16
        %v1886 = vrot.slane %v1884, 5
        %v1887 = vsel %vm1681, %v1882, %v1886
        %v1888 = vshrl.u32 %v1653, 16
        %v1890 = vrot.slane %v1888, 4
        %v1891 = vor.u32 %v1890, %v1886
        %v1892 = vrot.slane %v1891, 4
        %v1894 = vshll.u32 %v1678, 16
        %v1896 = vrot.slane %v1894, 5
        %v1897 = vsel %vm1681, %v1892, %v1896
        %s1898 = scalar_lea.vmem [#allocation6], 64
        %v1899 = vld [vmem:[%s1898] sm:$0xf]
        %v1900 = vld [vmem:[%s1898 + $0x4] sm:$0xf]
        %v1901 = vld [vmem:[%s1898 + $0x8] sm:$0xf]
        %v1902 = vld [vmem:[%s1898 + $0xc] sm:$0xf]
        %v1903 = vld [vmem:[%s1898 + $0x10] sm:$0xf]
        %v1904 = vld [vmem:[%s1898 + $0x14] sm:$0xf]
        %v1905 = vld [vmem:[%s1898 + $0x18] sm:$0xf]
        %v1906 = vld [vmem:[%s1898 + $0x1c] sm:$0xf]
        %v1907 = vld [vmem:[%s1898 + $0x20] sm:$0xf]
        %v1908 = vld [vmem:[%s1898 + $0x24] sm:$0xf]
        %v1909 = vld [vmem:[%s1898 + $0x28] sm:$0xf]
        %v1910 = vld [vmem:[%s1898 + $0x2c] sm:$0xf]
        %v1911 = vld [vmem:[%s1898 + $0x30] sm:$0xf]
        %v1912 = vld [vmem:[%s1898 + $0x34] sm:$0xf]
        %v1913 = vld [vmem:[%s1898 + $0x38] sm:$0xf]
        %v1914 = vld [vmem:[%s1898 + $0x3c] sm:$0xf]
        %v1915 = vunpack.c.l.b16 %v1695
        %v1916 = vunpack.c.l.b16 %v1705
        %v1917 = vunpack.c.l.b16 %v1719
        %v1918 = vunpack.c.l.b16 %v1729
        %v1919 = vunpack.c.l.b16 %v1743
        %v1920 = vunpack.c.l.b16 %v1753
        %v1921 = vunpack.c.l.b16 %v1767
        %v1922 = vunpack.c.l.b16 %v1777
        %v1923 = vunpack.c.l.b16 %v1791
        %v1924 = vunpack.c.l.b16 %v1801
        %v1925 = vunpack.c.l.b16 %v1815
        %v1926 = vunpack.c.l.b16 %v1825
        %v1927 = vunpack.c.l.b16 %v1839
        %v1928 = vunpack.c.l.b16 %v1849
        %v1929 = vunpack.c.l.b16 %v1863
        %v1930 = vunpack.c.l.b16 %v1873
        %v1931 = vunpack.c.l.b16 %v1887
        %v1932 = vunpack.c.l.b16 %v1897
        %v1933 = vpack.c.b16 %v1916, %v1915
        %v1934 = vpack.c.b16 %v1918, %v1917
        %v1935 = vpack.c.b16 %v1920, %v1919
        %v1936 = vpack.c.b16 %v1922, %v1921
        %v1937 = vpack.c.b16 %v1924, %v1923
        %v1938 = vpack.c.b16 %v1926, %v1925
        %v1939 = vpack.c.b16 %v1928, %v1927
        %v1940 = vpack.c.b16 %v1930, %v1929
        %v1941 = vpack.c.b16 %v1932, %v1931
        %v1967 = vunpack.c.l.b16 %v1899
        %v1968 = vunpack.c.l.b16 %v1900
        %v1969 = vunpack.c.l.b16 %v1901
        %v1970 = vunpack.c.l.b16 %v1902
        %v1971 = vunpack.c.l.b16 %v1903
        %v1972 = vunpack.c.l.b16 %v1904
        %v1973 = vunpack.c.l.b16 %v1905
        %v1974 = vunpack.c.l.b16 %v1906
        %v1975 = vunpack.c.l.b16 %v1907
        %v1976 = vunpack.c.l.b16 %v1908
        %v1977 = vunpack.c.l.b16 %v1909
        %v1978 = vunpack.c.l.b16 %v1910
        %v1979 = vunpack.c.l.b16 %v1911
        %v1980 = vunpack.c.l.b16 %v1912
        %v1981 = vunpack.c.l.b16 %v1913
        %v1982 = vunpack.c.l.b16 %v1914
        %v1983 = vpack.c.b16 %v1968, %v1967
        %v1984 = vpack.c.b16 %v1970, %v1969
        %v1985 = vpack.c.b16 %v1972, %v1971
        %v1986 = vpack.c.b16 %v1974, %v1973
        %v1987 = vpack.c.b16 %v1976, %v1975
        %v1988 = vpack.c.b16 %v1978, %v1977
        %v1989 = vpack.c.b16 %v1980, %v1979
        %v1990 = vpack.c.b16 %v1982, %v1981
        %1999 = vmatprep.subr.bf16.mxu0 0
        %2000 = vmatpush1.bf16.msra.mxu0 %v1983
        %2001 = vmatprep.subr.bf16.mxu0 0
        %2002 = vmatpush1.bf16.msra.mxu0 %v1984
        %2003 = vmatprep.subr.bf16.mxu0 0
        %2004 = vmatpush1.bf16.msra.mxu0 %v1985
        %2005 = vmatprep.subr.bf16.mxu0 0
        %2006 = vmatpush1.bf16.msra.mxu0 %v1986
        %2007 = vmatprep.subr.bf16.mxu0 0
        %2008 = vmatpush1.bf16.msra.mxu0 %v1987
        %2009 = vmatprep.subr.bf16.mxu0 0
        %2010 = vmatpush1.bf16.msra.mxu0 %v1988
        %2011 = vmatprep.subr.bf16.mxu0 0
        %2012 = vmatpush1.bf16.msra.mxu0 %v1989
        %2013 = vmatprep.subr.bf16.mxu0 0
        %2014 = vmatpush1.bf16.msra.mxu0 %v1990
        %2015 = vmatprep.subr.bf16.mxu0 0
        %2016 = vmatpush1.bf16.msra.mxu0 0
        %2017 = vmatprep.subr.bf16.mxu0 0
        %2018 = vmatpush1.bf16.msra.mxu0 0
        %2019 = vmatprep.subr.bf16.mxu0 0
        %2020 = vmatpush1.bf16.msra.mxu0 0
        %2021 = vmatprep.subr.bf16.mxu0 0
        %2022 = vmatpush1.bf16.msra.mxu0 0
        %2023 = vmatprep.subr.bf16.mxu0 0
        %2024 = vmatpush1.bf16.msra.mxu0 0
        %2025 = vmatprep.subr.bf16.mxu0 0
        %2026 = vmatpush1.bf16.msra.mxu0 0
        %2027 = vmatprep.subr.bf16.mxu0 0
        %2028 = vmatpush1.bf16.msra.mxu0 0
        %2029 = vmatprep.subr.bf16.mxu0 0
        %2030 = vmatpush1.bf16.msra.mxu0 0
        %2031 = vmatprep.mubr.bf16.mxu0 0
        %2032 = vmatmul.mubr.bf16.gmra.mrb[0].mxu0 %v1933
        %v2033 = vpop.f32.mrb[0].mxu0
        %v2034 = vadd.f32 0.0, %v2033
        %v2035 = vpop.f32.mrb[0].mxu0
        %v2036 = vpop.f32.mrb[0].mxu0
        %v2037 = vadd.f32 0.0, %v2036
        %v2038 = vpop.f32.mrb[0].mxu0
        %2039 = vmatprep.mubr.bf16.mxu0 0
        %2040 = vmatmul.mubr.bf16.gmra.mrb[0].mxu0 %v1934
        %v2041 = vpop.f32.mrb[0].mxu0
        %v2042 = vadd.f32 0.0, %v2041
        %v2043 = vpop.f32.mrb[0].mxu0
        %v2044 = vpop.f32.mrb[0].mxu0
        %v2045 = vadd.f32 0.0, %v2044
        %v2046 = vpop.f32.mrb[0].mxu0
        %2047 = vmatprep.mubr.bf16.mxu0 0
        %2048 = vmatmul.mubr.bf16.gmra.mrb[0].mxu0 %v1935
        %v2049 = vpop.f32.mrb[0].mxu0
        %v2050 = vadd.f32 0.0, %v2049
        %v2051 = vpop.f32.mrb[0].mxu0
        %v2052 = vpop.f32.mrb[0].mxu0
        %v2053 = vadd.f32 0.0, %v2052
        %v2054 = vpop.f32.mrb[0].mxu0
        %2055 = vmatprep.mubr.bf16.mxu0 0
        %2056 = vmatmul.mubr.bf16.gmra.mrb[0].mxu0 %v1936
        %v2057 = vpop.f32.mrb[0].mxu0
        %v2058 = vadd.f32 0.0, %v2057
        %v2059 = vpop.f32.mrb[0].mxu0
        %v2060 = vpop.f32.mrb[0].mxu0
        %v2061 = vadd.f32 0.0, %v2060
        %v2062 = vpop.f32.mrb[0].mxu0
        %2063 = vmatprep.mubr.bf16.mxu0 0
        %2064 = vmatmul.mubr.bf16.gmra.mrb[0].mxu0 %v1937
        %v2065 = vpop.f32.mrb[0].mxu0
        %v2066 = vadd.f32 0.0, %v2065
        %v2067 = vpop.f32.mrb[0].mxu0
        %v2068 = vpop.f32.mrb[0].mxu0
        %v2069 = vadd.f32 0.0, %v2068
        %v2070 = vpop.f32.mrb[0].mxu0
        %2071 = vmatprep.mubr.bf16.mxu0 0
        %2072 = vmatmul.mubr.bf16.gmra.mrb[0].mxu0 %v1938
        %v2073 = vpop.f32.mrb[0].mxu0
        %v2074 = vadd.f32 0.0, %v2073
        %v2075 = vpop.f32.mrb[0].mxu0
        %v2076 = vpop.f32.mrb[0].mxu0
        %v2077 = vadd.f32 0.0, %v2076
        %v2078 = vpop.f32.mrb[0].mxu0
        %2079 = vmatprep.mubr.bf16.mxu0 0
        %2080 = vmatmul.mubr.bf16.gmra.mrb[0].mxu0 %v1939
        %v2081 = vpop.f32.mrb[0].mxu0
        %v2082 = vadd.f32 0.0, %v2081
        %v2083 = vpop.f32.mrb[0].mxu0
        %v2084 = vpop.f32.mrb[0].mxu0
        %v2085 = vadd.f32 0.0, %v2084
        %v2086 = vpop.f32.mrb[0].mxu0
        %2087 = vmatprep.mubr.bf16.mxu0 0
        %2088 = vmatmul.mubr.bf16.gmra.mrb[0].mxu0 %v1940
        %v2089 = vpop.f32.mrb[0].mxu0
        %v2090 = vadd.f32 0.0, %v2089
        %v2091 = vpop.f32.mrb[0].mxu0
        %v2092 = vpop.f32.mrb[0].mxu0
        %v2093 = vadd.f32 0.0, %v2092
        %v2094 = vpop.f32.mrb[0].mxu0
        %2095 = vmatprep.mubr.bf16.mxu0 0
        %2096 = vmatmul.mubr.bf16.gmra.mrb[0].mxu0 %v1941
        %v2097 = vpop.f32.mrb[0].mxu0
        %v2098 = vadd.f32 0.0, %v2097
        %v2099 = vpop.f32.mrb[0].mxu0
        %v2100 = vpop.f32.mrb[0].mxu0
        %v2101 = vadd.f32 0.0, %v2100
        %v2102 = vpop.f32.mrb[0].mxu0
        %2103 = vdwg.mxu0
        %v2122 = vunpack.c.l.b16 %v1636
        %v2123 = vunpack.c.l.b16 %v1637
        %v2124 = vunpack.c.l.b16 %v1638
        %v2125 = vunpack.c.l.b16 %v1639
        %v2126 = vunpack.c.l.b16 %v1640
        %v2127 = vunpack.c.l.b16 %v1641
        %v2128 = vunpack.c.l.b16 %v1642
        %v2129 = vunpack.c.l.b16 %v1643
        %v2130 = vunpack.c.l.b16 %v1644
        %v2131 = vunpack.c.l.b16 %v1645
        %v2132 = vunpack.c.l.b16 %v1646
        %v2133 = vunpack.c.l.b16 %v1647
        %v2134 = vunpack.c.l.b16 %v1648
        %v2135 = vunpack.c.l.b16 %v1649
        %v2136 = vunpack.c.l.b16 %v1650
        %v2137 = vunpack.c.l.b16 %v1651
        %v2138 = vunpack.c.l.b16 %v1652
        %v2139 = vunpack.c.l.b16 %v1653
        %v2140 = vpack.c.b16 %v2123, %v2122
        %v2141 = vpack.c.b16 %v2125, %v2124
        %v2142 = vpack.c.b16 %v2127, %v2126
        %v2143 = vpack.c.b16 %v2129, %v2128
        %v2144 = vpack.c.b16 %v2131, %v2130
        %v2145 = vpack.c.b16 %v2133, %v2132
        %v2146 = vpack.c.b16 %v2135, %v2134
        %v2147 = vpack.c.b16 %v2137, %v2136
        %v2148 = vpack.c.b16 %v2139, %v2138
        %v2174 = vunpack.c.l.b16 %v1654
        %v2175 = vunpack.c.l.b16 %v1655
        %v2176 = vunpack.c.l.b16 %v1656
        %v2177 = vunpack.c.l.b16 %v1657
        %v2178 = vunpack.c.l.b16 %v1658
        %v2179 = vunpack.c.l.b16 %v1659
        %v2180 = vunpack.c.l.b16 %v1660
        %v2181 = vunpack.c.l.b16 %v1661
        %v2182 = vunpack.c.l.b16 %v1662
        %v2183 = vunpack.c.l.b16 %v1663
        %v2184 = vunpack.c.l.b16 %v1664
        %v2185 = vunpack.c.l.b16 %v1665
        %v2186 = vunpack.c.l.b16 %v1666
        %v2187 = vunpack.c.l.b16 %v1667
        %v2188 = vunpack.c.l.b16 %v1668
        %v2189 = vunpack.c.l.b16 %v1669
        %v2190 = vpack.c.b16 %v2175, %v2174
        %v2191 = vpack.c.b16 %v2177, %v2176
        %v2192 = vpack.c.b16 %v2179, %v2178
        %v2193 = vpack.c.b16 %v2181, %v2180
        %v2194 = vpack.c.b16 %v2183, %v2182
        %v2195 = vpack.c.b16 %v2185, %v2184
        %v2196 = vpack.c.b16 %v2187, %v2186
        %v2197 = vpack.c.b16 %v2189, %v2188
        %2206 = vmatprep.subr.bf16.mxu0 0
        %2207 = vmatpush1.bf16.msra.mxu0 %v2190
        %2208 = vmatprep.subr.bf16.mxu0 0
        %2209 = vmatpush1.bf16.msra.mxu0 %v2191
        %2210 = vmatprep.subr.bf16.mxu0 0
        %2211 = vmatpush1.bf16.msra.mxu0 %v2192
        %2212 = vmatprep.subr.bf16.mxu0 0
        %2213 = vmatpush1.bf16.msra.mxu0 %v2193
        %2214 = vmatprep.subr.bf16.mxu0 0
        %2215 = vmatpush1.bf16.msra.mxu0 %v2194
        %2216 = vmatprep.subr.bf16.mxu0 0
        %2217 = vmatpush1.bf16.msra.mxu0 %v2195
        %2218 = vmatprep.subr.bf16.mxu0 0
        %2219 = vmatpush1.bf16.msra.mxu0 %v2196
        %2220 = vmatprep.subr.bf16.mxu0 0
        %2221 = vmatpush1.bf16.msra.mxu0 %v2197
        %2222 = vmatprep.subr.bf16.mxu0 0
        %2223 = vmatpush1.bf16.msra.mxu0 0
        %2224 = vmatprep.subr.bf16.mxu0 0
        %2225 = vmatpush1.bf16.msra.mxu0 0
        %2226 = vmatprep.subr.bf16.mxu0 0
        %2227 = vmatpush1.bf16.msra.mxu0 0
        %2228 = vmatprep.subr.bf16.mxu0 0
        %2229 = vmatpush1.bf16.msra.mxu0 0
        %2230 = vmatprep.subr.bf16.mxu0 0
        %2231 = vmatpush1.bf16.msra.mxu0 0
        %2232 = vmatprep.subr.bf16.mxu0 0
        %2233 = vmatpush1.bf16.msra.mxu0 0
        %2234 = vmatprep.subr.bf16.mxu0 0
        %2235 = vmatpush1.bf16.msra.mxu0 0
        %2236 = vmatprep.subr.bf16.mxu0 0
        %2237 = vmatpush1.bf16.msra.mxu0 0
        %2238 = vmatprep.mubr.bf16.mxu0 0
        %2239 = vmatmul.mubr.bf16.gmra.mrb[0].mxu0 %v2140
        %v2240 = vpop.f32.mrb[0].mxu0
        %v2241 = vadd.f32 %v2034, %v2240
        %v2242 = vpop.f32.mrb[0].mxu0
        %v2243 = vpop.f32.mrb[0].mxu0
        %v2244 = vadd.f32 %v2037, %v2243
        %v2245 = vpop.f32.mrb[0].mxu0
        %2246 = vmatprep.mubr.bf16.mxu0 0
        %2247 = vmatmul.mubr.bf16.gmra.mrb[0].mxu0 %v2141
        %v2248 = vpop.f32.mrb[0].mxu0
        %v2249 = vadd.f32 %v2042, %v2248
        %v2250 = vpop.f32.mrb[0].mxu0
        %v2251 = vpop.f32.mrb[0].mxu0
        %v2252 = vadd.f32 %v2045, %v2251
        %v2253 = vpop.f32.mrb[0].mxu0
        %2254 = vmatprep.mubr.bf16.mxu0 0
        %2255 = vmatmul.mubr.bf16.gmra.mrb[0].mxu0 %v2142
        %v2256 = vpop.f32.mrb[0].mxu0
        %v2257 = vadd.f32 %v2050, %v2256
        %v2258 = vpop.f32.mrb[0].mxu0
        %v2259 = vpop.f32.mrb[0].mxu0
        %v2260 = vadd.f32 %v2053, %v2259
        %v2261 = vpop.f32.mrb[0].mxu0
        %2262 = vmatprep.mubr.bf16.mxu0 0
        %2263 = vmatmul.mubr.bf16.gmra.mrb[0].mxu0 %v2143
        %v2264 = vpop.f32.mrb[0].mxu0
        %v2265 = vadd.f32 %v2058, %v2264
        %v2266 = vpop.f32.mrb[0].mxu0
        %v2267 = vpop.f32.mrb[0].mxu0
        %v2268 = vadd.f32 %v2061, %v2267
        %v2269 = vpop.f32.mrb[0].mxu0
        %2270 = vmatprep.mubr.bf16.mxu0 0
        %2271 = vmatmul.mubr.bf16.gmra.mrb[0].mxu0 %v2144
        %v2272 = vpop.f32.mrb[0].mxu0
        %v2273 = vadd.f32 %v2066, %v2272
        %v2274 = vpop.f32.mrb[0].mxu0
        %v2275 = vpop.f32.mrb[0].mxu0
        %v2276 = vadd.f32 %v2069, %v2275
        %v2277 = vpop.f32.mrb[0].mxu0
        %2278 = vmatprep.mubr.bf16.mxu0 0
        %2279 = vmatmul.mubr.bf16.gmra.mrb[0].mxu0 %v2145
        %v2280 = vpop.f32.mrb[0].mxu0
        %v2281 = vadd.f32 %v2074, %v2280
        %v2282 = vpop.f32.mrb[0].mxu0
        %v2283 = vpop.f32.mrb[0].mxu0
        %v2284 = vadd.f32 %v2077, %v2283
        %v2285 = vpop.f32.mrb[0].mxu0
        %2286 = vmatprep.mubr.bf16.mxu0 0
        %2287 = vmatmul.mubr.bf16.gmra.mrb[0].mxu0 %v2146
        %v2288 = vpop.f32.mrb[0].mxu0
        %v2289 = vadd.f32 %v2082, %v2288
        %v2290 = vpop.f32.mrb[0].mxu0
        %v2291 = vpop.f32.mrb[0].mxu0
        %v2292 = vadd.f32 %v2085, %v2291
        %v2293 = vpop.f32.mrb[0].mxu0
        %2294 = vmatprep.mubr.bf16.mxu0 0
        %2295 = vmatmul.mubr.bf16.gmra.mrb[0].mxu0 %v2147
        %v2296 = vpop.f32.mrb[0].mxu0
        %v2297 = vadd.f32 %v2090, %v2296
        %v2298 = vpop.f32.mrb[0].mxu0
        %v2299 = vpop.f32.mrb[0].mxu0
        %v2300 = vadd.f32 %v2093, %v2299
        %v2301 = vpop.f32.mrb[0].mxu0
        %2302 = vmatprep.mubr.bf16.mxu0 0
        %2303 = vmatmul.mubr.bf16.gmra.mrb[0].mxu0 %v2148
        %v2304 = vpop.f32.mrb[0].mxu0
        %v2305 = vadd.f32 %v2098, %v2304
        %v2306 = vpop.f32.mrb[0].mxu0
        %v2307 = vpop.f32.mrb[0].mxu0
        %v2308 = vadd.f32 %v2101, %v2307
        %v2309 = vpop.f32.mrb[0].mxu0
        %2310 = vdwg.mxu0
        %v2311 = vld [vmem:[%s1530] sm:$0xf]
        %v2312 = vld [vmem:[%s1530 + $0x4] sm:$0xf]
        %v2313 = vld [vmem:[%s1530 + $0xc] sm:$0xf]
        %v2314 = vld [vmem:[%s1530 + $0x10] sm:$0xf]
        %v2315 = vld [vmem:[%s1530 + $0x18] sm:$0xf]
        %v2316 = vld [vmem:[%s1530 + $0x1c] sm:$0xf]
        %v2317 = vld [vmem:[%s1530 + $0x24] sm:$0xf]
        %v2318 = vld [vmem:[%s1530 + $0x28] sm:$0xf]
        %v2319 = vld [vmem:[%s1530 + $0x30] sm:$0xf]
        %v2320 = vld [vmem:[%s1530 + $0x34] sm:$0xf]
        %v2321 = vld [vmem:[%s1530 + $0x3c] sm:$0xf]
        %v2322 = vld [vmem:[%s1530 + $0x40] sm:$0xf]
        %v2323 = vld [vmem:[%s1530 + $0x48] sm:$0xf]
        %v2324 = vld [vmem:[%s1530 + $0x4c] sm:$0xf]
        %v2325 = vld [vmem:[%s1530 + $0x54] sm:$0xf]
        %v2326 = vld [vmem:[%s1530 + $0x58] sm:$0xf]
        %v2327 = vld [vmem:[%s1530 + $0x60] sm:$0xf]
        %v2328 = vld [vmem:[%s1530 + $0x64] sm:$0xf]
        %s2329 = scalar_lea.vmem [#allocation6], 128
        %v2330 = vld [vmem:[%s2329] sm:$0xf]
        %v2331 = vld [vmem:[%s2329 + $0x4] sm:$0xf]
        %v2332 = vld [vmem:[%s2329 + $0x8] sm:$0xf]
        %v2333 = vld [vmem:[%s2329 + $0xc] sm:$0xf]
        %v2334 = vld [vmem:[%s2329 + $0x10] sm:$0xf]
        %v2335 = vld [vmem:[%s2329 + $0x14] sm:$0xf]
        %v2336 = vld [vmem:[%s2329 + $0x18] sm:$0xf]
        %v2337 = vld [vmem:[%s2329 + $0x1c] sm:$0xf]
        %v2338 = vld [vmem:[%s2329 + $0x20] sm:$0xf]
        %v2339 = vld [vmem:[%s2329 + $0x24] sm:$0xf]
        %v2340 = vld [vmem:[%s2329 + $0x28] sm:$0xf]
        %v2341 = vld [vmem:[%s2329 + $0x2c] sm:$0xf]
        %v2342 = vld [vmem:[%s2329 + $0x30] sm:$0xf]
        %v2343 = vld [vmem:[%s2329 + $0x34] sm:$0xf]
        %v2344 = vld [vmem:[%s2329 + $0x38] sm:$0xf]
        %v2345 = vld [vmem:[%s2329 + $0x3c] sm:$0xf]
        %v2364 = vunpack.c.l.b16 %v2311
        %v2365 = vunpack.c.l.b16 %v2312
        %v2366 = vunpack.c.l.b16 %v2313
        %v2367 = vunpack.c.l.b16 %v2314
        %v2368 = vunpack.c.l.b16 %v2315
        %v2369 = vunpack.c.l.b16 %v2316
        %v2370 = vunpack.c.l.b16 %v2317
        %v2371 = vunpack.c.l.b16 %v2318
        %v2372 = vunpack.c.l.b16 %v2319
        %v2373 = vunpack.c.l.b16 %v2320
        %v2374 = vunpack.c.l.b16 %v2321
        %v2375 = vunpack.c.l.b16 %v2322
        %v2376 = vunpack.c.l.b16 %v2323
        %v2377 = vunpack.c.l.b16 %v2324
        %v2378 = vunpack.c.l.b16 %v2325
        %v2379 = vunpack.c.l.b16 %v2326
        %v2380 = vunpack.c.l.b16 %v2327
        %v2381 = vunpack.c.l.b16 %v2328
        %v2382 = vpack.c.b16 %v2365, %v2364
        %v2383 = vpack.c.b16 %v2367, %v2366
        %v2384 = vpack.c.b16 %v2369, %v2368
        %v2385 = vpack.c.b16 %v2371, %v2370
        %v2386 = vpack.c.b16 %v2373, %v2372
        %v2387 = vpack.c.b16 %v2375, %v2374
        %v2388 = vpack.c.b16 %v2377, %v2376
        %v2389 = vpack.c.b16 %v2379, %v2378
        %v2390 = vpack.c.b16 %v2381, %v2380
        %v2416 = vunpack.c.l.b16 %v2330
        %v2417 = vunpack.c.l.b16 %v2331
        %v2418 = vunpack.c.l.b16 %v2332
        %v2419 = vunpack.c.l.b16 %v2333
        %v2420 = vunpack.c.l.b16 %v2334
        %v2421 = vunpack.c.l.b16 %v2335
        %v2422 = vunpack.c.l.b16 %v2336
        %v2423 = vunpack.c.l.b16 %v2337
        %v2424 = vunpack.c.l.b16 %v2338
        %v2425 = vunpack.c.l.b16 %v2339
        %v2426 = vunpack.c.l.b16 %v2340
        %v2427 = vunpack.c.l.b16 %v2341
        %v2428 = vunpack.c.l.b16 %v2342
        %v2429 = vunpack.c.l.b16 %v2343
        %v2430 = vunpack.c.l.b16 %v2344
        %v2431 = vunpack.c.l.b16 %v2345
        %v2432 = vpack.c.b16 %v2417, %v2416
        %v2433 = vpack.c.b16 %v2419, %v2418
        %v2434 = vpack.c.b16 %v2421, %v2420
        %v2435 = vpack.c.b16 %v2423, %v2422
        %v2436 = vpack.c.b16 %v2425, %v2424
        %v2437 = vpack.c.b16 %v2427, %v2426
        %v2438 = vpack.c.b16 %v2429, %v2428
        %v2439 = vpack.c.b16 %v2431, %v2430
        %2448 = vmatprep.subr.bf16.mxu0 0
        %2449 = vmatpush1.bf16.msra.mxu0 %v2432
        %2450 = vmatprep.subr.bf16.mxu0 0
        %2451 = vmatpush1.bf16.msra.mxu0 %v2433
        %2452 = vmatprep.subr.bf16.mxu0 0
        %2453 = vmatpush1.bf16.msra.mxu0 %v2434
        %2454 = vmatprep.subr.bf16.mxu0 0
        %2455 = vmatpush1.bf16.msra.mxu0 %v2435
        %2456 = vmatprep.subr.bf16.mxu0 0
        %2457 = vmatpush1.bf16.msra.mxu0 %v2436
        %2458 = vmatprep.subr.bf16.mxu0 0
        %2459 = vmatpush1.bf16.msra.mxu0 %v2437
        %2460 = vmatprep.subr.bf16.mxu0 0
        %2461 = vmatpush1.bf16.msra.mxu0 %v2438
        %2462 = vmatprep.subr.bf16.mxu0 0
        %2463 = vmatpush1.bf16.msra.mxu0 %v2439
        %2464 = vmatprep.subr.bf16.mxu0 0
        %2465 = vmatpush1.bf16.msra.mxu0 0
        %2466 = vmatprep.subr.bf16.mxu0 0
        %2467 = vmatpush1.bf16.msra.mxu0 0
        %2468 = vmatprep.subr.bf16.mxu0 0
        %2469 = vmatpush1.bf16.msra.mxu0 0
        %2470 = vmatprep.subr.bf16.mxu0 0
        %2471 = vmatpush1.bf16.msra.mxu0 0
        %2472 = vmatprep.subr.bf16.mxu0 0
        %2473 = vmatpush1.bf16.msra.mxu0 0
        %2474 = vmatprep.subr.bf16.mxu0 0
        %2475 = vmatpush1.bf16.msra.mxu0 0
        %2476 = vmatprep.subr.bf16.mxu0 0
        %2477 = vmatpush1.bf16.msra.mxu0 0
        %2478 = vmatprep.subr.bf16.mxu0 0
        %2479 = vmatpush1.bf16.msra.mxu0 0
        %2480 = vmatprep.mubr.bf16.mxu0 0
        %2481 = vmatmul.mubr.bf16.gmra.mrb[0].mxu0 %v2382
        %v2482 = vpop.f32.mrb[0].mxu0
        %v2483 = vadd.f32 0.0, %v2482
        %v2484 = vpop.f32.mrb[0].mxu0
        %v2485 = vpop.f32.mrb[0].mxu0
        %v2486 = vadd.f32 0.0, %v2485
        %v2487 = vpop.f32.mrb[0].mxu0
        %2488 = vmatprep.mubr.bf16.mxu0 0
        %2489 = vmatmul.mubr.bf16.gmra.mrb[0].mxu0 %v2383
        %v2490 = vpop.f32.mrb[0].mxu0
        %v2491 = vadd.f32 0.0, %v2490
        %v2492 = vpop.f32.mrb[0].mxu0
        %v2493 = vpop.f32.mrb[0].mxu0
        %v2494 = vadd.f32 0.0, %v2493
        %v2495 = vpop.f32.mrb[0].mxu0
        %2496 = vmatprep.mubr.bf16.mxu0 0
        %2497 = vmatmul.mubr.bf16.gmra.mrb[0].mxu0 %v2384
        %v2498 = vpop.f32.mrb[0].mxu0
        %v2499 = vadd.f32 0.0, %v2498
        %v2500 = vpop.f32.mrb[0].mxu0
        %v2501 = vpop.f32.mrb[0].mxu0
        %v2502 = vadd.f32 0.0, %v2501
        %v2503 = vpop.f32.mrb[0].mxu0
        %2504 = vmatprep.mubr.bf16.mxu0 0
        %2505 = vmatmul.mubr.bf16.gmra.mrb[0].mxu0 %v2385
        %v2506 = vpop.f32.mrb[0].mxu0
        %v2507 = vadd.f32 0.0, %v2506
        %v2508 = vpop.f32.mrb[0].mxu0
        %v2509 = vpop.f32.mrb[0].mxu0
        %v2510 = vadd.f32 0.0, %v2509
        %v2511 = vpop.f32.mrb[0].mxu0
        %2512 = vmatprep.mubr.bf16.mxu0 0
        %2513 = vmatmul.mubr.bf16.gmra.mrb[0].mxu0 %v2386
        %v2514 = vpop.f32.mrb[0].mxu0
        %v2515 = vadd.f32 0.0, %v2514
        %v2516 = vpop.f32.mrb[0].mxu0
        %v2517 = vpop.f32.mrb[0].mxu0
        %v2518 = vadd.f32 0.0, %v2517
        %v2519 = vpop.f32.mrb[0].mxu0
        %2520 = vmatprep.mubr.bf16.mxu0 0
        %2521 = vmatmul.mubr.bf16.gmra.mrb[0].mxu0 %v2387
        %v2522 = vpop.f32.mrb[0].mxu0
        %v2523 = vadd.f32 0.0, %v2522
        %v2524 = vpop.f32.mrb[0].mxu0
        %v2525 = vpop.f32.mrb[0].mxu0
        %v2526 = vadd.f32 0.0, %v2525
        %v2527 = vpop.f32.mrb[0].mxu0
        %2528 = vmatprep.mubr.bf16.mxu0 0
        %2529 = vmatmul.mubr.bf16.gmra.mrb[0].mxu0 %v2388
        %v2530 = vpop.f32.mrb[0].mxu0
        %v2531 = vadd.f32 0.0, %v2530
        %v2532 = vpop.f32.mrb[0].mxu0
        %v2533 = vpop.f32.mrb[0].mxu0
        %v2534 = vadd.f32 0.0, %v2533
        %v2535 = vpop.f32.mrb[0].mxu0
        %2536 = vmatprep.mubr.bf16.mxu0 0
        %2537 = vmatmul.mubr.bf16.gmra.mrb[0].mxu0 %v2389
        %v2538 = vpop.f32.mrb[0].mxu0
        %v2539 = vadd.f32 0.0, %v2538
        %v2540 = vpop.f32.mrb[0].mxu0
        %v2541 = vpop.f32.mrb[0].mxu0
        %v2542 = vadd.f32 0.0, %v2541
        %v2543 = vpop.f32.mrb[0].mxu0
        %2544 = vmatprep.mubr.bf16.mxu0 0
        %2545 = vmatmul.mubr.bf16.gmra.mrb[0].mxu0 %v2390
        %v2546 = vpop.f32.mrb[0].mxu0
        %v2547 = vadd.f32 0.0, %v2546
        %v2548 = vpop.f32.mrb[0].mxu0
        %v2549 = vpop.f32.mrb[0].mxu0
        %v2550 = vadd.f32 0.0, %v2549
        %v2551 = vpop.f32.mrb[0].mxu0
        %2552 = vdwg.mxu0
        %v2553 = vadd.f32 %v2241, %v2483
        %v2554 = vadd.f32 %v2244, %v2486
        %v2555 = vadd.f32 %v2249, %v2491
        %v2556 = vadd.f32 %v2252, %v2494
        %v2557 = vadd.f32 %v2257, %v2499
        %v2558 = vadd.f32 %v2260, %v2502
        %v2559 = vadd.f32 %v2265, %v2507
        %v2560 = vadd.f32 %v2268, %v2510
        %v2561 = vadd.f32 %v2273, %v2515
        %v2562 = vadd.f32 %v2276, %v2518
        %v2563 = vadd.f32 %v2281, %v2523
        %v2564 = vadd.f32 %v2284, %v2526
        %v2565 = vadd.f32 %v2289, %v2531
        %v2566 = vadd.f32 %v2292, %v2534
        %v2567 = vadd.f32 %v2297, %v2539
        %v2568 = vadd.f32 %v2300, %v2542
        %v2569 = vadd.f32 %v2305, %v2547
        %v2570 = vadd.f32 %v2308, %v2550
        %v2571 = vld [vmem:[%s1530] sm:$0xf]
        %v2572 = vld [vmem:[%s1530 + $0x4] sm:$0xf]
        %v2573 = vld [vmem:[%s1530 + $0x8] sm:$0x1]
        %v2574 = vld [vmem:[%s1530 + $0xc] sm:$0xf]
        %v2575 = vld [vmem:[%s1530 + $0x10] sm:$0xf]
        %v2576 = vld [vmem:[%s1530 + $0x14] sm:$0x1]
        %v2577 = vld [vmem:[%s1530 + $0x18] sm:$0xf]
        %v2578 = vld [vmem:[%s1530 + $0x1c] sm:$0xf]
        %v2579 = vld [vmem:[%s1530 + $0x20] sm:$0x1]
        %v2580 = vld [vmem:[%s1530 + $0x24] sm:$0xf]
        %v2581 = vld [vmem:[%s1530 + $0x28] sm:$0xf]
        %v2582 = vld [vmem:[%s1530 + $0x2c] sm:$0x1]
        %v2583 = vld [vmem:[%s1530 + $0x30] sm:$0xf]
        %v2584 = vld [vmem:[%s1530 + $0x34] sm:$0xf]
        %v2585 = vld [vmem:[%s1530 + $0x38] sm:$0x1]
        %v2586 = vld [vmem:[%s1530 + $0x3c] sm:$0xf]
        %v2587 = vld [vmem:[%s1530 + $0x40] sm:$0xf]
        %v2588 = vld [vmem:[%s1530 + $0x44] sm:$0x1]
        %v2589 = vld [vmem:[%s1530 + $0x48] sm:$0xf]
        %v2590 = vld [vmem:[%s1530 + $0x4c] sm:$0xf]
        %v2591 = vld [vmem:[%s1530 + $0x50] sm:$0x1]
        %v2592 = vld [vmem:[%s1530 + $0x54] sm:$0xf]
        %v2593 = vld [vmem:[%s1530 + $0x58] sm:$0xf]
        %v2594 = vld [vmem:[%s1530 + $0x5c] sm:$0x1]
        %v2595 = vld [vmem:[%s1530 + $0x60] sm:$0xf]
        %v2596 = vld [vmem:[%s1530 + $0x64] sm:$0xf]
        %v2597 = vld [vmem:[%s1530 + $0x68] sm:$0x1]
        %v2599 = vshrl.u32 %v2571, 16
        %v2601 = vrot.slane %v2599, 4
        %v2602 = vshll.u32 %v2571, 16
        %v2604 = vrot.slane %v2602, 5
        %v2605 = vor.u32 %v2601, %v2604
        %v2606 = vrot.slane %v2605, 4
        %v2608 = vshll.u32 %v2572, 16
        %v2610 = vrot.slane %v2608, 5
        %v2611 = vsel %vm1681, %v2606, %v2610
        %v2612 = vshrl.u32 %v2572, 16
        %v2614 = vrot.slane %v2612, 4
        %v2615 = vor.u32 %v2614, %v2610
        %v2616 = vrot.slane %v2615, 4
        %v2618 = vshll.u32 %v2573, 16
        %v2620 = vrot.slane %v2618, 5
        %v2621 = vsel %vm1681, %v2616, %v2620
        %v2623 = vshrl.u32 %v2574, 16
        %v2625 = vrot.slane %v2623, 4
        %v2626 = vshll.u32 %v2574, 16
        %v2628 = vrot.slane %v2626, 5
        %v2629 = vor.u32 %v2625, %v2628
        %v2630 = vrot.slane %v2629, 4
        %v2632 = vshll.u32 %v2575, 16
        %v2634 = vrot.slane %v2632, 5
        %v2635 = vsel %vm1681, %v2630, %v2634
        %v2636 = vshrl.u32 %v2575, 16
        %v2638 = vrot.slane %v2636, 4
        %v2639 = vor.u32 %v2638, %v2634
        %v2640 = vrot.slane %v2639, 4
        %v2642 = vshll.u32 %v2576, 16
        %v2644 = vrot.slane %v2642, 5
        %v2645 = vsel %vm1681, %v2640, %v2644
        %v2647 = vshrl.u32 %v2577, 16
        %v2649 = vrot.slane %v2647, 4
        %v2650 = vshll.u32 %v2577, 16
        %v2652 = vrot.slane %v2650, 5
        %v2653 = vor.u32 %v2649, %v2652
        %v2654 = vrot.slane %v2653, 4
        %v2656 = vshll.u32 %v2578, 16
        %v2658 = vrot.slane %v2656, 5
        %v2659 = vsel %vm1681, %v2654, %v2658
        %v2660 = vshrl.u32 %v2578, 16
        %v2662 = vrot.slane %v2660, 4
        %v2663 = vor.u32 %v2662, %v2658
        %v2664 = vrot.slane %v2663, 4
        %v2666 = vshll.u32 %v2579, 16
        %v2668 = vrot.slane %v2666, 5
        %v2669 = vsel %vm1681, %v2664, %v2668
        %v2671 = vshrl.u32 %v2580, 16
        %v2673 = vrot.slane %v2671, 4
        %v2674 = vshll.u32 %v2580, 16
        %v2676 = vrot.slane %v2674, 5
        %v2677 = vor.u32 %v2673, %v2676
        %v2678 = vrot.slane %v2677, 4
        %v2680 = vshll.u32 %v2581, 16
        %v2682 = vrot.slane %v2680, 5
        %v2683 = vsel %vm1681, %v2678, %v2682
        %v2684 = vshrl.u32 %v2581, 16
        %v2686 = vrot.slane %v2684, 4
        %v2687 = vor.u32 %v2686, %v2682
        %v2688 = vrot.slane %v2687, 4
        %v2690 = vshll.u32 %v2582, 16
        %v2692 = vrot.slane %v2690, 5
        %v2693 = vsel %vm1681, %v2688, %v2692
        %v2695 = vshrl.u32 %v2583, 16
        %v2697 = vrot.slane %v2695, 4
        %v2698 = vshll.u32 %v2583, 16
        %v2700 = vrot.slane %v2698, 5
        %v2701 = vor.u32 %v2697, %v2700
        %v2702 = vrot.slane %v2701, 4
        %v2704 = vshll.u32 %v2584, 16
        %v2706 = vrot.slane %v2704, 5
        %v2707 = vsel %vm1681, %v2702, %v2706
        %v2708 = vshrl.u32 %v2584, 16
        %v2710 = vrot.slane %v2708, 4
        %v2711 = vor.u32 %v2710, %v2706
        %v2712 = vrot.slane %v2711, 4
        %v2714 = vshll.u32 %v2585, 16
        %v2716 = vrot.slane %v2714, 5
        %v2717 = vsel %vm1681, %v2712, %v2716
        %v2719 = vshrl.u32 %v2586, 16
        %v2721 = vrot.slane %v2719, 4
        %v2722 = vshll.u32 %v2586, 16
        %v2724 = vrot.slane %v2722, 5
        %v2725 = vor.u32 %v2721, %v2724
        %v2726 = vrot.slane %v2725, 4
        %v2728 = vshll.u32 %v2587, 16
        %v2730 = vrot.slane %v2728, 5
        %v2731 = vsel %vm1681, %v2726, %v2730
        %v2732 = vshrl.u32 %v2587, 16
        %v2734 = vrot.slane %v2732, 4
        %v2735 = vor.u32 %v2734, %v2730
        %v2736 = vrot.slane %v2735, 4
        %v2738 = vshll.u32 %v2588, 16
        %v2740 = vrot.slane %v2738, 5
        %v2741 = vsel %vm1681, %v2736, %v2740
        %v2743 = vshrl.u32 %v2589, 16
        %v2745 = vrot.slane %v2743, 4
        %v2746 = vshll.u32 %v2589, 16
        %v2748 = vrot.slane %v2746, 5
        %v2749 = vor.u32 %v2745, %v2748
        %v2750 = vrot.slane %v2749, 4
        %v2752 = vshll.u32 %v2590, 16
        %v2754 = vrot.slane %v2752, 5
        %v2755 = vsel %vm1681, %v2750, %v2754
        %v2756 = vshrl.u32 %v2590, 16
        %v2758 = vrot.slane %v2756, 4
        %v2759 = vor.u32 %v2758, %v2754
        %v2760 = vrot.slane %v2759, 4
        %v2762 = vshll.u32 %v2591, 16
        %v2764 = vrot.slane %v2762, 5
        %v2765 = vsel %vm1681, %v2760, %v2764
        %v2767 = vshrl.u32 %v2592, 16
        %v2769 = vrot.slane %v2767, 4
        %v2770 = vshll.u32 %v2592, 16
        %v2772 = vrot.slane %v2770, 5
        %v2773 = vor.u32 %v2769, %v2772
        %v2774 = vrot.slane %v2773, 4
        %v2776 = vshll.u32 %v2593, 16
        %v2778 = vrot.slane %v2776, 5
        %v2779 = vsel %vm1681, %v2774, %v2778
        %v2780 = vshrl.u32 %v2593, 16
        %v2782 = vrot.slane %v2780, 4
        %v2783 = vor.u32 %v2782, %v2778
        %v2784 = vrot.slane %v2783, 4
        %v2786 = vshll.u32 %v2594, 16
        %v2788 = vrot.slane %v2786, 5
        %v2789 = vsel %vm1681, %v2784, %v2788
        %v2791 = vshrl.u32 %v2595, 16
        %v2793 = vrot.slane %v2791, 4
        %v2794 = vshll.u32 %v2595, 16
        %v2796 = vrot.slane %v2794, 5
        %v2797 = vor.u32 %v2793, %v2796
        %v2798 = vrot.slane %v2797, 4
        %v2800 = vshll.u32 %v2596, 16
        %v2802 = vrot.slane %v2800, 5
        %v2803 = vsel %vm1681, %v2798, %v2802
        %v2804 = vshrl.u32 %v2596, 16
        %v2806 = vrot.slane %v2804, 4
        %v2807 = vor.u32 %v2806, %v2802
        %v2808 = vrot.slane %v2807, 4
        %v2810 = vshll.u32 %v2597, 16
        %v2812 = vrot.slane %v2810, 5
        %v2813 = vsel %vm1681, %v2808, %v2812
        %s2814 = scalar_lea.vmem [#allocation6], 192
        %v2815 = vld [vmem:[%s2814] sm:$0xf]
        %v2816 = vld [vmem:[%s2814 + $0x4] sm:$0xf]
        %v2817 = vld [vmem:[%s2814 + $0x8] sm:$0xf]
        %v2818 = vld [vmem:[%s2814 + $0xc] sm:$0xf]
        %v2819 = vld [vmem:[%s2814 + $0x10] sm:$0xf]
        %v2820 = vld [vmem:[%s2814 + $0x14] sm:$0xf]
        %v2821 = vld [vmem:[%s2814 + $0x18] sm:$0xf]
        %v2822 = vld [vmem:[%s2814 + $0x1c] sm:$0xf]
        %v2823 = vld [vmem:[%s2814 + $0x20] sm:$0xf]
        %v2824 = vld [vmem:[%s2814 + $0x24] sm:$0xf]
        %v2825 = vld [vmem:[%s2814 + $0x28] sm:$0xf]
        %v2826 = vld [vmem:[%s2814 + $0x2c] sm:$0xf]
        %v2827 = vld [vmem:[%s2814 + $0x30] sm:$0xf]
        %v2828 = vld [vmem:[%s2814 + $0x34] sm:$0xf]
        %v2829 = vld [vmem:[%s2814 + $0x38] sm:$0xf]
        %v2830 = vld [vmem:[%s2814 + $0x3c] sm:$0xf]
        %v2831 = vunpack.c.l.b16 %v2611
        %v2832 = vunpack.c.l.b16 %v2621
        %v2833 = vunpack.c.l.b16 %v2635
        %v2834 = vunpack.c.l.b16 %v2645
        %v2835 = vunpack.c.l.b16 %v2659
        %v2836 = vunpack.c.l.b16 %v2669
        %v2837 = vunpack.c.l.b16 %v2683
        %v2838 = vunpack.c.l.b16 %v2693
        %v2839 = vunpack.c.l.b16 %v2707
        %v2840 = vunpack.c.l.b16 %v2717
        %v2841 = vunpack.c.l.b16 %v2731
        %v2842 = vunpack.c.l.b16 %v2741
        %v2843 = vunpack.c.l.b16 %v2755
        %v2844 = vunpack.c.l.b16 %v2765
        %v2845 = vunpack.c.l.b16 %v2779
        %v2846 = vunpack.c.l.b16 %v2789
        %v2847 = vunpack.c.l.b16 %v2803
        %v2848 = vunpack.c.l.b16 %v2813
        %v2849 = vpack.c.b16 %v2832, %v2831
        %v2850 = vpack.c.b16 %v2834, %v2833
        %v2851 = vpack.c.b16 %v2836, %v2835
        %v2852 = vpack.c.b16 %v2838, %v2837
        %v2853 = vpack.c.b16 %v2840, %v2839
        %v2854 = vpack.c.b16 %v2842, %v2841
        %v2855 = vpack.c.b16 %v2844, %v2843
        %v2856 = vpack.c.b16 %v2846, %v2845
        %v2857 = vpack.c.b16 %v2848, %v2847
        %v2883 = vunpack.c.l.b16 %v2815
        %v2884 = vunpack.c.l.b16 %v2816
        %v2885 = vunpack.c.l.b16 %v2817
        %v2886 = vunpack.c.l.b16 %v2818
        %v2887 = vunpack.c.l.b16 %v2819
        %v2888 = vunpack.c.l.b16 %v2820
        %v2889 = vunpack.c.l.b16 %v2821
        %v2890 = vunpack.c.l.b16 %v2822
        %v2891 = vunpack.c.l.b16 %v2823
        %v2892 = vunpack.c.l.b16 %v2824
        %v2893 = vunpack.c.l.b16 %v2825
        %v2894 = vunpack.c.l.b16 %v2826
        %v2895 = vunpack.c.l.b16 %v2827
        %v2896 = vunpack.c.l.b16 %v2828
        %v2897 = vunpack.c.l.b16 %v2829
        %v2898 = vunpack.c.l.b16 %v2830
        %v2899 = vpack.c.b16 %v2884, %v2883
        %v2900 = vpack.c.b16 %v2886, %v2885
        %v2901 = vpack.c.b16 %v2888, %v2887
        %v2902 = vpack.c.b16 %v2890, %v2889
        %v2903 = vpack.c.b16 %v2892, %v2891
        %v2904 = vpack.c.b16 %v2894, %v2893
        %v2905 = vpack.c.b16 %v2896, %v2895
        %v2906 = vpack.c.b16 %v2898, %v2897
        %2915 = vmatprep.subr.bf16.mxu0 0
        %2916 = vmatpush1.bf16.msra.mxu0 %v2899
        %2917 = vmatprep.subr.bf16.mxu0 0
        %2918 = vmatpush1.bf16.msra.mxu0 %v2900
        %2919 = vmatprep.subr.bf16.mxu0 0
        %2920 = vmatpush1.bf16.msra.mxu0 %v2901
        %2921 = vmatprep.subr.bf16.mxu0 0
        %2922 = vmatpush1.bf16.msra.mxu0 %v2902
        %2923 = vmatprep.subr.bf16.mxu0 0
        %2924 = vmatpush1.bf16.msra.mxu0 %v2903
        %2925 = vmatprep.subr.bf16.mxu0 0
        %2926 = vmatpush1.bf16.msra.mxu0 %v2904
        %2927 = vmatprep.subr.bf16.mxu0 0
        %2928 = vmatpush1.bf16.msra.mxu0 %v2905
        %2929 = vmatprep.subr.bf16.mxu0 0
        %2930 = vmatpush1.bf16.msra.mxu0 %v2906
        %2931 = vmatprep.subr.bf16.mxu0 0
        %2932 = vmatpush1.bf16.msra.mxu0 0
        %2933 = vmatprep.subr.bf16.mxu0 0
        %2934 = vmatpush1.bf16.msra.mxu0 0
        %2935 = vmatprep.subr.bf16.mxu0 0
        %2936 = vmatpush1.bf16.msra.mxu0 0
        %2937 = vmatprep.subr.bf16.mxu0 0
        %2938 = vmatpush1.bf16.msra.mxu0 0
        %2939 = vmatprep.subr.bf16.mxu0 0
        %2940 = vmatpush1.bf16.msra.mxu0 0
        %2941 = vmatprep.subr.bf16.mxu0 0
        %2942 = vmatpush1.bf16.msra.mxu0 0
        %2943 = vmatprep.subr.bf16.mxu0 0
        %2944 = vmatpush1.bf16.msra.mxu0 0
        %2945 = vmatprep.subr.bf16.mxu0 0
        %2946 = vmatpush1.bf16.msra.mxu0 0
        %2947 = vmatprep.mubr.bf16.mxu0 0
        %2948 = vmatmul.mubr.bf16.gmra.mrb[0].mxu0 %v2849
        %v2949 = vpop.f32.mrb[0].mxu0
        %v2950 = vadd.f32 0.0, %v2949
        %v2951 = vpop.f32.mrb[0].mxu0
        %v2952 = vpop.f32.mrb[0].mxu0
        %v2953 = vadd.f32 0.0, %v2952
        %v2954 = vpop.f32.mrb[0].mxu0
        %2955 = vmatprep.mubr.bf16.mxu0 0
        %2956 = vmatmul.mubr.bf16.gmra.mrb[0].mxu0 %v2850
        %v2957 = vpop.f32.mrb[0].mxu0
        %v2958 = vadd.f32 0.0, %v2957
        %v2959 = vpop.f32.mrb[0].mxu0
        %v2960 = vpop.f32.mrb[0].mxu0
        %v2961 = vadd.f32 0.0, %v2960
        %v2962 = vpop.f32.mrb[0].mxu0
        %2963 = vmatprep.mubr.bf16.mxu0 0
        %2964 = vmatmul.mubr.bf16.gmra.mrb[0].mxu0 %v2851
        %v2965 = vpop.f32.mrb[0].mxu0
        %v2966 = vadd.f32 0.0, %v2965
        %v2967 = vpop.f32.mrb[0].mxu0
        %v2968 = vpop.f32.mrb[0].mxu0
        %v2969 = vadd.f32 0.0, %v2968
        %v2970 = vpop.f32.mrb[0].mxu0
        %2971 = vmatprep.mubr.bf16.mxu0 0
        %2972 = vmatmul.mubr.bf16.gmra.mrb[0].mxu0 %v2852
        %v2973 = vpop.f32.mrb[0].mxu0
        %v2974 = vadd.f32 0.0, %v2973
        %v2975 = vpop.f32.mrb[0].mxu0
        %v2976 = vpop.f32.mrb[0].mxu0
        %v2977 = vadd.f32 0.0, %v2976
        %v2978 = vpop.f32.mrb[0].mxu0
        %2979 = vmatprep.mubr.bf16.mxu0 0
        %2980 = vmatmul.mubr.bf16.gmra.mrb[0].mxu0 %v2853
        %v2981 = vpop.f32.mrb[0].mxu0
        %v2982 = vadd.f32 0.0, %v2981
        %v2983 = vpop.f32.mrb[0].mxu0
        %v2984 = vpop.f32.mrb[0].mxu0
        %v2985 = vadd.f32 0.0, %v2984
        %v2986 = vpop.f32.mrb[0].mxu0
        %2987 = vmatprep.mubr.bf16.mxu0 0
        %2988 = vmatmul.mubr.bf16.gmra.mrb[0].mxu0 %v2854
        %v2989 = vpop.f32.mrb[0].mxu0
        %v2990 = vadd.f32 0.0, %v2989
        %v2991 = vpop.f32.mrb[0].mxu0
        %v2992 = vpop.f32.mrb[0].mxu0
        %v2993 = vadd.f32 0.0, %v2992
        %v2994 = vpop.f32.mrb[0].mxu0
        %2995 = vmatprep.mubr.bf16.mxu0 0
        %2996 = vmatmul.mubr.bf16.gmra.mrb[0].mxu0 %v2855
        %v2997 = vpop.f32.mrb[0].mxu0
        %v2998 = vadd.f32 0.0, %v2997
        %v2999 = vpop.f32.mrb[0].mxu0
        %v3000 = vpop.f32.mrb[0].mxu0
        %v3001 = vadd.f32 0.0, %v3000
        %v3002 = vpop.f32.mrb[0].mxu0
        %3003 = vmatprep.mubr.bf16.mxu0 0
        %3004 = vmatmul.mubr.bf16.gmra.mrb[0].mxu0 %v2856
        %v3005 = vpop.f32.mrb[0].mxu0
        %v3006 = vadd.f32 0.0, %v3005
        %v3007 = vpop.f32.mrb[0].mxu0
        %v3008 = vpop.f32.mrb[0].mxu0
        %v3009 = vadd.f32 0.0, %v3008
        %v3010 = vpop.f32.mrb[0].mxu0
        %3011 = vmatprep.mubr.bf16.mxu0 0
        %3012 = vmatmul.mubr.bf16.gmra.mrb[0].mxu0 %v2857
        %v3013 = vpop.f32.mrb[0].mxu0
        %v3014 = vadd.f32 0.0, %v3013
        %v3015 = vpop.f32.mrb[0].mxu0
        %v3016 = vpop.f32.mrb[0].mxu0
        %v3017 = vadd.f32 0.0, %v3016
        %v3018 = vpop.f32.mrb[0].mxu0
        %3019 = vdwg.mxu0
        %v3020 = vadd.f32 %v2553, %v2950
        %v3021 = vadd.f32 %v2554, %v2953
        %v3022 = vadd.f32 %v2555, %v2958
        %v3023 = vadd.f32 %v2556, %v2961
        %v3024 = vadd.f32 %v2557, %v2966
        %v3025 = vadd.f32 %v2558, %v2969
        %v3026 = vadd.f32 %v2559, %v2974
        %v3027 = vadd.f32 %v2560, %v2977
        %v3028 = vadd.f32 %v2561, %v2982
        %v3029 = vadd.f32 %v2562, %v2985
        %v3030 = vadd.f32 %v2563, %v2990
        %v3031 = vadd.f32 %v2564, %v2993
        %v3032 = vadd.f32 %v2565, %v2998
        %v3033 = vadd.f32 %v2566, %v3001
        %v3034 = vadd.f32 %v2567, %v3006
        %v3035 = vadd.f32 %v2568, %v3009
        %v3036 = vadd.f32 %v2569, %v3014
        %v3037 = vadd.f32 %v2570, %v3017
        %v3038 = vld [vmem:[%s4] sm:$0x1]
        %v3040 = vlaneseq
        %v3041 = vshrl.u32 %v3040, 7
        %v3042 = vsub.s32 0, %v3041
        %v3043 = vrot.slane %v3038, %v3042
        %v3045 = vadd.f32 %v3020, %v3043
        %v3046 = vadd.f32 %v3021, %v3043
        %v3047 = vadd.f32 %v3022, %v3043
        %v3048 = vadd.f32 %v3023, %v3043
        %v3049 = vadd.f32 %v3024, %v3043
        %v3050 = vadd.f32 %v3025, %v3043
        %v3051 = vadd.f32 %v3026, %v3043
        %v3052 = vadd.f32 %v3027, %v3043
        %v3053 = vadd.f32 %v3028, %v3043
        %v3054 = vadd.f32 %v3029, %v3043
        %v3055 = vadd.f32 %v3030, %v3043
        %v3056 = vadd.f32 %v3031, %v3043
        %v3057 = vadd.f32 %v3032, %v3043
        %v3058 = vadd.f32 %v3033, %v3043
        %v3059 = vadd.f32 %v3034, %v3043
        %v3060 = vadd.f32 %v3035, %v3043
        %v3061 = vadd.f32 %v3036, %v3043
        %v3062 = vadd.f32 %v3037, %v3043
        %v3063 = vpack.c.bf16 %v3046, %v3045
        %v3064 = vpack.c.bf16 %v3048, %v3047
        %v3065 = vpack.c.bf16 %v3050, %v3049
        %v3066 = vpack.c.bf16 %v3052, %v3051
        %v3067 = vpack.c.bf16 %v3054, %v3053
        %v3068 = vpack.c.bf16 %v3056, %v3055
        %v3069 = vpack.c.bf16 %v3058, %v3057
        %v3070 = vpack.c.bf16 %v3060, %v3059
        %v3071 = vpack.c.bf16 %v3062, %v3061
        %v3081 = vunpack.c.l.b16 %v3063
        %v3082 = vunpack.c.h.b16 %v3063
        %v3083 = vunpack.c.l.b16 %v3064
        %v3084 = vunpack.c.h.b16 %v3064
        %v3085 = vunpack.c.l.b16 %v3065
        %v3086 = vunpack.c.h.b16 %v3065
        %v3087 = vunpack.c.l.b16 %v3066
        %v3088 = vunpack.c.h.b16 %v3066
        %v3089 = vunpack.c.l.b16 %v3067
        %v3090 = vunpack.c.h.b16 %v3067
        %v3091 = vunpack.c.l.b16 %v3068
        %v3092 = vunpack.c.h.b16 %v3068
        %v3093 = vunpack.c.l.b16 %v3069
        %v3094 = vunpack.c.h.b16 %v3069
        %v3095 = vunpack.c.l.b16 %v3070
        %v3096 = vunpack.c.h.b16 %v3070
        %v3097 = vunpack.c.l.b16 %v3071
        %v3098 = vunpack.c.h.b16 %v3071
        %v3099 = vpack.c.b16 %v3081, %v3081
        %v3100 = vpack.c.b16 %v3082, %v3082
        %v3101 = vpack.c.b16 %v3083, %v3083
        %v3102 = vpack.c.b16 %v3084, %v3084
        %v3103 = vpack.c.b16 %v3085, %v3085
        %v3104 = vpack.c.b16 %v3086, %v3086
        %v3105 = vpack.c.b16 %v3087, %v3087
        %v3106 = vpack.c.b16 %v3088, %v3088
        %v3107 = vpack.c.b16 %v3089, %v3089
        %v3108 = vpack.c.b16 %v3090, %v3090
        %v3109 = vpack.c.b16 %v3091, %v3091
        %v3110 = vpack.c.b16 %v3092, %v3092
        %v3111 = vpack.c.b16 %v3093, %v3093
        %v3112 = vpack.c.b16 %v3094, %v3094
        %v3113 = vpack.c.b16 %v3095, %v3095
        %v3114 = vpack.c.b16 %v3096, %v3096
        %v3115 = vpack.c.b16 %v3097, %v3097
        %v3116 = vpack.c.b16 %v3098, %v3098
        %vm3117 = vcmask 1044484
        %vm3118 = vmor %vm867, %vm3117
        %v3119 = vrot.slane %v3099, 7
        %v3120 = vrot.slane %v3119, 4
        %v3121 = vrot.slane %v3100, 7
        %v3122 = vsel %vm3118, %v3120, %v3121
        %v3123 = vrot.slane %v3121, 4
        %v3124 = vrot.slane %v3101, 7
        %v3125 = vrot.slane %v3124, 4
        %v3126 = vrot.slane %v3102, 7
        %v3127 = vsel %vm3118, %v3125, %v3126
        %v3128 = vrot.slane %v3126, 4
        %v3129 = vrot.slane %v3103, 7
        %v3130 = vrot.slane %v3129, 4
        %v3131 = vrot.slane %v3104, 7
        %v3132 = vsel %vm3118, %v3130, %v3131
        %v3133 = vrot.slane %v3131, 4
        %v3134 = vrot.slane %v3105, 7
        %v3135 = vrot.slane %v3134, 4
        %v3136 = vrot.slane %v3106, 7
        %v3137 = vsel %vm3118, %v3135, %v3136
        %v3138 = vrot.slane %v3136, 4
        %v3139 = vrot.slane %v3107, 7
        %v3140 = vrot.slane %v3139, 4
        %v3141 = vrot.slane %v3108, 7
        %v3142 = vsel %vm3118, %v3140, %v3141
        %v3143 = vrot.slane %v3141, 4
        %v3144 = vrot.slane %v3109, 7
        %v3145 = vrot.slane %v3144, 4
        %v3146 = vrot.slane %v3110, 7
        %v3147 = vsel %vm3118, %v3145, %v3146
        %v3148 = vrot.slane %v3146, 4
        %v3149 = vrot.slane %v3111, 7
        %v3150 = vrot.slane %v3149, 4
        %v3151 = vrot.slane %v3112, 7
        %v3152 = vsel %vm3118, %v3150, %v3151
        %v3153 = vrot.slane %v3151, 4
        %v3154 = vrot.slane %v3113, 7
        %v3155 = vrot.slane %v3154, 4
        %v3156 = vrot.slane %v3114, 7
        %v3157 = vsel %vm3118, %v3155, %v3156
        %v3158 = vrot.slane %v3156, 4
        %v3159 = vrot.slane %v3115, 7
        %v3160 = vrot.slane %v3159, 4
        %v3161 = vrot.slane %v3116, 7
        %v3162 = vsel %vm3118, %v3160, %v3161
        %v3163 = vrot.slane %v3161, 4
        %s3191 = scalar_lea.vmem [#allocation3], 24
        %3192 = vst [vmem:[%s3191] sm:$0xe] %v3119
        %3193 = vst [vmem:[%s3191 + $0x4] sm:$0xf] %v3122
        %3194 = vst [vmem:[%s3191 + $0x8] sm:$0x1] %v3123
        %3195 = vst [vmem:[%s3191 + $0xc] sm:$0xe] %v3124
        %3196 = vst [vmem:[%s3191 + $0x10] sm:$0xf] %v3127
        %3197 = vst [vmem:[%s3191 + $0x14] sm:$0x1] %v3128
        %3198 = vst [vmem:[%s3191 + $0x18] sm:$0xe] %v3129
        %3199 = vst [vmem:[%s3191 + $0x1c] sm:$0xf] %v3132
        %3200 = vst [vmem:[%s3191 + $0x20] sm:$0x1] %v3133
        %3201 = vst [vmem:[%s3191 + $0x24] sm:$0xe] %v3134
        %3202 = vst [vmem:[%s3191 + $0x28] sm:$0xf] %v3137
        %3203 = vst [vmem:[%s3191 + $0x2c] sm:$0x1] %v3138
        %3204 = vst [vmem:[%s3191 + $0x30] sm:$0xe] %v3139
        %3205 = vst [vmem:[%s3191 + $0x34] sm:$0xf] %v3142
        %3206 = vst [vmem:[%s3191 + $0x38] sm:$0x1] %v3143
        %3207 = vst [vmem:[%s3191 + $0x3c] sm:$0xe] %v3144
        %3208 = vst [vmem:[%s3191 + $0x40] sm:$0xf] %v3147
        %3209 = vst [vmem:[%s3191 + $0x44] sm:$0x1] %v3148
        %3210 = vst [vmem:[%s3191 + $0x48] sm:$0xe] %v3149
        %3211 = vst [vmem:[%s3191 + $0x4c] sm:$0xf] %v3152
        %3212 = vst [vmem:[%s3191 + $0x50] sm:$0x1] %v3153
        %3213 = vst [vmem:[%s3191 + $0x54] sm:$0xe] %v3154
        %3214 = vst [vmem:[%s3191 + $0x58] sm:$0xf] %v3157
        %3215 = vst [vmem:[%s3191 + $0x5c] sm:$0x1] %v3158
        %3216 = vst [vmem:[%s3191 + $0x60] sm:$0xe] %v3159
        %3217 = vst [vmem:[%s3191 + $0x64] sm:$0xf] %v3162
        %3218 = vst [vmem:[%s3191 + $0x68] sm:$0x1] %v3163
        %3219 = vst [vmem:[#allocation3] sm:$0xf] 0
        %vm3220 = vcmask 1042432
        %vm3221 = vsmask.f32 2304
        %vm3222 = vmand %vm3220, %vm3221
        %v3223 = vld [vmem:[#allocation3 + $0x4] sm:$0x7]
        %v3224 = vsel %vm3222, 0, %v3223
        %3225 = vst [vmem:[#allocation3 + $0x4] sm:$0x7] %v3224
        %3226 = vst [vmem:[#allocation3 + $0xc] sm:$0xf] 0
        %v3227 = vld [vmem:[#allocation3 + $0x10] sm:$0x7]
        %v3228 = vsel %vm3222, 0, %v3227
        %3229 = vst [vmem:[#allocation3 + $0x10] sm:$0x7] %v3228
        %s3230 = scalar_lea.vmem [#allocation3], 132
        %3231 = vst [vmem:[%s3230] sm:$0xf] 0
        %v3232 = vld [vmem:[%s3230 + $0x4] sm:$0x7]
        %v3233 = vsel %vm3222, 0, %v3232
        %3234 = vst [vmem:[%s3230 + $0x4] sm:$0x7] %v3233
        %3235 = vst [vmem:[%s3230 + $0xc] sm:$0xf] 0
        %v3236 = vld [vmem:[%s3230 + $0x10] sm:$0x7]
        %v3237 = vsel %vm3222, 0, %v3236
        %3238 = vst [vmem:[%s3230 + $0x10] sm:$0x7] %v3237
        %3239 = vst [vmem:[%s3191] sm:$0x1] 0
        %3240 = vst [vmem:[%s3191 + $0xc] sm:$0x1] 0
        %3241 = vst [vmem:[%s3191 + $0x18] sm:$0x1] 0
        %3242 = vst [vmem:[%s3191 + $0x24] sm:$0x1] 0
        %3243 = vst [vmem:[%s3191 + $0x30] sm:$0x1] 0
        %3244 = vst [vmem:[%s3191 + $0x3c] sm:$0x1] 0
        %3245 = vst [vmem:[%s3191 + $0x48] sm:$0x1] 0
        %3246 = vst [vmem:[%s3191 + $0x54] sm:$0x1] 0
        %3247 = vst [vmem:[%s3191 + $0x60] sm:$0x1] 0
        %vm3248 = vcmask 1042433
        %vm3249 = vsmask.f32 2310
        %vm3250 = vmand %vm3248, %vm3249
        %v3251 = vld [vmem:[%s3191 + $0x4] sm:$0x6]
        %v3252 = vsel %vm3250, 0, %v3251
        %3253 = vst [vmem:[%s3191 + $0x4] sm:$0x6] %v3252
        %v3254 = vld [vmem:[%s3191 + $0x10] sm:$0x6]
        %v3255 = vsel %vm3250, 0, %v3254
        %3256 = vst [vmem:[%s3191 + $0x10] sm:$0x6] %v3255
        %v3257 = vld [vmem:[%s3191 + $0x1c] sm:$0x6]
        %v3258 = vsel %vm3250, 0, %v3257
        %3259 = vst [vmem:[%s3191 + $0x1c] sm:$0x6] %v3258
        %v3260 = vld [vmem:[%s3191 + $0x28] sm:$0x6]
        %v3261 = vsel %vm3250, 0, %v3260
        %3262 = vst [vmem:[%s3191 + $0x28] sm:$0x6] %v3261
        %v3263 = vld [vmem:[%s3191 + $0x34] sm:$0x6]
        %v3264 = vsel %vm3250, 0, %v3263
        %3265 = vst [vmem:[%s3191 + $0x34] sm:$0x6] %v3264
        %v3266 = vld [vmem:[%s3191 + $0x40] sm:$0x6]
        %v3267 = vsel %vm3250, 0, %v3266
        %3268 = vst [vmem:[%s3191 + $0x40] sm:$0x6] %v3267
        %v3269 = vld [vmem:[%s3191 + $0x4c] sm:$0x6]
        %v3270 = vsel %vm3250, 0, %v3269
        %3271 = vst [vmem:[%s3191 + $0x4c] sm:$0x6] %v3270
        %v3272 = vld [vmem:[%s3191 + $0x58] sm:$0x6]
        %v3273 = vsel %vm3250, 0, %v3272
        %3274 = vst [vmem:[%s3191 + $0x58] sm:$0x6] %v3273
        %v3275 = vld [vmem:[%s3191 + $0x64] sm:$0x6]
        %v3276 = vsel %vm3250, 0, %v3275
        %3277 = vst [vmem:[%s3191 + $0x64] sm:$0x6] %v3276
        %v3278 = vld [vmem:[#allocation3] sm:$0xf]
        %v3279 = vld [vmem:[#allocation3 + $0x4] sm:$0xf]
        %v3280 = vld [vmem:[#allocation3 + $0xc] sm:$0xf]
        %v3281 = vld [vmem:[#allocation3 + $0x10] sm:$0xf]
        %v3282 = vld [vmem:[#allocation3 + $0x18] sm:$0xf]
        %v3283 = vld [vmem:[#allocation3 + $0x1c] sm:$0xf]
        %v3284 = vld [vmem:[#allocation3 + $0x24] sm:$0xf]
        %v3285 = vld [vmem:[#allocation3 + $0x28] sm:$0xf]
        %v3286 = vld [vmem:[#allocation3 + $0x30] sm:$0xf]
        %v3287 = vld [vmem:[#allocation3 + $0x34] sm:$0xf]
        %v3288 = vld [vmem:[#allocation3 + $0x3c] sm:$0xf]
        %v3289 = vld [vmem:[#allocation3 + $0x40] sm:$0xf]
        %v3290 = vld [vmem:[#allocation3 + $0x48] sm:$0xf]
        %v3291 = vld [vmem:[#allocation3 + $0x4c] sm:$0xf]
        %v3292 = vld [vmem:[#allocation3 + $0x54] sm:$0xf]
        %v3293 = vld [vmem:[#allocation3 + $0x58] sm:$0xf]
        %v3294 = vld [vmem:[#allocation3 + $0x60] sm:$0xf]
        %v3295 = vld [vmem:[#allocation3 + $0x64] sm:$0xf]
        %v3296 = vld [vmem:[#allocation3 + $0x6c] sm:$0xf]
        %v3297 = vld [vmem:[#allocation3 + $0x70] sm:$0xf]
        %v3298 = vld [vmem:[#allocation3 + $0x78] sm:$0xf]
        %v3299 = vld [vmem:[#allocation3 + $0x7c] sm:$0xf]
        %v3300 = vld [vmem:[#allocation8] sm:$0xf]
        %v3301 = vld [vmem:[#allocation8 + $0x4] sm:$0xf]
        %v3302 = vld [vmem:[#allocation8 + $0x8] sm:$0xf]
        %v3303 = vld [vmem:[#allocation8 + $0xc] sm:$0xf]
        %v3304 = vld [vmem:[#allocation8 + $0x10] sm:$0xf]
        %v3305 = vld [vmem:[#allocation8 + $0x14] sm:$0xf]
        %v3306 = vld [vmem:[#allocation8 + $0x18] sm:$0xf]
        %v3307 = vld [vmem:[#allocation8 + $0x1c] sm:$0xf]
        %v3308 = vld [vmem:[#allocation8 + $0x20] sm:$0xf]
        %v3309 = vld [vmem:[#allocation8 + $0x24] sm:$0xf]
        %v3310 = vld [vmem:[#allocation8 + $0x28] sm:$0xf]
        %v3311 = vld [vmem:[#allocation8 + $0x2c] sm:$0xf]
        %v3312 = vld [vmem:[#allocation8 + $0x30] sm:$0xf]
        %v3313 = vld [vmem:[#allocation8 + $0x34] sm:$0xf]
        %v3314 = vld [vmem:[#allocation8 + $0x38] sm:$0xf]
        %v3315 = vld [vmem:[#allocation8 + $0x3c] sm:$0xf]
        %v3316 = vld [vmem:[#allocation3 + $0x8] sm:$0x1]
        %v3317 = vld [vmem:[#allocation3 + $0x14] sm:$0x1]
        %v3318 = vld [vmem:[#allocation3 + $0x20] sm:$0x1]
        %v3319 = vld [vmem:[#allocation3 + $0x2c] sm:$0x1]
        %v3320 = vld [vmem:[#allocation3 + $0x38] sm:$0x1]
        %v3321 = vld [vmem:[#allocation3 + $0x44] sm:$0x1]
        %v3322 = vld [vmem:[#allocation3 + $0x50] sm:$0x1]
        %v3323 = vld [vmem:[#allocation3 + $0x5c] sm:$0x1]
        %v3324 = vld [vmem:[#allocation3 + $0x68] sm:$0x1]
        %v3325 = vld [vmem:[#allocation3 + $0x74] sm:$0x1]
        %v3326 = vld [vmem:[#allocation3 + $0x80] sm:$0x1]
        %v3328 = vshrl.u32 %v3278, 16
        %v3330 = vrot.slane %v3328, 4
        %v3331 = vshll.u32 %v3278, 16
        %v3333 = vrot.slane %v3331, 5
        %v3334 = vor.u32 %v3330, %v3333
        %v3335 = vrot.slane %v3334, 4
        %v3337 = vshll.u32 %v3279, 16
        %v3339 = vrot.slane %v3337, 5
        %v3340 = vsel %vm1681, %v3335, %v3339
        %v3341 = vshrl.u32 %v3279, 16
        %v3343 = vrot.slane %v3341, 4
        %v3344 = vor.u32 %v3343, %v3339
        %v3345 = vrot.slane %v3344, 4
        %v3347 = vshll.u32 %v3316, 16
        %v3349 = vrot.slane %v3347, 5
        %v3350 = vsel %vm1681, %v3345, %v3349
        %v3352 = vshrl.u32 %v3280, 16
        %v3354 = vrot.slane %v3352, 4
        %v3355 = vshll.u32 %v3280, 16
        %v3357 = vrot.slane %v3355, 5
        %v3358 = vor.u32 %v3354, %v3357
        %v3359 = vrot.slane %v3358, 4
        %v3361 = vshll.u32 %v3281, 16
        %v3363 = vrot.slane %v3361, 5
        %v3364 = vsel %vm1681, %v3359, %v3363
        %v3365 = vshrl.u32 %v3281, 16
        %v3367 = vrot.slane %v3365, 4
        %v3368 = vor.u32 %v3367, %v3363
        %v3369 = vrot.slane %v3368, 4
        %v3371 = vshll.u32 %v3317, 16
        %v3373 = vrot.slane %v3371, 5
        %v3374 = vsel %vm1681, %v3369, %v3373
        %v3376 = vshrl.u32 %v3282, 16
        %v3378 = vrot.slane %v3376, 4
        %v3379 = vshll.u32 %v3282, 16
        %v3381 = vrot.slane %v3379, 5
        %v3382 = vor.u32 %v3378, %v3381
        %v3383 = vrot.slane %v3382, 4
        %v3385 = vshll.u32 %v3283, 16
        %v3387 = vrot.slane %v3385, 5
        %v3388 = vsel %vm1681, %v3383, %v3387
        %v3389 = vshrl.u32 %v3283, 16
        %v3391 = vrot.slane %v3389, 4
        %v3392 = vor.u32 %v3391, %v3387
        %v3393 = vrot.slane %v3392, 4
        %v3395 = vshll.u32 %v3318, 16
        %v3397 = vrot.slane %v3395, 5
        %v3398 = vsel %vm1681, %v3393, %v3397
        %v3400 = vshrl.u32 %v3284, 16
        %v3402 = vrot.slane %v3400, 4
        %v3403 = vshll.u32 %v3284, 16
        %v3405 = vrot.slane %v3403, 5
        %v3406 = vor.u32 %v3402, %v3405
        %v3407 = vrot.slane %v3406, 4
        %v3409 = vshll.u32 %v3285, 16
        %v3411 = vrot.slane %v3409, 5
        %v3412 = vsel %vm1681, %v3407, %v3411
        %v3413 = vshrl.u32 %v3285, 16
        %v3415 = vrot.slane %v3413, 4
        %v3416 = vor.u32 %v3415, %v3411
        %v3417 = vrot.slane %v3416, 4
        %v3419 = vshll.u32 %v3319, 16
        %v3421 = vrot.slane %v3419, 5
        %v3422 = vsel %vm1681, %v3417, %v3421
        %v3424 = vshrl.u32 %v3286, 16
        %v3426 = vrot.slane %v3424, 4
        %v3427 = vshll.u32 %v3286, 16
        %v3429 = vrot.slane %v3427, 5
        %v3430 = vor.u32 %v3426, %v3429
        %v3431 = vrot.slane %v3430, 4
        %v3433 = vshll.u32 %v3287, 16
        %v3435 = vrot.slane %v3433, 5
        %v3436 = vsel %vm1681, %v3431, %v3435
        %v3437 = vshrl.u32 %v3287, 16
        %v3439 = vrot.slane %v3437, 4
        %v3440 = vor.u32 %v3439, %v3435
        %v3441 = vrot.slane %v3440, 4
        %v3443 = vshll.u32 %v3320, 16
        %v3445 = vrot.slane %v3443, 5
        %v3446 = vsel %vm1681, %v3441, %v3445
        %v3448 = vshrl.u32 %v3288, 16
        %v3450 = vrot.slane %v3448, 4
        %v3451 = vshll.u32 %v3288, 16
        %v3453 = vrot.slane %v3451, 5
        %v3454 = vor.u32 %v3450, %v3453
        %v3455 = vrot.slane %v3454, 4
        %v3457 = vshll.u32 %v3289, 16
        %v3459 = vrot.slane %v3457, 5
        %v3460 = vsel %vm1681, %v3455, %v3459
        %v3461 = vshrl.u32 %v3289, 16
        %v3463 = vrot.slane %v3461, 4
        %v3464 = vor.u32 %v3463, %v3459
        %v3465 = vrot.slane %v3464, 4
        %v3467 = vshll.u32 %v3321, 16
        %v3469 = vrot.slane %v3467, 5
        %v3470 = vsel %vm1681, %v3465, %v3469
        %v3472 = vshrl.u32 %v3290, 16
        %v3474 = vrot.slane %v3472, 4
        %v3475 = vshll.u32 %v3290, 16
        %v3477 = vrot.slane %v3475, 5
        %v3478 = vor.u32 %v3474, %v3477
        %v3479 = vrot.slane %v3478, 4
        %v3481 = vshll.u32 %v3291, 16
        %v3483 = vrot.slane %v3481, 5
        %v3484 = vsel %vm1681, %v3479, %v3483
        %v3485 = vshrl.u32 %v3291, 16
        %v3487 = vrot.slane %v3485, 4
        %v3488 = vor.u32 %v3487, %v3483
        %v3489 = vrot.slane %v3488, 4
        %v3491 = vshll.u32 %v3322, 16
        %v3493 = vrot.slane %v3491, 5
        %v3494 = vsel %vm1681, %v3489, %v3493
        %v3496 = vshrl.u32 %v3292, 16
        %v3498 = vrot.slane %v3496, 4
        %v3499 = vshll.u32 %v3292, 16
        %v3501 = vrot.slane %v3499, 5
        %v3502 = vor.u32 %v3498, %v3501
        %v3503 = vrot.slane %v3502, 4
        %v3505 = vshll.u32 %v3293, 16
        %v3507 = vrot.slane %v3505, 5
        %v3508 = vsel %vm1681, %v3503, %v3507
        %v3509 = vshrl.u32 %v3293, 16
        %v3511 = vrot.slane %v3509, 4
        %v3512 = vor.u32 %v3511, %v3507
        %v3513 = vrot.slane %v3512, 4
        %v3515 = vshll.u32 %v3323, 16
        %v3517 = vrot.slane %v3515, 5
        %v3518 = vsel %vm1681, %v3513, %v3517
        %v3520 = vshrl.u32 %v3294, 16
        %v3522 = vrot.slane %v3520, 4
        %v3523 = vshll.u32 %v3294, 16
        %v3525 = vrot.slane %v3523, 5
        %v3526 = vor.u32 %v3522, %v3525
        %v3527 = vrot.slane %v3526, 4
        %v3529 = vshll.u32 %v3295, 16
        %v3531 = vrot.slane %v3529, 5
        %v3532 = vsel %vm1681, %v3527, %v3531
        %v3533 = vshrl.u32 %v3295, 16
        %v3535 = vrot.slane %v3533, 4
        %v3536 = vor.u32 %v3535, %v3531
        %v3537 = vrot.slane %v3536, 4
        %v3539 = vshll.u32 %v3324, 16
        %v3541 = vrot.slane %v3539, 5
        %v3542 = vsel %vm1681, %v3537, %v3541
        %v3544 = vshrl.u32 %v3296, 16
        %v3546 = vrot.slane %v3544, 4
        %v3547 = vshll.u32 %v3296, 16
        %v3549 = vrot.slane %v3547, 5
        %v3550 = vor.u32 %v3546, %v3549
        %v3551 = vrot.slane %v3550, 4
        %v3553 = vshll.u32 %v3297, 16
        %v3555 = vrot.slane %v3553, 5
        %v3556 = vsel %vm1681, %v3551, %v3555
        %v3557 = vshrl.u32 %v3297, 16
        %v3559 = vrot.slane %v3557, 4
        %v3560 = vor.u32 %v3559, %v3555
        %v3561 = vrot.slane %v3560, 4
        %v3563 = vshll.u32 %v3325, 16
        %v3565 = vrot.slane %v3563, 5
        %v3566 = vsel %vm1681, %v3561, %v3565
        %v3568 = vshrl.u32 %v3298, 16
        %v3570 = vrot.slane %v3568, 4
        %v3571 = vshll.u32 %v3298, 16
        %v3573 = vrot.slane %v3571, 5
        %v3574 = vor.u32 %v3570, %v3573
        %v3575 = vrot.slane %v3574, 4
        %v3577 = vshll.u32 %v3299, 16
        %v3579 = vrot.slane %v3577, 5
        %v3580 = vsel %vm1681, %v3575, %v3579
        %v3581 = vshrl.u32 %v3299, 16
        %v3583 = vrot.slane %v3581, 4
        %v3584 = vor.u32 %v3583, %v3579
        %v3585 = vrot.slane %v3584, 4
        %v3587 = vshll.u32 %v3326, 16
        %v3589 = vrot.slane %v3587, 5
        %v3590 = vsel %vm1681, %v3585, %v3589
        %s3591 = scalar_lea.vmem [#allocation8], 64
        %v3592 = vld [vmem:[%s3591] sm:$0xf]
        %v3593 = vld [vmem:[%s3591 + $0x4] sm:$0xf]
        %v3594 = vld [vmem:[%s3591 + $0x8] sm:$0xf]
        %v3595 = vld [vmem:[%s3591 + $0xc] sm:$0xf]
        %v3596 = vld [vmem:[%s3591 + $0x10] sm:$0xf]
        %v3597 = vld [vmem:[%s3591 + $0x14] sm:$0xf]
        %v3598 = vld [vmem:[%s3591 + $0x18] sm:$0xf]
        %v3599 = vld [vmem:[%s3591 + $0x1c] sm:$0xf]
        %v3600 = vld [vmem:[%s3591 + $0x20] sm:$0xf]
        %v3601 = vld [vmem:[%s3591 + $0x24] sm:$0xf]
        %v3602 = vld [vmem:[%s3591 + $0x28] sm:$0xf]
        %v3603 = vld [vmem:[%s3591 + $0x2c] sm:$0xf]
        %v3604 = vld [vmem:[%s3591 + $0x30] sm:$0xf]
        %v3605 = vld [vmem:[%s3591 + $0x34] sm:$0xf]
        %v3606 = vld [vmem:[%s3591 + $0x38] sm:$0xf]
        %v3607 = vld [vmem:[%s3591 + $0x3c] sm:$0xf]
        %v3608 = vunpack.c.l.b16 %v3340
        %v3609 = vunpack.c.l.b16 %v3350
        %v3610 = vunpack.c.l.b16 %v3364
        %v3611 = vunpack.c.l.b16 %v3374
        %v3612 = vunpack.c.l.b16 %v3388
        %v3613 = vunpack.c.l.b16 %v3398
        %v3614 = vunpack.c.l.b16 %v3412
        %v3615 = vunpack.c.l.b16 %v3422
        %v3616 = vunpack.c.l.b16 %v3436
        %v3617 = vunpack.c.l.b16 %v3446
        %v3618 = vunpack.c.l.b16 %v3460
        %v3619 = vunpack.c.l.b16 %v3470
        %v3620 = vunpack.c.l.b16 %v3484
        %v3621 = vunpack.c.l.b16 %v3494
        %v3622 = vunpack.c.l.b16 %v3508
        %v3623 = vunpack.c.l.b16 %v3518
        %v3624 = vunpack.c.l.b16 %v3532
        %v3625 = vunpack.c.l.b16 %v3542
        %v3626 = vunpack.c.l.b16 %v3556
        %v3627 = vunpack.c.l.b16 %v3566
        %v3628 = vunpack.c.l.b16 %v3580
        %v3629 = vunpack.c.l.b16 %v3590
        %v3630 = vpack.c.b16 %v3609, %v3608
        %v3631 = vpack.c.b16 %v3611, %v3610
        %v3632 = vpack.c.b16 %v3613, %v3612
        %v3633 = vpack.c.b16 %v3615, %v3614
        %v3634 = vpack.c.b16 %v3617, %v3616
        %v3635 = vpack.c.b16 %v3619, %v3618
        %v3636 = vpack.c.b16 %v3621, %v3620
        %v3637 = vpack.c.b16 %v3623, %v3622
        %v3638 = vpack.c.b16 %v3625, %v3624
        %v3639 = vpack.c.b16 %v3627, %v3626
        %v3640 = vpack.c.b16 %v3629, %v3628
        %v3668 = vunpack.c.l.b16 %v3592
        %v3669 = vunpack.c.l.b16 %v3593
        %v3670 = vunpack.c.l.b16 %v3594
        %v3671 = vunpack.c.l.b16 %v3595
        %v3672 = vunpack.c.l.b16 %v3596
        %v3673 = vunpack.c.l.b16 %v3597
        %v3674 = vunpack.c.l.b16 %v3598
        %v3675 = vunpack.c.l.b16 %v3599
        %v3676 = vunpack.c.l.b16 %v3600
        %v3677 = vunpack.c.l.b16 %v3601
        %v3678 = vunpack.c.l.b16 %v3602
        %v3679 = vunpack.c.l.b16 %v3603
        %v3680 = vunpack.c.l.b16 %v3604
        %v3681 = vunpack.c.l.b16 %v3605
        %v3682 = vunpack.c.l.b16 %v3606
        %v3683 = vunpack.c.l.b16 %v3607
        %v3684 = vpack.c.b16 %v3669, %v3668
        %v3685 = vpack.c.b16 %v3671, %v3670
        %v3686 = vpack.c.b16 %v3673, %v3672
        %v3687 = vpack.c.b16 %v3675, %v3674
        %v3688 = vpack.c.b16 %v3677, %v3676
        %v3689 = vpack.c.b16 %v3679, %v3678
        %v3690 = vpack.c.b16 %v3681, %v3680
        %v3691 = vpack.c.b16 %v3683, %v3682
        %3700 = vmatprep.subr.bf16.mxu0 0
        %3701 = vmatpush1.bf16.msra.mxu0 %v3684
        %3702 = vmatprep.subr.bf16.mxu0 0
        %3703 = vmatpush1.bf16.msra.mxu0 %v3685
        %3704 = vmatprep.subr.bf16.mxu0 0
        %3705 = vmatpush1.bf16.msra.mxu0 %v3686
        %3706 = vmatprep.subr.bf16.mxu0 0
        %3707 = vmatpush1.bf16.msra.mxu0 %v3687
        %3708 = vmatprep.subr.bf16.mxu0 0
        %3709 = vmatpush1.bf16.msra.mxu0 %v3688
        %3710 = vmatprep.subr.bf16.mxu0 0
        %3711 = vmatpush1.bf16.msra.mxu0 %v3689
        %3712 = vmatprep.subr.bf16.mxu0 0
        %3713 = vmatpush1.bf16.msra.mxu0 %v3690
        %3714 = vmatprep.subr.bf16.mxu0 0
        %3715 = vmatpush1.bf16.msra.mxu0 %v3691
        %3716 = vmatprep.subr.bf16.mxu0 0
        %3717 = vmatpush1.bf16.msra.mxu0 0
        %3718 = vmatprep.subr.bf16.mxu0 0
        %3719 = vmatpush1.bf16.msra.mxu0 0
        %3720 = vmatprep.subr.bf16.mxu0 0
        %3721 = vmatpush1.bf16.msra.mxu0 0
        %3722 = vmatprep.subr.bf16.mxu0 0
        %3723 = vmatpush1.bf16.msra.mxu0 0
        %3724 = vmatprep.subr.bf16.mxu0 0
        %3725 = vmatpush1.bf16.msra.mxu0 0
        %3726 = vmatprep.subr.bf16.mxu0 0
        %3727 = vmatpush1.bf16.msra.mxu0 0
        %3728 = vmatprep.subr.bf16.mxu0 0
        %3729 = vmatpush1.bf16.msra.mxu0 0
        %3730 = vmatprep.subr.bf16.mxu0 0
        %3731 = vmatpush1.bf16.msra.mxu0 0
        %3732 = vmatprep.mubr.bf16.mxu0 0
        %3733 = vmatmul.mubr.bf16.gmra.mrb[0].mxu0 %v3630
        %v3734 = vpop.f32.mrb[0].mxu0
        %v3735 = vadd.f32 0.0, %v3734
        %v3736 = vpop.f32.mrb[0].mxu0
        %v3737 = vpop.f32.mrb[0].mxu0
        %v3738 = vadd.f32 0.0, %v3737
        %v3739 = vpop.f32.mrb[0].mxu0
        %3740 = vmatprep.mubr.bf16.mxu0 0
        %3741 = vmatmul.mubr.bf16.gmra.mrb[0].mxu0 %v3631
        %v3742 = vpop.f32.mrb[0].mxu0
        %v3743 = vadd.f32 0.0, %v3742
        %v3744 = vpop.f32.mrb[0].mxu0
        %v3745 = vpop.f32.mrb[0].mxu0
        %v3746 = vadd.f32 0.0, %v3745
        %v3747 = vpop.f32.mrb[0].mxu0
        %3748 = vmatprep.mubr.bf16.mxu0 0
        %3749 = vmatmul.mubr.bf16.gmra.mrb[0].mxu0 %v3632
        %v3750 = vpop.f32.mrb[0].mxu0
        %v3751 = vadd.f32 0.0, %v3750
        %v3752 = vpop.f32.mrb[0].mxu0
        %v3753 = vpop.f32.mrb[0].mxu0
        %v3754 = vadd.f32 0.0, %v3753
        %v3755 = vpop.f32.mrb[0].mxu0
        %3756 = vmatprep.mubr.bf16.mxu0 0
        %3757 = vmatmul.mubr.bf16.gmra.mrb[0].mxu0 %v3633
        %v3758 = vpop.f32.mrb[0].mxu0
        %v3759 = vadd.f32 0.0, %v3758
        %v3760 = vpop.f32.mrb[0].mxu0
        %v3761 = vpop.f32.mrb[0].mxu0
        %v3762 = vadd.f32 0.0, %v3761
        %v3763 = vpop.f32.mrb[0].mxu0
        %3764 = vmatprep.mubr.bf16.mxu0 0
        %3765 = vmatmul.mubr.bf16.gmra.mrb[0].mxu0 %v3634
        %v3766 = vpop.f32.mrb[0].mxu0
        %v3767 = vadd.f32 0.0, %v3766
        %v3768 = vpop.f32.mrb[0].mxu0
        %v3769 = vpop.f32.mrb[0].mxu0
        %v3770 = vadd.f32 0.0, %v3769
        %v3771 = vpop.f32.mrb[0].mxu0
        %3772 = vmatprep.mubr.bf16.mxu0 0
        %3773 = vmatmul.mubr.bf16.gmra.mrb[0].mxu0 %v3635
        %v3774 = vpop.f32.mrb[0].mxu0
        %v3775 = vadd.f32 0.0, %v3774
        %v3776 = vpop.f32.mrb[0].mxu0
        %v3777 = vpop.f32.mrb[0].mxu0
        %v3778 = vadd.f32 0.0, %v3777
        %v3779 = vpop.f32.mrb[0].mxu0
        %3780 = vmatprep.mubr.bf16.mxu0 0
        %3781 = vmatmul.mubr.bf16.gmra.mrb[0].mxu0 %v3636
        %v3782 = vpop.f32.mrb[0].mxu0
        %v3783 = vadd.f32 0.0, %v3782
        %v3784 = vpop.f32.mrb[0].mxu0
        %v3785 = vpop.f32.mrb[0].mxu0
        %v3786 = vadd.f32 0.0, %v3785
        %v3787 = vpop.f32.mrb[0].mxu0
        %3788 = vmatprep.mubr.bf16.mxu0 0
        %3789 = vmatmul.mubr.bf16.gmra.mrb[0].mxu0 %v3637
        %v3790 = vpop.f32.mrb[0].mxu0
        %v3791 = vadd.f32 0.0, %v3790
        %v3792 = vpop.f32.mrb[0].mxu0
        %v3793 = vpop.f32.mrb[0].mxu0
        %v3794 = vadd.f32 0.0, %v3793
        %v3795 = vpop.f32.mrb[0].mxu0
        %3796 = vmatprep.mubr.bf16.mxu0 0
        %3797 = vmatmul.mubr.bf16.gmra.mrb[0].mxu0 %v3638
        %v3798 = vpop.f32.mrb[0].mxu0
        %v3799 = vadd.f32 0.0, %v3798
        %v3800 = vpop.f32.mrb[0].mxu0
        %v3801 = vpop.f32.mrb[0].mxu0
        %v3802 = vadd.f32 0.0, %v3801
        %v3803 = vpop.f32.mrb[0].mxu0
        %3804 = vmatprep.mubr.bf16.mxu0 0
        %3805 = vmatmul.mubr.bf16.gmra.mrb[0].mxu0 %v3639
        %v3806 = vpop.f32.mrb[0].mxu0
        %v3807 = vadd.f32 0.0, %v3806
        %v3808 = vpop.f32.mrb[0].mxu0
        %v3809 = vpop.f32.mrb[0].mxu0
        %v3810 = vadd.f32 0.0, %v3809
        %v3811 = vpop.f32.mrb[0].mxu0
        %3812 = vmatprep.mubr.bf16.mxu0 0
        %3813 = vmatmul.mubr.bf16.gmra.mrb[0].mxu0 %v3640
        %v3814 = vpop.f32.mrb[0].mxu0
        %v3815 = vadd.f32 0.0, %v3814
        %v3816 = vpop.f32.mrb[0].mxu0
        %v3817 = vpop.f32.mrb[0].mxu0
        %v3818 = vadd.f32 0.0, %v3817
        %v3819 = vpop.f32.mrb[0].mxu0
        %3820 = vdwg.mxu0
        %v3843 = vunpack.c.l.b16 %v3278
        %v3844 = vunpack.c.l.b16 %v3279
        %v3845 = vunpack.c.l.b16 %v3280
        %v3846 = vunpack.c.l.b16 %v3281
        %v3847 = vunpack.c.l.b16 %v3282
        %v3848 = vunpack.c.l.b16 %v3283
        %v3849 = vunpack.c.l.b16 %v3284
        %v3850 = vunpack.c.l.b16 %v3285
        %v3851 = vunpack.c.l.b16 %v3286
        %v3852 = vunpack.c.l.b16 %v3287
        %v3853 = vunpack.c.l.b16 %v3288
        %v3854 = vunpack.c.l.b16 %v3289
        %v3855 = vunpack.c.l.b16 %v3290
        %v3856 = vunpack.c.l.b16 %v3291
        %v3857 = vunpack.c.l.b16 %v3292
        %v3858 = vunpack.c.l.b16 %v3293
        %v3859 = vunpack.c.l.b16 %v3294
        %v3860 = vunpack.c.l.b16 %v3295
        %v3861 = vunpack.c.l.b16 %v3296
        %v3862 = vunpack.c.l.b16 %v3297
        %v3863 = vunpack.c.l.b16 %v3298
        %v3864 = vunpack.c.l.b16 %v3299
        %v3865 = vpack.c.b16 %v3844, %v3843
        %v3866 = vpack.c.b16 %v3846, %v3845
        %v3867 = vpack.c.b16 %v3848, %v3847
        %v3868 = vpack.c.b16 %v3850, %v3849
        %v3869 = vpack.c.b16 %v3852, %v3851
        %v3870 = vpack.c.b16 %v3854, %v3853
        %v3871 = vpack.c.b16 %v3856, %v3855
        %v3872 = vpack.c.b16 %v3858, %v3857
        %v3873 = vpack.c.b16 %v3860, %v3859
        %v3874 = vpack.c.b16 %v3862, %v3861
        %v3875 = vpack.c.b16 %v3864, %v3863
        %v3903 = vunpack.c.l.b16 %v3300
        %v3904 = vunpack.c.l.b16 %v3301
        %v3905 = vunpack.c.l.b16 %v3302
        %v3906 = vunpack.c.l.b16 %v3303
        %v3907 = vunpack.c.l.b16 %v3304
        %v3908 = vunpack.c.l.b16 %v3305
        %v3909 = vunpack.c.l.b16 %v3306
        %v3910 = vunpack.c.l.b16 %v3307
        %v3911 = vunpack.c.l.b16 %v3308
        %v3912 = vunpack.c.l.b16 %v3309
        %v3913 = vunpack.c.l.b16 %v3310
        %v3914 = vunpack.c.l.b16 %v3311
        %v3915 = vunpack.c.l.b16 %v3312
        %v3916 = vunpack.c.l.b16 %v3313
        %v3917 = vunpack.c.l.b16 %v3314
        %v3918 = vunpack.c.l.b16 %v3315
        %v3919 = vpack.c.b16 %v3904, %v3903
        %v3920 = vpack.c.b16 %v3906, %v3905
        %v3921 = vpack.c.b16 %v3908, %v3907
        %v3922 = vpack.c.b16 %v3910, %v3909
        %v3923 = vpack.c.b16 %v3912, %v3911
        %v3924 = vpack.c.b16 %v3914, %v3913
        %v3925 = vpack.c.b16 %v3916, %v3915
        %v3926 = vpack.c.b16 %v3918, %v3917
        %3935 = vmatprep.subr.bf16.mxu0 0
        %3936 = vmatpush1.bf16.msra.mxu0 %v3919
        %3937 = vmatprep.subr.bf16.mxu0 0
        %3938 = vmatpush1.bf16.msra.mxu0 %v3920
        %3939 = vmatprep.subr.bf16.mxu0 0
        %3940 = vmatpush1.bf16.msra.mxu0 %v3921
        %3941 = vmatprep.subr.bf16.mxu0 0
        %3942 = vmatpush1.bf16.msra.mxu0 %v3922
        %3943 = vmatprep.subr.bf16.mxu0 0
        %3944 = vmatpush1.bf16.msra.mxu0 %v3923
        %3945 = vmatprep.subr.bf16.mxu0 0
        %3946 = vmatpush1.bf16.msra.mxu0 %v3924
        %3947 = vmatprep.subr.bf16.mxu0 0
        %3948 = vmatpush1.bf16.msra.mxu0 %v3925
        %3949 = vmatprep.subr.bf16.mxu0 0
        %3950 = vmatpush1.bf16.msra.mxu0 %v3926
        %3951 = vmatprep.subr.bf16.mxu0 0
        %3952 = vmatpush1.bf16.msra.mxu0 0
        %3953 = vmatprep.subr.bf16.mxu0 0
        %3954 = vmatpush1.bf16.msra.mxu0 0
        %3955 = vmatprep.subr.bf16.mxu0 0
        %3956 = vmatpush1.bf16.msra.mxu0 0
        %3957 = vmatprep.subr.bf16.mxu0 0
        %3958 = vmatpush1.bf16.msra.mxu0 0
        %3959 = vmatprep.subr.bf16.mxu0 0
        %3960 = vmatpush1.bf16.msra.mxu0 0
        %3961 = vmatprep.subr.bf16.mxu0 0
        %3962 = vmatpush1.bf16.msra.mxu0 0
        %3963 = vmatprep.subr.bf16.mxu0 0
        %3964 = vmatpush1.bf16.msra.mxu0 0
        %3965 = vmatprep.subr.bf16.mxu0 0
        %3966 = vmatpush1.bf16.msra.mxu0 0
        %3967 = vmatprep.mubr.bf16.mxu0 0
        %3968 = vmatmul.mubr.bf16.gmra.mrb[0].mxu0 %v3865
        %v3969 = vpop.f32.mrb[0].mxu0
        %v3970 = vadd.f32 %v3735, %v3969
        %v3971 = vpop.f32.mrb[0].mxu0
        %v3972 = vpop.f32.mrb[0].mxu0
        %v3973 = vadd.f32 %v3738, %v3972
        %v3974 = vpop.f32.mrb[0].mxu0
        %3975 = vmatprep.mubr.bf16.mxu0 0
        %3976 = vmatmul.mubr.bf16.gmra.mrb[0].mxu0 %v3866
        %v3977 = vpop.f32.mrb[0].mxu0
        %v3978 = vadd.f32 %v3743, %v3977
        %v3979 = vpop.f32.mrb[0].mxu0
        %v3980 = vpop.f32.mrb[0].mxu0
        %v3981 = vadd.f32 %v3746, %v3980
        %v3982 = vpop.f32.mrb[0].mxu0
        %3983 = vmatprep.mubr.bf16.mxu0 0
        %3984 = vmatmul.mubr.bf16.gmra.mrb[0].mxu0 %v3867
        %v3985 = vpop.f32.mrb[0].mxu0
        %v3986 = vadd.f32 %v3751, %v3985
        %v3987 = vpop.f32.mrb[0].mxu0
        %v3988 = vpop.f32.mrb[0].mxu0
        %v3989 = vadd.f32 %v3754, %v3988
        %v3990 = vpop.f32.mrb[0].mxu0
        %3991 = vmatprep.mubr.bf16.mxu0 0
        %3992 = vmatmul.mubr.bf16.gmra.mrb[0].mxu0 %v3868
        %v3993 = vpop.f32.mrb[0].mxu0
        %v3994 = vadd.f32 %v3759, %v3993
        %v3995 = vpop.f32.mrb[0].mxu0
        %v3996 = vpop.f32.mrb[0].mxu0
        %v3997 = vadd.f32 %v3762, %v3996
        %v3998 = vpop.f32.mrb[0].mxu0
        %3999 = vmatprep.mubr.bf16.mxu0 0
        %4000 = vmatmul.mubr.bf16.gmra.mrb[0].mxu0 %v3869
        %v4001 = vpop.f32.mrb[0].mxu0
        %v4002 = vadd.f32 %v3767, %v4001
        %v4003 = vpop.f32.mrb[0].mxu0
        %v4004 = vpop.f32.mrb[0].mxu0
        %v4005 = vadd.f32 %v3770, %v4004
        %v4006 = vpop.f32.mrb[0].mxu0
        %4007 = vmatprep.mubr.bf16.mxu0 0
        %4008 = vmatmul.mubr.bf16.gmra.mrb[0].mxu0 %v3870
        %v4009 = vpop.f32.mrb[0].mxu0
        %v4010 = vadd.f32 %v3775, %v4009
        %v4011 = vpop.f32.mrb[0].mxu0
        %v4012 = vpop.f32.mrb[0].mxu0
        %v4013 = vadd.f32 %v3778, %v4012
        %v4014 = vpop.f32.mrb[0].mxu0
        %4015 = vmatprep.mubr.bf16.mxu0 0
        %4016 = vmatmul.mubr.bf16.gmra.mrb[0].mxu0 %v3871
        %v4017 = vpop.f32.mrb[0].mxu0
        %v4018 = vadd.f32 %v3783, %v4017
        %v4019 = vpop.f32.mrb[0].mxu0
        %v4020 = vpop.f32.mrb[0].mxu0
        %v4021 = vadd.f32 %v3786, %v4020
        %v4022 = vpop.f32.mrb[0].mxu0
        %4023 = vmatprep.mubr.bf16.mxu0 0
        %4024 = vmatmul.mubr.bf16.gmra.mrb[0].mxu0 %v3872
        %v4025 = vpop.f32.mrb[0].mxu0
        %v4026 = vadd.f32 %v3791, %v4025
        %v4027 = vpop.f32.mrb[0].mxu0
        %v4028 = vpop.f32.mrb[0].mxu0
        %v4029 = vadd.f32 %v3794, %v4028
        %v4030 = vpop.f32.mrb[0].mxu0
        %4031 = vmatprep.mubr.bf16.mxu0 0
        %4032 = vmatmul.mubr.bf16.gmra.mrb[0].mxu0 %v3873
        %v4033 = vpop.f32.mrb[0].mxu0
        %v4034 = vadd.f32 %v3799, %v4033
        %v4035 = vpop.f32.mrb[0].mxu0
        %v4036 = vpop.f32.mrb[0].mxu0
        %v4037 = vadd.f32 %v3802, %v4036
        %v4038 = vpop.f32.mrb[0].mxu0
        %4039 = vmatprep.mubr.bf16.mxu0 0
        %4040 = vmatmul.mubr.bf16.gmra.mrb[0].mxu0 %v3874
        %v4041 = vpop.f32.mrb[0].mxu0
        %v4042 = vadd.f32 %v3807, %v4041
        %v4043 = vpop.f32.mrb[0].mxu0
        %v4044 = vpop.f32.mrb[0].mxu0
        %v4045 = vadd.f32 %v3810, %v4044
        %v4046 = vpop.f32.mrb[0].mxu0
        %4047 = vmatprep.mubr.bf16.mxu0 0
        %4048 = vmatmul.mubr.bf16.gmra.mrb[0].mxu0 %v3875
        %v4049 = vpop.f32.mrb[0].mxu0
        %v4050 = vadd.f32 %v3815, %v4049
        %v4051 = vpop.f32.mrb[0].mxu0
        %v4052 = vpop.f32.mrb[0].mxu0
        %v4053 = vadd.f32 %v3818, %v4052
        %v4054 = vpop.f32.mrb[0].mxu0
        %4055 = vdwg.mxu0
        %v4056 = vld [vmem:[#allocation3] sm:$0xe]
        %v4057 = vld [vmem:[#allocation3 + $0xc] sm:$0xe]
        %v4058 = vld [vmem:[#allocation3 + $0x18] sm:$0xe]
        %v4059 = vld [vmem:[#allocation3 + $0x24] sm:$0xe]
        %v4060 = vld [vmem:[#allocation3 + $0x30] sm:$0xe]
        %v4061 = vld [vmem:[#allocation3 + $0x3c] sm:$0xe]
        %v4062 = vld [vmem:[#allocation3 + $0x48] sm:$0xe]
        %v4063 = vld [vmem:[#allocation3 + $0x54] sm:$0xe]
        %v4064 = vld [vmem:[#allocation3 + $0x60] sm:$0xe]
        %v4065 = vld [vmem:[#allocation3 + $0x6c] sm:$0xe]
        %v4066 = vld [vmem:[#allocation3 + $0x78] sm:$0xe]
        %vm4089 = vcmask 1046532
        %vm4090 = vmor %vm3220, %vm4089
        %v4091 = vrot.slane %v4056, 5
        %v4092 = vrot.slane %v4091, 4
        %v4093 = vrot.slane %v3279, 5
        %v4094 = vsel %vm4090, %v4092, %v4093
        %v4095 = vrot.slane %v4093, 4
        %v4096 = vrot.slane %v3316, 5
        %v4097 = vsel %vm4090, %v4095, %v4096
        %v4098 = vrot.slane %v4057, 5
        %v4099 = vrot.slane %v4098, 4
        %v4100 = vrot.slane %v3281, 5
        %v4101 = vsel %vm4090, %v4099, %v4100
        %v4102 = vrot.slane %v4100, 4
        %v4103 = vrot.slane %v3317, 5
        %v4104 = vsel %vm4090, %v4102, %v4103
        %v4105 = vrot.slane %v4058, 5
        %v4106 = vrot.slane %v4105, 4
        %v4107 = vrot.slane %v3283, 5
        %v4108 = vsel %vm4090, %v4106, %v4107
        %v4109 = vrot.slane %v4107, 4
        %v4110 = vrot.slane %v3318, 5
        %v4111 = vsel %vm4090, %v4109, %v4110
        %v4112 = vrot.slane %v4059, 5
        %v4113 = vrot.slane %v4112, 4
        %v4114 = vrot.slane %v3285, 5
        %v4115 = vsel %vm4090, %v4113, %v4114
        %v4116 = vrot.slane %v4114, 4
        %v4117 = vrot.slane %v3319, 5
        %v4118 = vsel %vm4090, %v4116, %v4117
        %v4119 = vrot.slane %v4060, 5
        %v4120 = vrot.slane %v4119, 4
        %v4121 = vrot.slane %v3287, 5
        %v4122 = vsel %vm4090, %v4120, %v4121
        %v4123 = vrot.slane %v4121, 4
        %v4124 = vrot.slane %v3320, 5
        %v4125 = vsel %vm4090, %v4123, %v4124
        %v4126 = vrot.slane %v4061, 5
        %v4127 = vrot.slane %v4126, 4
        %v4128 = vrot.slane %v3289, 5
        %v4129 = vsel %vm4090, %v4127, %v4128
        %v4130 = vrot.slane %v4128, 4
        %v4131 = vrot.slane %v3321, 5
        %v4132 = vsel %vm4090, %v4130, %v4131
        %v4133 = vrot.slane %v4062, 5
        %v4134 = vrot.slane %v4133, 4
        %v4135 = vrot.slane %v3291, 5
        %v4136 = vsel %vm4090, %v4134, %v4135
        %v4137 = vrot.slane %v4135, 4
        %v4138 = vrot.slane %v3322, 5
        %v4139 = vsel %vm4090, %v4137, %v4138
        %v4140 = vrot.slane %v4063, 5
        %v4141 = vrot.slane %v4140, 4
        %v4142 = vrot.slane %v3293, 5
        %v4143 = vsel %vm4090, %v4141, %v4142
        %v4144 = vrot.slane %v4142, 4
        %v4145 = vrot.slane %v3323, 5
        %v4146 = vsel %vm4090, %v4144, %v4145
        %v4147 = vrot.slane %v4064, 5
        %v4148 = vrot.slane %v4147, 4
        %v4149 = vrot.slane %v3295, 5
        %v4150 = vsel %vm4090, %v4148, %v4149
        %v4151 = vrot.slane %v4149, 4
        %v4152 = vrot.slane %v3324, 5
        %v4153 = vsel %vm4090, %v4151, %v4152
        %v4154 = vrot.slane %v4065, 5
        %v4155 = vrot.slane %v4154, 4
        %v4156 = vrot.slane %v3297, 5
        %v4157 = vsel %vm4090, %v4155, %v4156
        %v4158 = vrot.slane %v4156, 4
        %v4159 = vrot.slane %v3325, 5
        %v4160 = vsel %vm4090, %v4158, %v4159
        %v4161 = vrot.slane %v4066, 5
        %v4162 = vrot.slane %v4161, 4
        %v4163 = vrot.slane %v3299, 5
        %v4164 = vsel %vm4090, %v4162, %v4163
        %v4165 = vrot.slane %v4163, 4
        %v4166 = vrot.slane %v3326, 5
        %v4167 = vsel %vm4090, %v4165, %v4166
        %s4168 = scalar_lea.vmem [#allocation8], 128
        %v4169 = vld [vmem:[%s4168] sm:$0xf]
        %v4170 = vld [vmem:[%s4168 + $0x4] sm:$0xf]
        %v4171 = vld [vmem:[%s4168 + $0x8] sm:$0xf]
        %v4172 = vld [vmem:[%s4168 + $0xc] sm:$0xf]
        %v4173 = vld [vmem:[%s4168 + $0x10] sm:$0xf]
        %v4174 = vld [vmem:[%s4168 + $0x14] sm:$0xf]
        %v4175 = vld [vmem:[%s4168 + $0x18] sm:$0xf]
        %v4176 = vld [vmem:[%s4168 + $0x1c] sm:$0xf]
        %v4177 = vld [vmem:[%s4168 + $0x20] sm:$0xf]
        %v4178 = vld [vmem:[%s4168 + $0x24] sm:$0xf]
        %v4179 = vld [vmem:[%s4168 + $0x28] sm:$0xf]
        %v4180 = vld [vmem:[%s4168 + $0x2c] sm:$0xf]
        %v4181 = vld [vmem:[%s4168 + $0x30] sm:$0xf]
        %v4182 = vld [vmem:[%s4168 + $0x34] sm:$0xf]
        %v4183 = vld [vmem:[%s4168 + $0x38] sm:$0xf]
        %v4184 = vld [vmem:[%s4168 + $0x3c] sm:$0xf]
        %v4185 = vunpack.c.l.b16 %v4094
        %v4186 = vunpack.c.l.b16 %v4097
        %v4187 = vunpack.c.l.b16 %v4101
        %v4188 = vunpack.c.l.b16 %v4104
        %v4189 = vunpack.c.l.b16 %v4108
        %v4190 = vunpack.c.l.b16 %v4111
        %v4191 = vunpack.c.l.b16 %v4115
        %v4192 = vunpack.c.l.b16 %v4118
        %v4193 = vunpack.c.l.b16 %v4122
        %v4194 = vunpack.c.l.b16 %v4125
        %v4195 = vunpack.c.l.b16 %v4129
        %v4196 = vunpack.c.l.b16 %v4132
        %v4197 = vunpack.c.l.b16 %v4136
        %v4198 = vunpack.c.l.b16 %v4139
        %v4199 = vunpack.c.l.b16 %v4143
        %v4200 = vunpack.c.l.b16 %v4146
        %v4201 = vunpack.c.l.b16 %v4150
        %v4202 = vunpack.c.l.b16 %v4153
        %v4203 = vunpack.c.l.b16 %v4157
        %v4204 = vunpack.c.l.b16 %v4160
        %v4205 = vunpack.c.l.b16 %v4164
        %v4206 = vunpack.c.l.b16 %v4167
        %v4207 = vpack.c.b16 %v4186, %v4185
        %v4208 = vpack.c.b16 %v4188, %v4187
        %v4209 = vpack.c.b16 %v4190, %v4189
        %v4210 = vpack.c.b16 %v4192, %v4191
        %v4211 = vpack.c.b16 %v4194, %v4193
        %v4212 = vpack.c.b16 %v4196, %v4195
        %v4213 = vpack.c.b16 %v4198, %v4197
        %v4214 = vpack.c.b16 %v4200, %v4199
        %v4215 = vpack.c.b16 %v4202, %v4201
        %v4216 = vpack.c.b16 %v4204, %v4203
        %v4217 = vpack.c.b16 %v4206, %v4205
        %v4245 = vunpack.c.l.b16 %v4169
        %v4246 = vunpack.c.l.b16 %v4170
        %v4247 = vunpack.c.l.b16 %v4171
        %v4248 = vunpack.c.l.b16 %v4172
        %v4249 = vunpack.c.l.b16 %v4173
        %v4250 = vunpack.c.l.b16 %v4174
        %v4251 = vunpack.c.l.b16 %v4175
        %v4252 = vunpack.c.l.b16 %v4176
        %v4253 = vunpack.c.l.b16 %v4177
        %v4254 = vunpack.c.l.b16 %v4178
        %v4255 = vunpack.c.l.b16 %v4179
        %v4256 = vunpack.c.l.b16 %v4180
        %v4257 = vunpack.c.l.b16 %v4181
        %v4258 = vunpack.c.l.b16 %v4182
        %v4259 = vunpack.c.l.b16 %v4183
        %v4260 = vunpack.c.l.b16 %v4184
        %v4261 = vpack.c.b16 %v4246, %v4245
        %v4262 = vpack.c.b16 %v4248, %v4247
        %v4263 = vpack.c.b16 %v4250, %v4249
        %v4264 = vpack.c.b16 %v4252, %v4251
        %v4265 = vpack.c.b16 %v4254, %v4253
        %v4266 = vpack.c.b16 %v4256, %v4255
        %v4267 = vpack.c.b16 %v4258, %v4257
        %v4268 = vpack.c.b16 %v4260, %v4259
        %4277 = vmatprep.subr.bf16.mxu0 0
        %4278 = vmatpush1.bf16.msra.mxu0 %v4261
        %4279 = vmatprep.subr.bf16.mxu0 0
        %4280 = vmatpush1.bf16.msra.mxu0 %v4262
        %4281 = vmatprep.subr.bf16.mxu0 0
        %4282 = vmatpush1.bf16.msra.mxu0 %v4263
        %4283 = vmatprep.subr.bf16.mxu0 0
        %4284 = vmatpush1.bf16.msra.mxu0 %v4264
        %4285 = vmatprep.subr.bf16.mxu0 0
        %4286 = vmatpush1.bf16.msra.mxu0 %v4265
        %4287 = vmatprep.subr.bf16.mxu0 0
        %4288 = vmatpush1.bf16.msra.mxu0 %v4266
        %4289 = vmatprep.subr.bf16.mxu0 0
        %4290 = vmatpush1.bf16.msra.mxu0 %v4267
        %4291 = vmatprep.subr.bf16.mxu0 0
        %4292 = vmatpush1.bf16.msra.mxu0 %v4268
        %4293 = vmatprep.subr.bf16.mxu0 0
        %4294 = vmatpush1.bf16.msra.mxu0 0
        %4295 = vmatprep.subr.bf16.mxu0 0
        %4296 = vmatpush1.bf16.msra.mxu0 0
        %4297 = vmatprep.subr.bf16.mxu0 0
        %4298 = vmatpush1.bf16.msra.mxu0 0
        %4299 = vmatprep.subr.bf16.mxu0 0
        %4300 = vmatpush1.bf16.msra.mxu0 0
        %4301 = vmatprep.subr.bf16.mxu0 0
        %4302 = vmatpush1.bf16.msra.mxu0 0
        %4303 = vmatprep.subr.bf16.mxu0 0
        %4304 = vmatpush1.bf16.msra.mxu0 0
        %4305 = vmatprep.subr.bf16.mxu0 0
        %4306 = vmatpush1.bf16.msra.mxu0 0
        %4307 = vmatprep.subr.bf16.mxu0 0
        %4308 = vmatpush1.bf16.msra.mxu0 0
        %4309 = vmatprep.mubr.bf16.mxu0 0
        %4310 = vmatmul.mubr.bf16.gmra.mrb[0].mxu0 %v4207
        %v4311 = vpop.f32.mrb[0].mxu0
        %v4312 = vadd.f32 0.0, %v4311
        %v4313 = vpop.f32.mrb[0].mxu0
        %v4314 = vpop.f32.mrb[0].mxu0
        %v4315 = vadd.f32 0.0, %v4314
        %v4316 = vpop.f32.mrb[0].mxu0
        %4317 = vmatprep.mubr.bf16.mxu0 0
        %4318 = vmatmul.mubr.bf16.gmra.mrb[0].mxu0 %v4208
        %v4319 = vpop.f32.mrb[0].mxu0
        %v4320 = vadd.f32 0.0, %v4319
        %v4321 = vpop.f32.mrb[0].mxu0
        %v4322 = vpop.f32.mrb[0].mxu0
        %v4323 = vadd.f32 0.0, %v4322
        %v4324 = vpop.f32.mrb[0].mxu0
        %4325 = vmatprep.mubr.bf16.mxu0 0
        %4326 = vmatmul.mubr.bf16.gmra.mrb[0].mxu0 %v4209
        %v4327 = vpop.f32.mrb[0].mxu0
        %v4328 = vadd.f32 0.0, %v4327
        %v4329 = vpop.f32.mrb[0].mxu0
        %v4330 = vpop.f32.mrb[0].mxu0
        %v4331 = vadd.f32 0.0, %v4330
        %v4332 = vpop.f32.mrb[0].mxu0
        %4333 = vmatprep.mubr.bf16.mxu0 0
        %4334 = vmatmul.mubr.bf16.gmra.mrb[0].mxu0 %v4210
        %v4335 = vpop.f32.mrb[0].mxu0
        %v4336 = vadd.f32 0.0, %v4335
        %v4337 = vpop.f32.mrb[0].mxu0
        %v4338 = vpop.f32.mrb[0].mxu0
        %v4339 = vadd.f32 0.0, %v4338
        %v4340 = vpop.f32.mrb[0].mxu0
        %4341 = vmatprep.mubr.bf16.mxu0 0
        %4342 = vmatmul.mubr.bf16.gmra.mrb[0].mxu0 %v4211
        %v4343 = vpop.f32.mrb[0].mxu0
        %v4344 = vadd.f32 0.0, %v4343
        %v4345 = vpop.f32.mrb[0].mxu0
        %v4346 = vpop.f32.mrb[0].mxu0
        %v4347 = vadd.f32 0.0, %v4346
        %v4348 = vpop.f32.mrb[0].mxu0
        %4349 = vmatprep.mubr.bf16.mxu0 0
        %4350 = vmatmul.mubr.bf16.gmra.mrb[0].mxu0 %v4212
        %v4351 = vpop.f32.mrb[0].mxu0
        %v4352 = vadd.f32 0.0, %v4351
        %v4353 = vpop.f32.mrb[0].mxu0
        %v4354 = vpop.f32.mrb[0].mxu0
        %v4355 = vadd.f32 0.0, %v4354
        %v4356 = vpop.f32.mrb[0].mxu0
        %4357 = vmatprep.mubr.bf16.mxu0 0
        %4358 = vmatmul.mubr.bf16.gmra.mrb[0].mxu0 %v4213
        %v4359 = vpop.f32.mrb[0].mxu0
        %v4360 = vadd.f32 0.0, %v4359
        %v4361 = vpop.f32.mrb[0].mxu0
        %v4362 = vpop.f32.mrb[0].mxu0
        %v4363 = vadd.f32 0.0, %v4362
        %v4364 = vpop.f32.mrb[0].mxu0
        %4365 = vmatprep.mubr.bf16.mxu0 0
        %4366 = vmatmul.mubr.bf16.gmra.mrb[0].mxu0 %v4214
        %v4367 = vpop.f32.mrb[0].mxu0
        %v4368 = vadd.f32 0.0, %v4367
        %v4369 = vpop.f32.mrb[0].mxu0
        %v4370 = vpop.f32.mrb[0].mxu0
        %v4371 = vadd.f32 0.0, %v4370
        %v4372 = vpop.f32.mrb[0].mxu0
        %4373 = vmatprep.mubr.bf16.mxu0 0
        %4374 = vmatmul.mubr.bf16.gmra.mrb[0].mxu0 %v4215
        %v4375 = vpop.f32.mrb[0].mxu0
        %v4376 = vadd.f32 0.0, %v4375
        %v4377 = vpop.f32.mrb[0].mxu0
        %v4378 = vpop.f32.mrb[0].mxu0
        %v4379 = vadd.f32 0.0, %v4378
        %v4380 = vpop.f32.mrb[0].mxu0
        %4381 = vmatprep.mubr.bf16.mxu0 0
        %4382 = vmatmul.mubr.bf16.gmra.mrb[0].mxu0 %v4216
        %v4383 = vpop.f32.mrb[0].mxu0
        %v4384 = vadd.f32 0.0, %v4383
        %v4385 = vpop.f32.mrb[0].mxu0
        %v4386 = vpop.f32.mrb[0].mxu0
        %v4387 = vadd.f32 0.0, %v4386
        %v4388 = vpop.f32.mrb[0].mxu0
        %4389 = vmatprep.mubr.bf16.mxu0 0
        %4390 = vmatmul.mubr.bf16.gmra.mrb[0].mxu0 %v4217
        %v4391 = vpop.f32.mrb[0].mxu0
        %v4392 = vadd.f32 0.0, %v4391
        %v4393 = vpop.f32.mrb[0].mxu0
        %v4394 = vpop.f32.mrb[0].mxu0
        %v4395 = vadd.f32 0.0, %v4394
        %v4396 = vpop.f32.mrb[0].mxu0
        %4397 = vdwg.mxu0
        %v4398 = vadd.f32 %v3970, %v4312
        %v4399 = vadd.f32 %v3973, %v4315
        %v4400 = vadd.f32 %v3978, %v4320
        %v4401 = vadd.f32 %v3981, %v4323
        %v4402 = vadd.f32 %v3986, %v4328
        %v4403 = vadd.f32 %v3989, %v4331
        %v4404 = vadd.f32 %v3994, %v4336
        %v4405 = vadd.f32 %v3997, %v4339
        %v4406 = vadd.f32 %v4002, %v4344
        %v4407 = vadd.f32 %v4005, %v4347
        %v4408 = vadd.f32 %v4010, %v4352
        %v4409 = vadd.f32 %v4013, %v4355
        %v4410 = vadd.f32 %v4018, %v4360
        %v4411 = vadd.f32 %v4021, %v4363
        %v4412 = vadd.f32 %v4026, %v4368
        %v4413 = vadd.f32 %v4029, %v4371
        %v4414 = vadd.f32 %v4034, %v4376
        %v4415 = vadd.f32 %v4037, %v4379
        %v4416 = vadd.f32 %v4042, %v4384
        %v4417 = vadd.f32 %v4045, %v4387
        %v4418 = vadd.f32 %v4050, %v4392
        %v4419 = vadd.f32 %v4053, %v4395
        %s4420 = scalar_lea.vmem [#allocation3], 12
        %v4421 = vld [vmem:[%s4420] sm:$0xf]
        %v4422 = vld [vmem:[%s4420 + $0x4] sm:$0xf]
        %v4423 = vld [vmem:[%s4420 + $0xc] sm:$0xf]
        %v4424 = vld [vmem:[%s4420 + $0x10] sm:$0xf]
        %v4425 = vld [vmem:[%s4420 + $0x18] sm:$0xf]
        %v4426 = vld [vmem:[%s4420 + $0x1c] sm:$0xf]
        %v4427 = vld [vmem:[%s4420 + $0x24] sm:$0xf]
        %v4428 = vld [vmem:[%s4420 + $0x28] sm:$0xf]
        %v4429 = vld [vmem:[%s4420 + $0x30] sm:$0xf]
        %v4430 = vld [vmem:[%s4420 + $0x34] sm:$0xf]
        %v4431 = vld [vmem:[%s4420 + $0x3c] sm:$0xf]
        %v4432 = vld [vmem:[%s4420 + $0x40] sm:$0xf]
        %v4433 = vld [vmem:[%s4420 + $0x48] sm:$0xf]
        %v4434 = vld [vmem:[%s4420 + $0x4c] sm:$0xf]
        %v4435 = vld [vmem:[%s4420 + $0x54] sm:$0xf]
        %v4436 = vld [vmem:[%s4420 + $0x58] sm:$0xf]
        %v4437 = vld [vmem:[%s4420 + $0x60] sm:$0xf]
        %v4438 = vld [vmem:[%s4420 + $0x64] sm:$0xf]
        %v4439 = vld [vmem:[%s4420 + $0x6c] sm:$0xf]
        %v4440 = vld [vmem:[%s4420 + $0x70] sm:$0xf]
        %v4441 = vld [vmem:[%s4420 + $0x78] sm:$0xf]
        %v4442 = vld [vmem:[%s4420 + $0x7c] sm:$0xf]
        %s4443 = scalar_lea.vmem [#allocation8], 192
        %v4444 = vld [vmem:[%s4443] sm:$0xf]
        %v4445 = vld [vmem:[%s4443 + $0x4] sm:$0xf]
        %v4446 = vld [vmem:[%s4443 + $0x8] sm:$0xf]
        %v4447 = vld [vmem:[%s4443 + $0xc] sm:$0xf]
        %v4448 = vld [vmem:[%s4443 + $0x10] sm:$0xf]
        %v4449 = vld [vmem:[%s4443 + $0x14] sm:$0xf]
        %v4450 = vld [vmem:[%s4443 + $0x18] sm:$0xf]
        %v4451 = vld [vmem:[%s4443 + $0x1c] sm:$0xf]
        %v4452 = vld [vmem:[%s4443 + $0x20] sm:$0xf]
        %v4453 = vld [vmem:[%s4443 + $0x24] sm:$0xf]
        %v4454 = vld [vmem:[%s4443 + $0x28] sm:$0xf]
        %v4455 = vld [vmem:[%s4443 + $0x2c] sm:$0xf]
        %v4456 = vld [vmem:[%s4443 + $0x30] sm:$0xf]
        %v4457 = vld [vmem:[%s4443 + $0x34] sm:$0xf]
        %v4458 = vld [vmem:[%s4443 + $0x38] sm:$0xf]
        %v4459 = vld [vmem:[%s4443 + $0x3c] sm:$0xf]
        %v4482 = vunpack.c.l.b16 %v4421
        %v4483 = vunpack.c.l.b16 %v4422
        %v4484 = vunpack.c.l.b16 %v4423
        %v4485 = vunpack.c.l.b16 %v4424
        %v4486 = vunpack.c.l.b16 %v4425
        %v4487 = vunpack.c.l.b16 %v4426
        %v4488 = vunpack.c.l.b16 %v4427
        %v4489 = vunpack.c.l.b16 %v4428
        %v4490 = vunpack.c.l.b16 %v4429
        %v4491 = vunpack.c.l.b16 %v4430
        %v4492 = vunpack.c.l.b16 %v4431
        %v4493 = vunpack.c.l.b16 %v4432
        %v4494 = vunpack.c.l.b16 %v4433
        %v4495 = vunpack.c.l.b16 %v4434
        %v4496 = vunpack.c.l.b16 %v4435
        %v4497 = vunpack.c.l.b16 %v4436
        %v4498 = vunpack.c.l.b16 %v4437
        %v4499 = vunpack.c.l.b16 %v4438
        %v4500 = vunpack.c.l.b16 %v4439
        %v4501 = vunpack.c.l.b16 %v4440
        %v4502 = vunpack.c.l.b16 %v4441
        %v4503 = vunpack.c.l.b16 %v4442
        %v4504 = vpack.c.b16 %v4483, %v4482
        %v4505 = vpack.c.b16 %v4485, %v4484
        %v4506 = vpack.c.b16 %v4487, %v4486
        %v4507 = vpack.c.b16 %v4489, %v4488
        %v4508 = vpack.c.b16 %v4491, %v4490
        %v4509 = vpack.c.b16 %v4493, %v4492
        %v4510 = vpack.c.b16 %v4495, %v4494
        %v4511 = vpack.c.b16 %v4497, %v4496
        %v4512 = vpack.c.b16 %v4499, %v4498
        %v4513 = vpack.c.b16 %v4501, %v4500
        %v4514 = vpack.c.b16 %v4503, %v4502
        %v4542 = vunpack.c.l.b16 %v4444
        %v4543 = vunpack.c.l.b16 %v4445
        %v4544 = vunpack.c.l.b16 %v4446
        %v4545 = vunpack.c.l.b16 %v4447
        %v4546 = vunpack.c.l.b16 %v4448
        %v4547 = vunpack.c.l.b16 %v4449
        %v4548 = vunpack.c.l.b16 %v4450
        %v4549 = vunpack.c.l.b16 %v4451
        %v4550 = vunpack.c.l.b16 %v4452
        %v4551 = vunpack.c.l.b16 %v4453
        %v4552 = vunpack.c.l.b16 %v4454
        %v4553 = vunpack.c.l.b16 %v4455
        %v4554 = vunpack.c.l.b16 %v4456
        %v4555 = vunpack.c.l.b16 %v4457
        %v4556 = vunpack.c.l.b16 %v4458
        %v4557 = vunpack.c.l.b16 %v4459
        %v4558 = vpack.c.b16 %v4543, %v4542
        %v4559 = vpack.c.b16 %v4545, %v4544
        %v4560 = vpack.c.b16 %v4547, %v4546
        %v4561 = vpack.c.b16 %v4549, %v4548
        %v4562 = vpack.c.b16 %v4551, %v4550
        %v4563 = vpack.c.b16 %v4553, %v4552
        %v4564 = vpack.c.b16 %v4555, %v4554
        %v4565 = vpack.c.b16 %v4557, %v4556
        %4574 = vmatprep.subr.bf16.mxu0 0
        %4575 = vmatpush1.bf16.msra.mxu0 %v4558
        %4576 = vmatprep.subr.bf16.mxu0 0
        %4577 = vmatpush1.bf16.msra.mxu0 %v4559
        %4578 = vmatprep.subr.bf16.mxu0 0
        %4579 = vmatpush1.bf16.msra.mxu0 %v4560
        %4580 = vmatprep.subr.bf16.mxu0 0
        %4581 = vmatpush1.bf16.msra.mxu0 %v4561
        %4582 = vmatprep.subr.bf16.mxu0 0
        %4583 = vmatpush1.bf16.msra.mxu0 %v4562
        %4584 = vmatprep.subr.bf16.mxu0 0
        %4585 = vmatpush1.bf16.msra.mxu0 %v4563
        %4586 = vmatprep.subr.bf16.mxu0 0
        %4587 = vmatpush1.bf16.msra.mxu0 %v4564
        %4588 = vmatprep.subr.bf16.mxu0 0
        %4589 = vmatpush1.bf16.msra.mxu0 %v4565
        %4590 = vmatprep.subr.bf16.mxu0 0
        %4591 = vmatpush1.bf16.msra.mxu0 0
        %4592 = vmatprep.subr.bf16.mxu0 0
        %4593 = vmatpush1.bf16.msra.mxu0 0
        %4594 = vmatprep.subr.bf16.mxu0 0
        %4595 = vmatpush1.bf16.msra.mxu0 0
        %4596 = vmatprep.subr.bf16.mxu0 0
        %4597 = vmatpush1.bf16.msra.mxu0 0
        %4598 = vmatprep.subr.bf16.mxu0 0
        %4599 = vmatpush1.bf16.msra.mxu0 0
        %4600 = vmatprep.subr.bf16.mxu0 0
        %4601 = vmatpush1.bf16.msra.mxu0 0
        %4602 = vmatprep.subr.bf16.mxu0 0
        %4603 = vmatpush1.bf16.msra.mxu0 0
        %4604 = vmatprep.subr.bf16.mxu0 0
        %4605 = vmatpush1.bf16.msra.mxu0 0
        %4606 = vmatprep.mubr.bf16.mxu0 0
        %4607 = vmatmul.mubr.bf16.gmra.mrb[0].mxu0 %v4504
        %v4608 = vpop.f32.mrb[0].mxu0
        %v4609 = vadd.f32 0.0, %v4608
        %v4610 = vpop.f32.mrb[0].mxu0
        %v4611 = vpop.f32.mrb[0].mxu0
        %v4612 = vadd.f32 0.0, %v4611
        %v4613 = vpop.f32.mrb[0].mxu0
        %4614 = vmatprep.mubr.bf16.mxu0 0
        %4615 = vmatmul.mubr.bf16.gmra.mrb[0].mxu0 %v4505
        %v4616 = vpop.f32.mrb[0].mxu0
        %v4617 = vadd.f32 0.0, %v4616
        %v4618 = vpop.f32.mrb[0].mxu0
        %v4619 = vpop.f32.mrb[0].mxu0
        %v4620 = vadd.f32 0.0, %v4619
        %v4621 = vpop.f32.mrb[0].mxu0
        %4622 = vmatprep.mubr.bf16.mxu0 0
        %4623 = vmatmul.mubr.bf16.gmra.mrb[0].mxu0 %v4506
        %v4624 = vpop.f32.mrb[0].mxu0
        %v4625 = vadd.f32 0.0, %v4624
        %v4626 = vpop.f32.mrb[0].mxu0
        %v4627 = vpop.f32.mrb[0].mxu0
        %v4628 = vadd.f32 0.0, %v4627
        %v4629 = vpop.f32.mrb[0].mxu0
        %4630 = vmatprep.mubr.bf16.mxu0 0
        %4631 = vmatmul.mubr.bf16.gmra.mrb[0].mxu0 %v4507
        %v4632 = vpop.f32.mrb[0].mxu0
        %v4633 = vadd.f32 0.0, %v4632
        %v4634 = vpop.f32.mrb[0].mxu0
        %v4635 = vpop.f32.mrb[0].mxu0
        %v4636 = vadd.f32 0.0, %v4635
        %v4637 = vpop.f32.mrb[0].mxu0
        %4638 = vmatprep.mubr.bf16.mxu0 0
        %4639 = vmatmul.mubr.bf16.gmra.mrb[0].mxu0 %v4508
        %v4640 = vpop.f32.mrb[0].mxu0
        %v4641 = vadd.f32 0.0, %v4640
        %v4642 = vpop.f32.mrb[0].mxu0
        %v4643 = vpop.f32.mrb[0].mxu0
        %v4644 = vadd.f32 0.0, %v4643
        %v4645 = vpop.f32.mrb[0].mxu0
        %4646 = vmatprep.mubr.bf16.mxu0 0
        %4647 = vmatmul.mubr.bf16.gmra.mrb[0].mxu0 %v4509
        %v4648 = vpop.f32.mrb[0].mxu0
        %v4649 = vadd.f32 0.0, %v4648
        %v4650 = vpop.f32.mrb[0].mxu0
        %v4651 = vpop.f32.mrb[0].mxu0
        %v4652 = vadd.f32 0.0, %v4651
        %v4653 = vpop.f32.mrb[0].mxu0
        %4654 = vmatprep.mubr.bf16.mxu0 0
        %4655 = vmatmul.mubr.bf16.gmra.mrb[0].mxu0 %v4510
        %v4656 = vpop.f32.mrb[0].mxu0
        %v4657 = vadd.f32 0.0, %v4656
        %v4658 = vpop.f32.mrb[0].mxu0
        %v4659 = vpop.f32.mrb[0].mxu0
        %v4660 = vadd.f32 0.0, %v4659
        %v4661 = vpop.f32.mrb[0].mxu0
        %4662 = vmatprep.mubr.bf16.mxu0 0
        %4663 = vmatmul.mubr.bf16.gmra.mrb[0].mxu0 %v4511
        %v4664 = vpop.f32.mrb[0].mxu0
        %v4665 = vadd.f32 0.0, %v4664
        %v4666 = vpop.f32.mrb[0].mxu0
        %v4667 = vpop.f32.mrb[0].mxu0
        %v4668 = vadd.f32 0.0, %v4667
        %v4669 = vpop.f32.mrb[0].mxu0
        %4670 = vmatprep.mubr.bf16.mxu0 0
        %4671 = vmatmul.mubr.bf16.gmra.mrb[0].mxu0 %v4512
        %v4672 = vpop.f32.mrb[0].mxu0
        %v4673 = vadd.f32 0.0, %v4672
        %v4674 = vpop.f32.mrb[0].mxu0
        %v4675 = vpop.f32.mrb[0].mxu0
        %v4676 = vadd.f32 0.0, %v4675
        %v4677 = vpop.f32.mrb[0].mxu0
        %4678 = vmatprep.mubr.bf16.mxu0 0
        %4679 = vmatmul.mubr.bf16.gmra.mrb[0].mxu0 %v4513
        %v4680 = vpop.f32.mrb[0].mxu0
        %v4681 = vadd.f32 0.0, %v4680
        %v4682 = vpop.f32.mrb[0].mxu0
        %v4683 = vpop.f32.mrb[0].mxu0
        %v4684 = vadd.f32 0.0, %v4683
        %v4685 = vpop.f32.mrb[0].mxu0
        %4686 = vmatprep.mubr.bf16.mxu0 0
        %4687 = vmatmul.mubr.bf16.gmra.mrb[0].mxu0 %v4514
        %v4688 = vpop.f32.mrb[0].mxu0
        %v4689 = vadd.f32 0.0, %v4688
        %v4690 = vpop.f32.mrb[0].mxu0
        %v4691 = vpop.f32.mrb[0].mxu0
        %v4692 = vadd.f32 0.0, %v4691
        %v4693 = vpop.f32.mrb[0].mxu0
        %4694 = vdwg.mxu0
        %v4695 = vadd.f32 %v4398, %v4609
        %v4696 = vadd.f32 %v4399, %v4612
        %v4697 = vadd.f32 %v4400, %v4617
        %v4698 = vadd.f32 %v4401, %v4620
        %v4699 = vadd.f32 %v4402, %v4625
        %v4700 = vadd.f32 %v4403, %v4628
        %v4701 = vadd.f32 %v4404, %v4633
        %v4702 = vadd.f32 %v4405, %v4636
        %v4703 = vadd.f32 %v4406, %v4641
        %v4704 = vadd.f32 %v4407, %v4644
        %v4705 = vadd.f32 %v4408, %v4649
        %v4706 = vadd.f32 %v4409, %v4652
        %v4707 = vadd.f32 %v4410, %v4657
        %v4708 = vadd.f32 %v4411, %v4660
        %v4709 = vadd.f32 %v4412, %v4665
        %v4710 = vadd.f32 %v4413, %v4668
        %v4711 = vadd.f32 %v4414, %v4673
        %v4712 = vadd.f32 %v4415, %v4676
        %v4713 = vadd.f32 %v4416, %v4681
        %v4714 = vadd.f32 %v4417, %v4684
        %v4715 = vadd.f32 %v4418, %v4689
        %v4716 = vadd.f32 %v4419, %v4692
        %v4717 = vld [vmem:[%s4420] sm:$0xf]
        %v4718 = vld [vmem:[%s4420 + $0x4] sm:$0xf]
        %v4719 = vld [vmem:[%s4420 + $0x8] sm:$0x1]
        %v4720 = vld [vmem:[%s4420 + $0xc] sm:$0xf]
        %v4721 = vld [vmem:[%s4420 + $0x10] sm:$0xf]
        %v4722 = vld [vmem:[%s4420 + $0x14] sm:$0x1]
        %v4723 = vld [vmem:[%s4420 + $0x18] sm:$0xf]
        %v4724 = vld [vmem:[%s4420 + $0x1c] sm:$0xf]
        %v4725 = vld [vmem:[%s4420 + $0x20] sm:$0x1]
        %v4726 = vld [vmem:[%s4420 + $0x24] sm:$0xf]
        %v4727 = vld [vmem:[%s4420 + $0x28] sm:$0xf]
        %v4728 = vld [vmem:[%s4420 + $0x2c] sm:$0x1]
        %v4729 = vld [vmem:[%s4420 + $0x30] sm:$0xf]
        %v4730 = vld [vmem:[%s4420 + $0x34] sm:$0xf]
        %v4731 = vld [vmem:[%s4420 + $0x38] sm:$0x1]
        %v4732 = vld [vmem:[%s4420 + $0x3c] sm:$0xf]
        %v4733 = vld [vmem:[%s4420 + $0x40] sm:$0xf]
        %v4734 = vld [vmem:[%s4420 + $0x44] sm:$0x1]
        %v4735 = vld [vmem:[%s4420 + $0x48] sm:$0xf]
        %v4736 = vld [vmem:[%s4420 + $0x4c] sm:$0xf]
        %v4737 = vld [vmem:[%s4420 + $0x50] sm:$0x1]
        %v4738 = vld [vmem:[%s4420 + $0x54] sm:$0xf]
        %v4739 = vld [vmem:[%s4420 + $0x58] sm:$0xf]
        %v4740 = vld [vmem:[%s4420 + $0x5c] sm:$0x1]
        %v4741 = vld [vmem:[%s4420 + $0x60] sm:$0xf]
        %v4742 = vld [vmem:[%s4420 + $0x64] sm:$0xf]
        %v4743 = vld [vmem:[%s4420 + $0x68] sm:$0x1]
        %v4744 = vld [vmem:[%s4420 + $0x6c] sm:$0xf]
        %v4745 = vld [vmem:[%s4420 + $0x70] sm:$0xf]
        %v4746 = vld [vmem:[%s4420 + $0x74] sm:$0x1]
        %v4747 = vld [vmem:[%s4420 + $0x78] sm:$0xf]
        %v4748 = vld [vmem:[%s4420 + $0x7c] sm:$0xf]
        %v4749 = vld [vmem:[%s4420 + $0x80] sm:$0x1]
        %v4751 = vshrl.u32 %v4717, 16
        %v4753 = vrot.slane %v4751, 4
        %v4754 = vshll.u32 %v4717, 16
        %v4756 = vrot.slane %v4754, 5
        %v4757 = vor.u32 %v4753, %v4756
        %v4758 = vrot.slane %v4757, 4
        %v4760 = vshll.u32 %v4718, 16
        %v4762 = vrot.slane %v4760, 5
        %v4763 = vsel %vm1681, %v4758, %v4762
        %v4764 = vshrl.u32 %v4718, 16
        %v4766 = vrot.slane %v4764, 4
        %v4767 = vor.u32 %v4766, %v4762
        %v4768 = vrot.slane %v4767, 4
        %v4770 = vshll.u32 %v4719, 16
        %v4772 = vrot.slane %v4770, 5
        %v4773 = vsel %vm1681, %v4768, %v4772
        %v4775 = vshrl.u32 %v4720, 16
        %v4777 = vrot.slane %v4775, 4
        %v4778 = vshll.u32 %v4720, 16
        %v4780 = vrot.slane %v4778, 5
        %v4781 = vor.u32 %v4777, %v4780
        %v4782 = vrot.slane %v4781, 4
        %v4784 = vshll.u32 %v4721, 16
        %v4786 = vrot.slane %v4784, 5
        %v4787 = vsel %vm1681, %v4782, %v4786
        %v4788 = vshrl.u32 %v4721, 16
        %v4790 = vrot.slane %v4788, 4
        %v4791 = vor.u32 %v4790, %v4786
        %v4792 = vrot.slane %v4791, 4
        %v4794 = vshll.u32 %v4722, 16
        %v4796 = vrot.slane %v4794, 5
        %v4797 = vsel %vm1681, %v4792, %v4796
        %v4799 = vshrl.u32 %v4723, 16
        %v4801 = vrot.slane %v4799, 4
        %v4802 = vshll.u32 %v4723, 16
        %v4804 = vrot.slane %v4802, 5
        %v4805 = vor.u32 %v4801, %v4804
        %v4806 = vrot.slane %v4805, 4
        %v4808 = vshll.u32 %v4724, 16
        %v4810 = vrot.slane %v4808, 5
        %v4811 = vsel %vm1681, %v4806, %v4810
        %v4812 = vshrl.u32 %v4724, 16
        %v4814 = vrot.slane %v4812, 4
        %v4815 = vor.u32 %v4814, %v4810
        %v4816 = vrot.slane %v4815, 4
        %v4818 = vshll.u32 %v4725, 16
        %v4820 = vrot.slane %v4818, 5
        %v4821 = vsel %vm1681, %v4816, %v4820
        %v4823 = vshrl.u32 %v4726, 16
        %v4825 = vrot.slane %v4823, 4
        %v4826 = vshll.u32 %v4726, 16
        %v4828 = vrot.slane %v4826, 5
        %v4829 = vor.u32 %v4825, %v4828
        %v4830 = vrot.slane %v4829, 4
        %v4832 = vshll.u32 %v4727, 16
        %v4834 = vrot.slane %v4832, 5
        %v4835 = vsel %vm1681, %v4830, %v4834
        %v4836 = vshrl.u32 %v4727, 16
        %v4838 = vrot.slane %v4836, 4
        %v4839 = vor.u32 %v4838, %v4834
        %v4840 = vrot.slane %v4839, 4
        %v4842 = vshll.u32 %v4728, 16
        %v4844 = vrot.slane %v4842, 5
        %v4845 = vsel %vm1681, %v4840, %v4844
        %v4847 = vshrl.u32 %v4729, 16
        %v4849 = vrot.slane %v4847, 4
        %v4850 = vshll.u32 %v4729, 16
        %v4852 = vrot.slane %v4850, 5
        %v4853 = vor.u32 %v4849, %v4852
        %v4854 = vrot.slane %v4853, 4
        %v4856 = vshll.u32 %v4730, 16
        %v4858 = vrot.slane %v4856, 5
        %v4859 = vsel %vm1681, %v4854, %v4858
        %v4860 = vshrl.u32 %v4730, 16
        %v4862 = vrot.slane %v4860, 4
        %v4863 = vor.u32 %v4862, %v4858
        %v4864 = vrot.slane %v4863, 4
        %v4866 = vshll.u32 %v4731, 16
        %v4868 = vrot.slane %v4866, 5
        %v4869 = vsel %vm1681, %v4864, %v4868
        %v4871 = vshrl.u32 %v4732, 16
        %v4873 = vrot.slane %v4871, 4
        %v4874 = vshll.u32 %v4732, 16
        %v4876 = vrot.slane %v4874, 5
        %v4877 = vor.u32 %v4873, %v4876
        %v4878 = vrot.slane %v4877, 4
        %v4880 = vshll.u32 %v4733, 16
        %v4882 = vrot.slane %v4880, 5
        %v4883 = vsel %vm1681, %v4878, %v4882
        %v4884 = vshrl.u32 %v4733, 16
        %v4886 = vrot.slane %v4884, 4
        %v4887 = vor.u32 %v4886, %v4882
        %v4888 = vrot.slane %v4887, 4
        %v4890 = vshll.u32 %v4734, 16
        %v4892 = vrot.slane %v4890, 5
        %v4893 = vsel %vm1681, %v4888, %v4892
        %v4895 = vshrl.u32 %v4735, 16
        %v4897 = vrot.slane %v4895, 4
        %v4898 = vshll.u32 %v4735, 16
        %v4900 = vrot.slane %v4898, 5
        %v4901 = vor.u32 %v4897, %v4900
        %v4902 = vrot.slane %v4901, 4
        %v4904 = vshll.u32 %v4736, 16
        %v4906 = vrot.slane %v4904, 5
        %v4907 = vsel %vm1681, %v4902, %v4906
        %v4908 = vshrl.u32 %v4736, 16
        %v4910 = vrot.slane %v4908, 4
        %v4911 = vor.u32 %v4910, %v4906
        %v4912 = vrot.slane %v4911, 4
        %v4914 = vshll.u32 %v4737, 16
        %v4916 = vrot.slane %v4914, 5
        %v4917 = vsel %vm1681, %v4912, %v4916
        %v4919 = vshrl.u32 %v4738, 16
        %v4921 = vrot.slane %v4919, 4
        %v4922 = vshll.u32 %v4738, 16
        %v4924 = vrot.slane %v4922, 5
        %v4925 = vor.u32 %v4921, %v4924
        %v4926 = vrot.slane %v4925, 4
        %v4928 = vshll.u32 %v4739, 16
        %v4930 = vrot.slane %v4928, 5
        %v4931 = vsel %vm1681, %v4926, %v4930
        %v4932 = vshrl.u32 %v4739, 16
        %v4934 = vrot.slane %v4932, 4
        %v4935 = vor.u32 %v4934, %v4930
        %v4936 = vrot.slane %v4935, 4
        %v4938 = vshll.u32 %v4740, 16
        %v4940 = vrot.slane %v4938, 5
        %v4941 = vsel %vm1681, %v4936, %v4940
        %v4943 = vshrl.u32 %v4741, 16
        %v4945 = vrot.slane %v4943, 4
        %v4946 = vshll.u32 %v4741, 16
        %v4948 = vrot.slane %v4946, 5
        %v4949 = vor.u32 %v4945, %v4948
        %v4950 = vrot.slane %v4949, 4
        %v4952 = vshll.u32 %v4742, 16
        %v4954 = vrot.slane %v4952, 5
        %v4955 = vsel %vm1681, %v4950, %v4954
        %v4956 = vshrl.u32 %v4742, 16
        %v4958 = vrot.slane %v4956, 4
        %v4959 = vor.u32 %v4958, %v4954
        %v4960 = vrot.slane %v4959, 4
        %v4962 = vshll.u32 %v4743, 16
        %v4964 = vrot.slane %v4962, 5
        %v4965 = vsel %vm1681, %v4960, %v4964
        %v4967 = vshrl.u32 %v4744, 16
        %v4969 = vrot.slane %v4967, 4
        %v4970 = vshll.u32 %v4744, 16
        %v4972 = vrot.slane %v4970, 5
        %v4973 = vor.u32 %v4969, %v4972
        %v4974 = vrot.slane %v4973, 4
        %v4976 = vshll.u32 %v4745, 16
        %v4978 = vrot.slane %v4976, 5
        %v4979 = vsel %vm1681, %v4974, %v4978
        %v4980 = vshrl.u32 %v4745, 16
        %v4982 = vrot.slane %v4980, 4
        %v4983 = vor.u32 %v4982, %v4978
        %v4984 = vrot.slane %v4983, 4
        %v4986 = vshll.u32 %v4746, 16
        %v4988 = vrot.slane %v4986, 5
        %v4989 = vsel %vm1681, %v4984, %v4988
        %v4991 = vshrl.u32 %v4747, 16
        %v4993 = vrot.slane %v4991, 4
        %v4994 = vshll.u32 %v4747, 16
        %v4996 = vrot.slane %v4994, 5
        %v4997 = vor.u32 %v4993, %v4996
        %v4998 = vrot.slane %v4997, 4
        %v5000 = vshll.u32 %v4748, 16
        %v5002 = vrot.slane %v5000, 5
        %v5003 = vsel %vm1681, %v4998, %v5002
        %v5004 = vshrl.u32 %v4748, 16
        %v5006 = vrot.slane %v5004, 4
        %v5007 = vor.u32 %v5006, %v5002
        %v5008 = vrot.slane %v5007, 4
        %v5010 = vshll.u32 %v4749, 16
        %v5012 = vrot.slane %v5010, 5
        %v5013 = vsel %vm1681, %v5008, %v5012
        %s5014 = scalar_lea.vmem [#allocation8], 256
        %v5015 = vld [vmem:[%s5014] sm:$0xf]
        %v5016 = vld [vmem:[%s5014 + $0x4] sm:$0xf]
        %v5017 = vld [vmem:[%s5014 + $0x8] sm:$0xf]
        %v5018 = vld [vmem:[%s5014 + $0xc] sm:$0xf]
        %v5019 = vld [vmem:[%s5014 + $0x10] sm:$0xf]
        %v5020 = vld [vmem:[%s5014 + $0x14] sm:$0xf]
        %v5021 = vld [vmem:[%s5014 + $0x18] sm:$0xf]
        %v5022 = vld [vmem:[%s5014 + $0x1c] sm:$0xf]
        %v5023 = vld [vmem:[%s5014 + $0x20] sm:$0xf]
        %v5024 = vld [vmem:[%s5014 + $0x24] sm:$0xf]
        %v5025 = vld [vmem:[%s5014 + $0x28] sm:$0xf]
        %v5026 = vld [vmem:[%s5014 + $0x2c] sm:$0xf]
        %v5027 = vld [vmem:[%s5014 + $0x30] sm:$0xf]
        %v5028 = vld [vmem:[%s5014 + $0x34] sm:$0xf]
        %v5029 = vld [vmem:[%s5014 + $0x38] sm:$0xf]
        %v5030 = vld [vmem:[%s5014 + $0x3c] sm:$0xf]
        %v5031 = vunpack.c.l.b16 %v4763
        %v5032 = vunpack.c.l.b16 %v4773
        %v5033 = vunpack.c.l.b16 %v4787
        %v5034 = vunpack.c.l.b16 %v4797
        %v5035 = vunpack.c.l.b16 %v4811
        %v5036 = vunpack.c.l.b16 %v4821
        %v5037 = vunpack.c.l.b16 %v4835
        %v5038 = vunpack.c.l.b16 %v4845
        %v5039 = vunpack.c.l.b16 %v4859
        %v5040 = vunpack.c.l.b16 %v4869
        %v5041 = vunpack.c.l.b16 %v4883
        %v5042 = vunpack.c.l.b16 %v4893
        %v5043 = vunpack.c.l.b16 %v4907
        %v5044 = vunpack.c.l.b16 %v4917
        %v5045 = vunpack.c.l.b16 %v4931
        %v5046 = vunpack.c.l.b16 %v4941
        %v5047 = vunpack.c.l.b16 %v4955
        %v5048 = vunpack.c.l.b16 %v4965
        %v5049 = vunpack.c.l.b16 %v4979
        %v5050 = vunpack.c.l.b16 %v4989
        %v5051 = vunpack.c.l.b16 %v5003
        %v5052 = vunpack.c.l.b16 %v5013
        %v5053 = vpack.c.b16 %v5032, %v5031
        %v5054 = vpack.c.b16 %v5034, %v5033
        %v5055 = vpack.c.b16 %v5036, %v5035
        %v5056 = vpack.c.b16 %v5038, %v5037
        %v5057 = vpack.c.b16 %v5040, %v5039
        %v5058 = vpack.c.b16 %v5042, %v5041
        %v5059 = vpack.c.b16 %v5044, %v5043
        %v5060 = vpack.c.b16 %v5046, %v5045
        %v5061 = vpack.c.b16 %v5048, %v5047
        %v5062 = vpack.c.b16 %v5050, %v5049
        %v5063 = vpack.c.b16 %v5052, %v5051
        %v5091 = vunpack.c.l.b16 %v5015
        %v5092 = vunpack.c.l.b16 %v5016
        %v5093 = vunpack.c.l.b16 %v5017
        %v5094 = vunpack.c.l.b16 %v5018
        %v5095 = vunpack.c.l.b16 %v5019
        %v5096 = vunpack.c.l.b16 %v5020
        %v5097 = vunpack.c.l.b16 %v5021
        %v5098 = vunpack.c.l.b16 %v5022
        %v5099 = vunpack.c.l.b16 %v5023
        %v5100 = vunpack.c.l.b16 %v5024
        %v5101 = vunpack.c.l.b16 %v5025
        %v5102 = vunpack.c.l.b16 %v5026
        %v5103 = vunpack.c.l.b16 %v5027
        %v5104 = vunpack.c.l.b16 %v5028
        %v5105 = vunpack.c.l.b16 %v5029
        %v5106 = vunpack.c.l.b16 %v5030
        %v5107 = vpack.c.b16 %v5092, %v5091
        %v5108 = vpack.c.b16 %v5094, %v5093
        %v5109 = vpack.c.b16 %v5096, %v5095
        %v5110 = vpack.c.b16 %v5098, %v5097
        %v5111 = vpack.c.b16 %v5100, %v5099
        %v5112 = vpack.c.b16 %v5102, %v5101
        %v5113 = vpack.c.b16 %v5104, %v5103
        %v5114 = vpack.c.b16 %v5106, %v5105
        %5123 = vmatprep.subr.bf16.mxu0 0
        %5124 = vmatpush1.bf16.msra.mxu0 %v5107
        %5125 = vmatprep.subr.bf16.mxu0 0
        %5126 = vmatpush1.bf16.msra.mxu0 %v5108
        %5127 = vmatprep.subr.bf16.mxu0 0
        %5128 = vmatpush1.bf16.msra.mxu0 %v5109
        %5129 = vmatprep.subr.bf16.mxu0 0
        %5130 = vmatpush1.bf16.msra.mxu0 %v5110
        %5131 = vmatprep.subr.bf16.mxu0 0
        %5132 = vmatpush1.bf16.msra.mxu0 %v5111
        %5133 = vmatprep.subr.bf16.mxu0 0
        %5134 = vmatpush1.bf16.msra.mxu0 %v5112
        %5135 = vmatprep.subr.bf16.mxu0 0
        %5136 = vmatpush1.bf16.msra.mxu0 %v5113
        %5137 = vmatprep.subr.bf16.mxu0 0
        %5138 = vmatpush1.bf16.msra.mxu0 %v5114
        %5139 = vmatprep.subr.bf16.mxu0 0
        %5140 = vmatpush1.bf16.msra.mxu0 0
        %5141 = vmatprep.subr.bf16.mxu0 0
        %5142 = vmatpush1.bf16.msra.mxu0 0
        %5143 = vmatprep.subr.bf16.mxu0 0
        %5144 = vmatpush1.bf16.msra.mxu0 0
        %5145 = vmatprep.subr.bf16.mxu0 0
        %5146 = vmatpush1.bf16.msra.mxu0 0
        %5147 = vmatprep.subr.bf16.mxu0 0
        %5148 = vmatpush1.bf16.msra.mxu0 0
        %5149 = vmatprep.subr.bf16.mxu0 0
        %5150 = vmatpush1.bf16.msra.mxu0 0
        %5151 = vmatprep.subr.bf16.mxu0 0
        %5152 = vmatpush1.bf16.msra.mxu0 0
        %5153 = vmatprep.subr.bf16.mxu0 0
        %5154 = vmatpush1.bf16.msra.mxu0 0
        %5155 = vmatprep.mubr.bf16.mxu0 0
        %5156 = vmatmul.mubr.bf16.gmra.mrb[0].mxu0 %v5053
        %v5157 = vpop.f32.mrb[0].mxu0
        %v5158 = vadd.f32 0.0, %v5157
        %v5159 = vpop.f32.mrb[0].mxu0
        %v5160 = vpop.f32.mrb[0].mxu0
        %v5161 = vadd.f32 0.0, %v5160
        %v5162 = vpop.f32.mrb[0].mxu0
        %5163 = vmatprep.mubr.bf16.mxu0 0
        %5164 = vmatmul.mubr.bf16.gmra.mrb[0].mxu0 %v5054
        %v5165 = vpop.f32.mrb[0].mxu0
        %v5166 = vadd.f32 0.0, %v5165
        %v5167 = vpop.f32.mrb[0].mxu0
        %v5168 = vpop.f32.mrb[0].mxu0
        %v5169 = vadd.f32 0.0, %v5168
        %v5170 = vpop.f32.mrb[0].mxu0
        %5171 = vmatprep.mubr.bf16.mxu0 0
        %5172 = vmatmul.mubr.bf16.gmra.mrb[0].mxu0 %v5055
        %v5173 = vpop.f32.mrb[0].mxu0
        %v5174 = vadd.f32 0.0, %v5173
        %v5175 = vpop.f32.mrb[0].mxu0
        %v5176 = vpop.f32.mrb[0].mxu0
        %v5177 = vadd.f32 0.0, %v5176
        %v5178 = vpop.f32.mrb[0].mxu0
        %5179 = vmatprep.mubr.bf16.mxu0 0
        %5180 = vmatmul.mubr.bf16.gmra.mrb[0].mxu0 %v5056
        %v5181 = vpop.f32.mrb[0].mxu0
        %v5182 = vadd.f32 0.0, %v5181
        %v5183 = vpop.f32.mrb[0].mxu0
        %v5184 = vpop.f32.mrb[0].mxu0
        %v5185 = vadd.f32 0.0, %v5184
        %v5186 = vpop.f32.mrb[0].mxu0
        %5187 = vmatprep.mubr.bf16.mxu0 0
        %5188 = vmatmul.mubr.bf16.gmra.mrb[0].mxu0 %v5057
        %v5189 = vpop.f32.mrb[0].mxu0
        %v5190 = vadd.f32 0.0, %v5189
        %v5191 = vpop.f32.mrb[0].mxu0
        %v5192 = vpop.f32.mrb[0].mxu0
        %v5193 = vadd.f32 0.0, %v5192
        %v5194 = vpop.f32.mrb[0].mxu0
        %5195 = vmatprep.mubr.bf16.mxu0 0
        %5196 = vmatmul.mubr.bf16.gmra.mrb[0].mxu0 %v5058
        %v5197 = vpop.f32.mrb[0].mxu0
        %v5198 = vadd.f32 0.0, %v5197
        %v5199 = vpop.f32.mrb[0].mxu0
        %v5200 = vpop.f32.mrb[0].mxu0
        %v5201 = vadd.f32 0.0, %v5200
        %v5202 = vpop.f32.mrb[0].mxu0
        %5203 = vmatprep.mubr.bf16.mxu0 0
        %5204 = vmatmul.mubr.bf16.gmra.mrb[0].mxu0 %v5059
        %v5205 = vpop.f32.mrb[0].mxu0
        %v5206 = vadd.f32 0.0, %v5205
        %v5207 = vpop.f32.mrb[0].mxu0
        %v5208 = vpop.f32.mrb[0].mxu0
        %v5209 = vadd.f32 0.0, %v5208
        %v5210 = vpop.f32.mrb[0].mxu0
        %5211 = vmatprep.mubr.bf16.mxu0 0
        %5212 = vmatmul.mubr.bf16.gmra.mrb[0].mxu0 %v5060
        %v5213 = vpop.f32.mrb[0].mxu0
        %v5214 = vadd.f32 0.0, %v5213
        %v5215 = vpop.f32.mrb[0].mxu0
        %v5216 = vpop.f32.mrb[0].mxu0
        %v5217 = vadd.f32 0.0, %v5216
        %v5218 = vpop.f32.mrb[0].mxu0
        %5219 = vmatprep.mubr.bf16.mxu0 0
        %5220 = vmatmul.mubr.bf16.gmra.mrb[0].mxu0 %v5061
        %v5221 = vpop.f32.mrb[0].mxu0
        %v5222 = vadd.f32 0.0, %v5221
        %v5223 = vpop.f32.mrb[0].mxu0
        %v5224 = vpop.f32.mrb[0].mxu0
        %v5225 = vadd.f32 0.0, %v5224
        %v5226 = vpop.f32.mrb[0].mxu0
        %5227 = vmatprep.mubr.bf16.mxu0 0
        %5228 = vmatmul.mubr.bf16.gmra.mrb[0].mxu0 %v5062
        %v5229 = vpop.f32.mrb[0].mxu0
        %v5230 = vadd.f32 0.0, %v5229
        %v5231 = vpop.f32.mrb[0].mxu0
        %v5232 = vpop.f32.mrb[0].mxu0
        %v5233 = vadd.f32 0.0, %v5232
        %v5234 = vpop.f32.mrb[0].mxu0
        %5235 = vmatprep.mubr.bf16.mxu0 0
        %5236 = vmatmul.mubr.bf16.gmra.mrb[0].mxu0 %v5063
        %v5237 = vpop.f32.mrb[0].mxu0
        %v5238 = vadd.f32 0.0, %v5237
        %v5239 = vpop.f32.mrb[0].mxu0
        %v5240 = vpop.f32.mrb[0].mxu0
        %v5241 = vadd.f32 0.0, %v5240
        %v5242 = vpop.f32.mrb[0].mxu0
        %5243 = vdwg.mxu0
        %v5244 = vadd.f32 %v4695, %v5158
        %v5245 = vadd.f32 %v4696, %v5161
        %v5246 = vadd.f32 %v4697, %v5166
        %v5247 = vadd.f32 %v4698, %v5169
        %v5248 = vadd.f32 %v4699, %v5174
        %v5249 = vadd.f32 %v4700, %v5177
        %v5250 = vadd.f32 %v4701, %v5182
        %v5251 = vadd.f32 %v4702, %v5185
        %v5252 = vadd.f32 %v4703, %v5190
        %v5253 = vadd.f32 %v4704, %v5193
        %v5254 = vadd.f32 %v4705, %v5198
        %v5255 = vadd.f32 %v4706, %v5201
        %v5256 = vadd.f32 %v4707, %v5206
        %v5257 = vadd.f32 %v4708, %v5209
        %v5258 = vadd.f32 %v4709, %v5214
        %v5259 = vadd.f32 %v4710, %v5217
        %v5260 = vadd.f32 %v4711, %v5222
        %v5261 = vadd.f32 %v4712, %v5225
        %v5262 = vadd.f32 %v4713, %v5230
        %v5263 = vadd.f32 %v4714, %v5233
        %v5264 = vadd.f32 %v4715, %v5238
        %v5265 = vadd.f32 %v4716, %v5241
        %v5266 = vld [vmem:[%s4420] sm:$0xe]
        %v5267 = vld [vmem:[%s4420 + $0xc] sm:$0xe]
        %v5268 = vld [vmem:[%s4420 + $0x18] sm:$0xe]
        %v5269 = vld [vmem:[%s4420 + $0x24] sm:$0xe]
        %v5270 = vld [vmem:[%s4420 + $0x30] sm:$0xe]
        %v5271 = vld [vmem:[%s4420 + $0x3c] sm:$0xe]
        %v5272 = vld [vmem:[%s4420 + $0x48] sm:$0xe]
        %v5273 = vld [vmem:[%s4420 + $0x54] sm:$0xe]
        %v5274 = vld [vmem:[%s4420 + $0x60] sm:$0xe]
        %v5275 = vld [vmem:[%s4420 + $0x6c] sm:$0xe]
        %v5276 = vld [vmem:[%s4420 + $0x78] sm:$0xe]
        %v5310 = vrot.slane %v5266, 5
        %v5311 = vrot.slane %v5310, 4
        %v5312 = vrot.slane %v4718, 5
        %v5313 = vsel %vm4090, %v5311, %v5312
        %v5314 = vrot.slane %v5312, 4
        %v5315 = vrot.slane %v4719, 5
        %v5316 = vsel %vm4090, %v5314, %v5315
        %v5317 = vrot.slane %v5267, 5
        %v5318 = vrot.slane %v5317, 4
        %v5319 = vrot.slane %v4721, 5
        %v5320 = vsel %vm4090, %v5318, %v5319
        %v5321 = vrot.slane %v5319, 4
        %v5322 = vrot.slane %v4722, 5
        %v5323 = vsel %vm4090, %v5321, %v5322
        %v5324 = vrot.slane %v5268, 5
        %v5325 = vrot.slane %v5324, 4
        %v5326 = vrot.slane %v4724, 5
        %v5327 = vsel %vm4090, %v5325, %v5326
        %v5328 = vrot.slane %v5326, 4
        %v5329 = vrot.slane %v4725, 5
        %v5330 = vsel %vm4090, %v5328, %v5329
        %v5331 = vrot.slane %v5269, 5
        %v5332 = vrot.slane %v5331, 4
        %v5333 = vrot.slane %v4727, 5
        %v5334 = vsel %vm4090, %v5332, %v5333
        %v5335 = vrot.slane %v5333, 4
        %v5336 = vrot.slane %v4728, 5
        %v5337 = vsel %vm4090, %v5335, %v5336
        %v5338 = vrot.slane %v5270, 5
        %v5339 = vrot.slane %v5338, 4
        %v5340 = vrot.slane %v4730, 5
        %v5341 = vsel %vm4090, %v5339, %v5340
        %v5342 = vrot.slane %v5340, 4
        %v5343 = vrot.slane %v4731, 5
        %v5344 = vsel %vm4090, %v5342, %v5343
        %v5345 = vrot.slane %v5271, 5
        %v5346 = vrot.slane %v5345, 4
        %v5347 = vrot.slane %v4733, 5
        %v5348 = vsel %vm4090, %v5346, %v5347
        %v5349 = vrot.slane %v5347, 4
        %v5350 = vrot.slane %v4734, 5
        %v5351 = vsel %vm4090, %v5349, %v5350
        %v5352 = vrot.slane %v5272, 5
        %v5353 = vrot.slane %v5352, 4
        %v5354 = vrot.slane %v4736, 5
        %v5355 = vsel %vm4090, %v5353, %v5354
        %v5356 = vrot.slane %v5354, 4
        %v5357 = vrot.slane %v4737, 5
        %v5358 = vsel %vm4090, %v5356, %v5357
        %v5359 = vrot.slane %v5273, 5
        %v5360 = vrot.slane %v5359, 4
        %v5361 = vrot.slane %v4739, 5
        %v5362 = vsel %vm4090, %v5360, %v5361
        %v5363 = vrot.slane %v5361, 4
        %v5364 = vrot.slane %v4740, 5
        %v5365 = vsel %vm4090, %v5363, %v5364
        %v5366 = vrot.slane %v5274, 5
        %v5367 = vrot.slane %v5366, 4
        %v5368 = vrot.slane %v4742, 5
        %v5369 = vsel %vm4090, %v5367, %v5368
        %v5370 = vrot.slane %v5368, 4
        %v5371 = vrot.slane %v4743, 5
        %v5372 = vsel %vm4090, %v5370, %v5371
        %v5373 = vrot.slane %v5275, 5
        %v5374 = vrot.slane %v5373, 4
        %v5375 = vrot.slane %v4745, 5
        %v5376 = vsel %vm4090, %v5374, %v5375
        %v5377 = vrot.slane %v5375, 4
        %v5378 = vrot.slane %v4746, 5
        %v5379 = vsel %vm4090, %v5377, %v5378
        %v5380 = vrot.slane %v5276, 5
        %v5381 = vrot.slane %v5380, 4
        %v5382 = vrot.slane %v4748, 5
        %v5383 = vsel %vm4090, %v5381, %v5382
        %v5384 = vrot.slane %v5382, 4
        %v5385 = vrot.slane %v4749, 5
        %v5386 = vsel %vm4090, %v5384, %v5385
        %s5387 = scalar_lea.vmem [#allocation8], 320
        %v5388 = vld [vmem:[%s5387] sm:$0xf]
        %v5389 = vld [vmem:[%s5387 + $0x4] sm:$0xf]
        %v5390 = vld [vmem:[%s5387 + $0x8] sm:$0xf]
        %v5391 = vld [vmem:[%s5387 + $0xc] sm:$0xf]
        %v5392 = vld [vmem:[%s5387 + $0x10] sm:$0xf]
        %v5393 = vld [vmem:[%s5387 + $0x14] sm:$0xf]
        %v5394 = vld [vmem:[%s5387 + $0x18] sm:$0xf]
        %v5395 = vld [vmem:[%s5387 + $0x1c] sm:$0xf]
        %v5396 = vld [vmem:[%s5387 + $0x20] sm:$0xf]
        %v5397 = vld [vmem:[%s5387 + $0x24] sm:$0xf]
        %v5398 = vld [vmem:[%s5387 + $0x28] sm:$0xf]
        %v5399 = vld [vmem:[%s5387 + $0x2c] sm:$0xf]
        %v5400 = vld [vmem:[%s5387 + $0x30] sm:$0xf]
        %v5401 = vld [vmem:[%s5387 + $0x34] sm:$0xf]
        %v5402 = vld [vmem:[%s5387 + $0x38] sm:$0xf]
        %v5403 = vld [vmem:[%s5387 + $0x3c] sm:$0xf]
        %v5404 = vunpack.c.l.b16 %v5313
        %v5405 = vunpack.c.l.b16 %v5316
        %v5406 = vunpack.c.l.b16 %v5320
        %v5407 = vunpack.c.l.b16 %v5323
        %v5408 = vunpack.c.l.b16 %v5327
        %v5409 = vunpack.c.l.b16 %v5330
        %v5410 = vunpack.c.l.b16 %v5334
        %v5411 = vunpack.c.l.b16 %v5337
        %v5412 = vunpack.c.l.b16 %v5341
        %v5413 = vunpack.c.l.b16 %v5344
        %v5414 = vunpack.c.l.b16 %v5348
        %v5415 = vunpack.c.l.b16 %v5351
        %v5416 = vunpack.c.l.b16 %v5355
        %v5417 = vunpack.c.l.b16 %v5358
        %v5418 = vunpack.c.l.b16 %v5362
        %v5419 = vunpack.c.l.b16 %v5365
        %v5420 = vunpack.c.l.b16 %v5369
        %v5421 = vunpack.c.l.b16 %v5372
        %v5422 = vunpack.c.l.b16 %v5376
        %v5423 = vunpack.c.l.b16 %v5379
        %v5424 = vunpack.c.l.b16 %v5383
        %v5425 = vunpack.c.l.b16 %v5386
        %v5426 = vpack.c.b16 %v5405, %v5404
        %v5427 = vpack.c.b16 %v5407, %v5406
        %v5428 = vpack.c.b16 %v5409, %v5408
        %v5429 = vpack.c.b16 %v5411, %v5410
        %v5430 = vpack.c.b16 %v5413, %v5412
        %v5431 = vpack.c.b16 %v5415, %v5414
        %v5432 = vpack.c.b16 %v5417, %v5416
        %v5433 = vpack.c.b16 %v5419, %v5418
        %v5434 = vpack.c.b16 %v5421, %v5420
        %v5435 = vpack.c.b16 %v5423, %v5422
        %v5436 = vpack.c.b16 %v5425, %v5424
        %v5464 = vunpack.c.l.b16 %v5388
        %v5465 = vunpack.c.l.b16 %v5389
        %v5466 = vunpack.c.l.b16 %v5390
        %v5467 = vunpack.c.l.b16 %v5391
        %v5468 = vunpack.c.l.b16 %v5392
        %v5469 = vunpack.c.l.b16 %v5393
        %v5470 = vunpack.c.l.b16 %v5394
        %v5471 = vunpack.c.l.b16 %v5395
        %v5472 = vunpack.c.l.b16 %v5396
        %v5473 = vunpack.c.l.b16 %v5397
        %v5474 = vunpack.c.l.b16 %v5398
        %v5475 = vunpack.c.l.b16 %v5399
        %v5476 = vunpack.c.l.b16 %v5400
        %v5477 = vunpack.c.l.b16 %v5401
        %v5478 = vunpack.c.l.b16 %v5402
        %v5479 = vunpack.c.l.b16 %v5403
        %v5480 = vpack.c.b16 %v5465, %v5464
        %v5481 = vpack.c.b16 %v5467, %v5466
        %v5482 = vpack.c.b16 %v5469, %v5468
        %v5483 = vpack.c.b16 %v5471, %v5470
        %v5484 = vpack.c.b16 %v5473, %v5472
        %v5485 = vpack.c.b16 %v5475, %v5474
        %v5486 = vpack.c.b16 %v5477, %v5476
        %v5487 = vpack.c.b16 %v5479, %v5478
        %5496 = vmatprep.subr.bf16.mxu0 0
        %5497 = vmatpush1.bf16.msra.mxu0 %v5480
        %5498 = vmatprep.subr.bf16.mxu0 0
        %5499 = vmatpush1.bf16.msra.mxu0 %v5481
        %5500 = vmatprep.subr.bf16.mxu0 0
        %5501 = vmatpush1.bf16.msra.mxu0 %v5482
        %5502 = vmatprep.subr.bf16.mxu0 0
        %5503 = vmatpush1.bf16.msra.mxu0 %v5483
        %5504 = vmatprep.subr.bf16.mxu0 0
        %5505 = vmatpush1.bf16.msra.mxu0 %v5484
        %5506 = vmatprep.subr.bf16.mxu0 0
        %5507 = vmatpush1.bf16.msra.mxu0 %v5485
        %5508 = vmatprep.subr.bf16.mxu0 0
        %5509 = vmatpush1.bf16.msra.mxu0 %v5486
        %5510 = vmatprep.subr.bf16.mxu0 0
        %5511 = vmatpush1.bf16.msra.mxu0 %v5487
        %5512 = vmatprep.subr.bf16.mxu0 0
        %5513 = vmatpush1.bf16.msra.mxu0 0
        %5514 = vmatprep.subr.bf16.mxu0 0
        %5515 = vmatpush1.bf16.msra.mxu0 0
        %5516 = vmatprep.subr.bf16.mxu0 0
        %5517 = vmatpush1.bf16.msra.mxu0 0
        %5518 = vmatprep.subr.bf16.mxu0 0
        %5519 = vmatpush1.bf16.msra.mxu0 0
        %5520 = vmatprep.subr.bf16.mxu0 0
        %5521 = vmatpush1.bf16.msra.mxu0 0
        %5522 = vmatprep.subr.bf16.mxu0 0
        %5523 = vmatpush1.bf16.msra.mxu0 0
        %5524 = vmatprep.subr.bf16.mxu0 0
        %5525 = vmatpush1.bf16.msra.mxu0 0
        %5526 = vmatprep.subr.bf16.mxu0 0
        %5527 = vmatpush1.bf16.msra.mxu0 0
        %5528 = vmatprep.mubr.bf16.mxu0 0
        %5529 = vmatmul.mubr.bf16.gmra.mrb[0].mxu0 %v5426
        %v5530 = vpop.f32.mrb[0].mxu0
        %v5531 = vadd.f32 0.0, %v5530
        %v5532 = vpop.f32.mrb[0].mxu0
        %v5533 = vpop.f32.mrb[0].mxu0
        %v5534 = vadd.f32 0.0, %v5533
        %v5535 = vpop.f32.mrb[0].mxu0
        %5536 = vmatprep.mubr.bf16.mxu0 0
        %5537 = vmatmul.mubr.bf16.gmra.mrb[0].mxu0 %v5427
        %v5538 = vpop.f32.mrb[0].mxu0
        %v5539 = vadd.f32 0.0, %v5538
        %v5540 = vpop.f32.mrb[0].mxu0
        %v5541 = vpop.f32.mrb[0].mxu0
        %v5542 = vadd.f32 0.0, %v5541
        %v5543 = vpop.f32.mrb[0].mxu0
        %5544 = vmatprep.mubr.bf16.mxu0 0
        %5545 = vmatmul.mubr.bf16.gmra.mrb[0].mxu0 %v5428
        %v5546 = vpop.f32.mrb[0].mxu0
        %v5547 = vadd.f32 0.0, %v5546
        %v5548 = vpop.f32.mrb[0].mxu0
        %v5549 = vpop.f32.mrb[0].mxu0
        %v5550 = vadd.f32 0.0, %v5549
        %v5551 = vpop.f32.mrb[0].mxu0
        %5552 = vmatprep.mubr.bf16.mxu0 0
        %5553 = vmatmul.mubr.bf16.gmra.mrb[0].mxu0 %v5429
        %v5554 = vpop.f32.mrb[0].mxu0
        %v5555 = vadd.f32 0.0, %v5554
        %v5556 = vpop.f32.mrb[0].mxu0
        %v5557 = vpop.f32.mrb[0].mxu0
        %v5558 = vadd.f32 0.0, %v5557
        %v5559 = vpop.f32.mrb[0].mxu0
        %5560 = vmatprep.mubr.bf16.mxu0 0
        %5561 = vmatmul.mubr.bf16.gmra.mrb[0].mxu0 %v5430
        %v5562 = vpop.f32.mrb[0].mxu0
        %v5563 = vadd.f32 0.0, %v5562
        %v5564 = vpop.f32.mrb[0].mxu0
        %v5565 = vpop.f32.mrb[0].mxu0
        %v5566 = vadd.f32 0.0, %v5565
        %v5567 = vpop.f32.mrb[0].mxu0
        %5568 = vmatprep.mubr.bf16.mxu0 0
        %5569 = vmatmul.mubr.bf16.gmra.mrb[0].mxu0 %v5431
        %v5570 = vpop.f32.mrb[0].mxu0
        %v5571 = vadd.f32 0.0, %v5570
        %v5572 = vpop.f32.mrb[0].mxu0
        %v5573 = vpop.f32.mrb[0].mxu0
        %v5574 = vadd.f32 0.0, %v5573
        %v5575 = vpop.f32.mrb[0].mxu0
        %5576 = vmatprep.mubr.bf16.mxu0 0
        %5577 = vmatmul.mubr.bf16.gmra.mrb[0].mxu0 %v5432
        %v5578 = vpop.f32.mrb[0].mxu0
        %v5579 = vadd.f32 0.0, %v5578
        %v5580 = vpop.f32.mrb[0].mxu0
        %v5581 = vpop.f32.mrb[0].mxu0
        %v5582 = vadd.f32 0.0, %v5581
        %v5583 = vpop.f32.mrb[0].mxu0
        %5584 = vmatprep.mubr.bf16.mxu0 0
        %5585 = vmatmul.mubr.bf16.gmra.mrb[0].mxu0 %v5433
        %v5586 = vpop.f32.mrb[0].mxu0
        %v5587 = vadd.f32 0.0, %v5586
        %v5588 = vpop.f32.mrb[0].mxu0
        %v5589 = vpop.f32.mrb[0].mxu0
        %v5590 = vadd.f32 0.0, %v5589
        %v5591 = vpop.f32.mrb[0].mxu0
        %5592 = vmatprep.mubr.bf16.mxu0 0
        %5593 = vmatmul.mubr.bf16.gmra.mrb[0].mxu0 %v5434
        %v5594 = vpop.f32.mrb[0].mxu0
        %v5595 = vadd.f32 0.0, %v5594
        %v5596 = vpop.f32.mrb[0].mxu0
        %v5597 = vpop.f32.mrb[0].mxu0
        %v5598 = vadd.f32 0.0, %v5597
        %v5599 = vpop.f32.mrb[0].mxu0
        %5600 = vmatprep.mubr.bf16.mxu0 0
        %5601 = vmatmul.mubr.bf16.gmra.mrb[0].mxu0 %v5435
        %v5602 = vpop.f32.mrb[0].mxu0
        %v5603 = vadd.f32 0.0, %v5602
        %v5604 = vpop.f32.mrb[0].mxu0
        %v5605 = vpop.f32.mrb[0].mxu0
        %v5606 = vadd.f32 0.0, %v5605
        %v5607 = vpop.f32.mrb[0].mxu0
        %5608 = vmatprep.mubr.bf16.mxu0 0
        %5609 = vmatmul.mubr.bf16.gmra.mrb[0].mxu0 %v5436
        %v5610 = vpop.f32.mrb[0].mxu0
        %v5611 = vadd.f32 0.0, %v5610
        %v5612 = vpop.f32.mrb[0].mxu0
        %v5613 = vpop.f32.mrb[0].mxu0
        %v5614 = vadd.f32 0.0, %v5613
        %v5615 = vpop.f32.mrb[0].mxu0
        %5616 = vdwg.mxu0
        %v5617 = vadd.f32 %v5244, %v5531
        %v5618 = vadd.f32 %v5245, %v5534
        %v5619 = vadd.f32 %v5246, %v5539
        %v5620 = vadd.f32 %v5247, %v5542
        %v5621 = vadd.f32 %v5248, %v5547
        %v5622 = vadd.f32 %v5249, %v5550
        %v5623 = vadd.f32 %v5250, %v5555
        %v5624 = vadd.f32 %v5251, %v5558
        %v5625 = vadd.f32 %v5252, %v5563
        %v5626 = vadd.f32 %v5253, %v5566
        %v5627 = vadd.f32 %v5254, %v5571
        %v5628 = vadd.f32 %v5255, %v5574
        %v5629 = vadd.f32 %v5256, %v5579
        %v5630 = vadd.f32 %v5257, %v5582
        %v5631 = vadd.f32 %v5258, %v5587
        %v5632 = vadd.f32 %v5259, %v5590
        %v5633 = vadd.f32 %v5260, %v5595
        %v5634 = vadd.f32 %v5261, %v5598
        %v5635 = vadd.f32 %v5262, %v5603
        %v5636 = vadd.f32 %v5263, %v5606
        %v5637 = vadd.f32 %v5264, %v5611
        %v5638 = vadd.f32 %v5265, %v5614
        %v5639 = vld [vmem:[%s3191] sm:$0xf]
        %v5640 = vld [vmem:[%s3191 + $0x4] sm:$0xf]
        %v5641 = vld [vmem:[%s3191 + $0xc] sm:$0xf]
        %v5642 = vld [vmem:[%s3191 + $0x10] sm:$0xf]
        %v5643 = vld [vmem:[%s3191 + $0x18] sm:$0xf]
        %v5644 = vld [vmem:[%s3191 + $0x1c] sm:$0xf]
        %v5645 = vld [vmem:[%s3191 + $0x24] sm:$0xf]
        %v5646 = vld [vmem:[%s3191 + $0x28] sm:$0xf]
        %v5647 = vld [vmem:[%s3191 + $0x30] sm:$0xf]
        %v5648 = vld [vmem:[%s3191 + $0x34] sm:$0xf]
        %v5649 = vld [vmem:[%s3191 + $0x3c] sm:$0xf]
        %v5650 = vld [vmem:[%s3191 + $0x40] sm:$0xf]
        %v5651 = vld [vmem:[%s3191 + $0x48] sm:$0xf]
        %v5652 = vld [vmem:[%s3191 + $0x4c] sm:$0xf]
        %v5653 = vld [vmem:[%s3191 + $0x54] sm:$0xf]
        %v5654 = vld [vmem:[%s3191 + $0x58] sm:$0xf]
        %v5655 = vld [vmem:[%s3191 + $0x60] sm:$0xf]
        %v5656 = vld [vmem:[%s3191 + $0x64] sm:$0xf]
        %v5657 = vld [vmem:[%s3191 + $0x6c] sm:$0xf]
        %v5658 = vld [vmem:[%s3191 + $0x70] sm:$0xf]
        %v5659 = vld [vmem:[%s3191 + $0x78] sm:$0xf]
        %v5660 = vld [vmem:[%s3191 + $0x7c] sm:$0xf]
        %s5661 = scalar_lea.vmem [#allocation8], 384
        %v5662 = vld [vmem:[%s5661] sm:$0xf]
        %v5663 = vld [vmem:[%s5661 + $0x4] sm:$0xf]
        %v5664 = vld [vmem:[%s5661 + $0x8] sm:$0xf]
        %v5665 = vld [vmem:[%s5661 + $0xc] sm:$0xf]
        %v5666 = vld [vmem:[%s5661 + $0x10] sm:$0xf]
        %v5667 = vld [vmem:[%s5661 + $0x14] sm:$0xf]
        %v5668 = vld [vmem:[%s5661 + $0x18] sm:$0xf]
        %v5669 = vld [vmem:[%s5661 + $0x1c] sm:$0xf]
        %v5670 = vld [vmem:[%s5661 + $0x20] sm:$0xf]
        %v5671 = vld [vmem:[%s5661 + $0x24] sm:$0xf]
        %v5672 = vld [vmem:[%s5661 + $0x28] sm:$0xf]
        %v5673 = vld [vmem:[%s5661 + $0x2c] sm:$0xf]
        %v5674 = vld [vmem:[%s5661 + $0x30] sm:$0xf]
        %v5675 = vld [vmem:[%s5661 + $0x34] sm:$0xf]
        %v5676 = vld [vmem:[%s5661 + $0x38] sm:$0xf]
        %v5677 = vld [vmem:[%s5661 + $0x3c] sm:$0xf]
        %v5700 = vunpack.c.l.b16 %v5639
        %v5701 = vunpack.c.l.b16 %v5640
        %v5702 = vunpack.c.l.b16 %v5641
        %v5703 = vunpack.c.l.b16 %v5642
        %v5704 = vunpack.c.l.b16 %v5643
        %v5705 = vunpack.c.l.b16 %v5644
        %v5706 = vunpack.c.l.b16 %v5645
        %v5707 = vunpack.c.l.b16 %v5646
        %v5708 = vunpack.c.l.b16 %v5647
        %v5709 = vunpack.c.l.b16 %v5648
        %v5710 = vunpack.c.l.b16 %v5649
        %v5711 = vunpack.c.l.b16 %v5650
        %v5712 = vunpack.c.l.b16 %v5651
        %v5713 = vunpack.c.l.b16 %v5652
        %v5714 = vunpack.c.l.b16 %v5653
        %v5715 = vunpack.c.l.b16 %v5654
        %v5716 = vunpack.c.l.b16 %v5655
        %v5717 = vunpack.c.l.b16 %v5656
        %v5718 = vunpack.c.l.b16 %v5657
        %v5719 = vunpack.c.l.b16 %v5658
        %v5720 = vunpack.c.l.b16 %v5659
        %v5721 = vunpack.c.l.b16 %v5660
        %v5722 = vpack.c.b16 %v5701, %v5700
        %v5723 = vpack.c.b16 %v5703, %v5702
        %v5724 = vpack.c.b16 %v5705, %v5704
        %v5725 = vpack.c.b16 %v5707, %v5706
        %v5726 = vpack.c.b16 %v5709, %v5708
        %v5727 = vpack.c.b16 %v5711, %v5710
        %v5728 = vpack.c.b16 %v5713, %v5712
        %v5729 = vpack.c.b16 %v5715, %v5714
        %v5730 = vpack.c.b16 %v5717, %v5716
        %v5731 = vpack.c.b16 %v5719, %v5718
        %v5732 = vpack.c.b16 %v5721, %v5720
        %v5760 = vunpack.c.l.b16 %v5662
        %v5761 = vunpack.c.l.b16 %v5663
        %v5762 = vunpack.c.l.b16 %v5664
        %v5763 = vunpack.c.l.b16 %v5665
        %v5764 = vunpack.c.l.b16 %v5666
        %v5765 = vunpack.c.l.b16 %v5667
        %v5766 = vunpack.c.l.b16 %v5668
        %v5767 = vunpack.c.l.b16 %v5669
        %v5768 = vunpack.c.l.b16 %v5670
        %v5769 = vunpack.c.l.b16 %v5671
        %v5770 = vunpack.c.l.b16 %v5672
        %v5771 = vunpack.c.l.b16 %v5673
        %v5772 = vunpack.c.l.b16 %v5674
        %v5773 = vunpack.c.l.b16 %v5675
        %v5774 = vunpack.c.l.b16 %v5676
        %v5775 = vunpack.c.l.b16 %v5677
        %v5776 = vpack.c.b16 %v5761, %v5760
        %v5777 = vpack.c.b16 %v5763, %v5762
        %v5778 = vpack.c.b16 %v5765, %v5764
        %v5779 = vpack.c.b16 %v5767, %v5766
        %v5780 = vpack.c.b16 %v5769, %v5768
        %v5781 = vpack.c.b16 %v5771, %v5770
        %v5782 = vpack.c.b16 %v5773, %v5772
        %v5783 = vpack.c.b16 %v5775, %v5774
        %5792 = vmatprep.subr.bf16.mxu0 0
        %5793 = vmatpush1.bf16.msra.mxu0 %v5776
        %5794 = vmatprep.subr.bf16.mxu0 0
        %5795 = vmatpush1.bf16.msra.mxu0 %v5777
        %5796 = vmatprep.subr.bf16.mxu0 0
        %5797 = vmatpush1.bf16.msra.mxu0 %v5778
        %5798 = vmatprep.subr.bf16.mxu0 0
        %5799 = vmatpush1.bf16.msra.mxu0 %v5779
        %5800 = vmatprep.subr.bf16.mxu0 0
        %5801 = vmatpush1.bf16.msra.mxu0 %v5780
        %5802 = vmatprep.subr.bf16.mxu0 0
        %5803 = vmatpush1.bf16.msra.mxu0 %v5781
        %5804 = vmatprep.subr.bf16.mxu0 0
        %5805 = vmatpush1.bf16.msra.mxu0 %v5782
        %5806 = vmatprep.subr.bf16.mxu0 0
        %5807 = vmatpush1.bf16.msra.mxu0 %v5783
        %5808 = vmatprep.subr.bf16.mxu0 0
        %5809 = vmatpush1.bf16.msra.mxu0 0
        %5810 = vmatprep.subr.bf16.mxu0 0
        %5811 = vmatpush1.bf16.msra.mxu0 0
        %5812 = vmatprep.subr.bf16.mxu0 0
        %5813 = vmatpush1.bf16.msra.mxu0 0
        %5814 = vmatprep.subr.bf16.mxu0 0
        %5815 = vmatpush1.bf16.msra.mxu0 0
        %5816 = vmatprep.subr.bf16.mxu0 0
        %5817 = vmatpush1.bf16.msra.mxu0 0
        %5818 = vmatprep.subr.bf16.mxu0 0
        %5819 = vmatpush1.bf16.msra.mxu0 0
        %5820 = vmatprep.subr.bf16.mxu0 0
        %5821 = vmatpush1.bf16.msra.mxu0 0
        %5822 = vmatprep.subr.bf16.mxu0 0
        %5823 = vmatpush1.bf16.msra.mxu0 0
        %5824 = vmatprep.mubr.bf16.mxu0 0
        %5825 = vmatmul.mubr.bf16.gmra.mrb[0].mxu0 %v5722
        %v5826 = vpop.f32.mrb[0].mxu0
        %v5827 = vadd.f32 0.0, %v5826
        %v5828 = vpop.f32.mrb[0].mxu0
        %v5829 = vpop.f32.mrb[0].mxu0
        %v5830 = vadd.f32 0.0, %v5829
        %v5831 = vpop.f32.mrb[0].mxu0
        %5832 = vmatprep.mubr.bf16.mxu0 0
        %5833 = vmatmul.mubr.bf16.gmra.mrb[0].mxu0 %v5723
        %v5834 = vpop.f32.mrb[0].mxu0
        %v5835 = vadd.f32 0.0, %v5834
        %v5836 = vpop.f32.mrb[0].mxu0
        %v5837 = vpop.f32.mrb[0].mxu0
        %v5838 = vadd.f32 0.0, %v5837
        %v5839 = vpop.f32.mrb[0].mxu0
        %5840 = vmatprep.mubr.bf16.mxu0 0
        %5841 = vmatmul.mubr.bf16.gmra.mrb[0].mxu0 %v5724
        %v5842 = vpop.f32.mrb[0].mxu0
        %v5843 = vadd.f32 0.0, %v5842
        %v5844 = vpop.f32.mrb[0].mxu0
        %v5845 = vpop.f32.mrb[0].mxu0
        %v5846 = vadd.f32 0.0, %v5845
        %v5847 = vpop.f32.mrb[0].mxu0
        %5848 = vmatprep.mubr.bf16.mxu0 0
        %5849 = vmatmul.mubr.bf16.gmra.mrb[0].mxu0 %v5725
        %v5850 = vpop.f32.mrb[0].mxu0
        %v5851 = vadd.f32 0.0, %v5850
        %v5852 = vpop.f32.mrb[0].mxu0
        %v5853 = vpop.f32.mrb[0].mxu0
        %v5854 = vadd.f32 0.0, %v5853
        %v5855 = vpop.f32.mrb[0].mxu0
        %5856 = vmatprep.mubr.bf16.mxu0 0
        %5857 = vmatmul.mubr.bf16.gmra.mrb[0].mxu0 %v5726
        %v5858 = vpop.f32.mrb[0].mxu0
        %v5859 = vadd.f32 0.0, %v5858
        %v5860 = vpop.f32.mrb[0].mxu0
        %v5861 = vpop.f32.mrb[0].mxu0
        %v5862 = vadd.f32 0.0, %v5861
        %v5863 = vpop.f32.mrb[0].mxu0
        %5864 = vmatprep.mubr.bf16.mxu0 0
        %5865 = vmatmul.mubr.bf16.gmra.mrb[0].mxu0 %v5727
        %v5866 = vpop.f32.mrb[0].mxu0
        %v5867 = vadd.f32 0.0, %v5866
        %v5868 = vpop.f32.mrb[0].mxu0
        %v5869 = vpop.f32.mrb[0].mxu0
        %v5870 = vadd.f32 0.0, %v5869
        %v5871 = vpop.f32.mrb[0].mxu0
        %5872 = vmatprep.mubr.bf16.mxu0 0
        %5873 = vmatmul.mubr.bf16.gmra.mrb[0].mxu0 %v5728
        %v5874 = vpop.f32.mrb[0].mxu0
        %v5875 = vadd.f32 0.0, %v5874
        %v5876 = vpop.f32.mrb[0].mxu0
        %v5877 = vpop.f32.mrb[0].mxu0
        %v5878 = vadd.f32 0.0, %v5877
        %v5879 = vpop.f32.mrb[0].mxu0
        %5880 = vmatprep.mubr.bf16.mxu0 0
        %5881 = vmatmul.mubr.bf16.gmra.mrb[0].mxu0 %v5729
        %v5882 = vpop.f32.mrb[0].mxu0
        %v5883 = vadd.f32 0.0, %v5882
        %v5884 = vpop.f32.mrb[0].mxu0
        %v5885 = vpop.f32.mrb[0].mxu0
        %v5886 = vadd.f32 0.0, %v5885
        %v5887 = vpop.f32.mrb[0].mxu0
        %5888 = vmatprep.mubr.bf16.mxu0 0
        %5889 = vmatmul.mubr.bf16.gmra.mrb[0].mxu0 %v5730
        %v5890 = vpop.f32.mrb[0].mxu0
        %v5891 = vadd.f32 0.0, %v5890
        %v5892 = vpop.f32.mrb[0].mxu0
        %v5893 = vpop.f32.mrb[0].mxu0
        %v5894 = vadd.f32 0.0, %v5893
        %v5895 = vpop.f32.mrb[0].mxu0
        %5896 = vmatprep.mubr.bf16.mxu0 0
        %5897 = vmatmul.mubr.bf16.gmra.mrb[0].mxu0 %v5731
        %v5898 = vpop.f32.mrb[0].mxu0
        %v5899 = vadd.f32 0.0, %v5898
        %v5900 = vpop.f32.mrb[0].mxu0
        %v5901 = vpop.f32.mrb[0].mxu0
        %v5902 = vadd.f32 0.0, %v5901
        %v5903 = vpop.f32.mrb[0].mxu0
        %5904 = vmatprep.mubr.bf16.mxu0 0
        %5905 = vmatmul.mubr.bf16.gmra.mrb[0].mxu0 %v5732
        %v5906 = vpop.f32.mrb[0].mxu0
        %v5907 = vadd.f32 0.0, %v5906
        %v5908 = vpop.f32.mrb[0].mxu0
        %v5909 = vpop.f32.mrb[0].mxu0
        %v5910 = vadd.f32 0.0, %v5909
        %v5911 = vpop.f32.mrb[0].mxu0
        %5912 = vdwg.mxu0
        %v5913 = vadd.f32 %v5617, %v5827
        %v5914 = vadd.f32 %v5618, %v5830
        %v5915 = vadd.f32 %v5619, %v5835
        %v5916 = vadd.f32 %v5620, %v5838
        %v5917 = vadd.f32 %v5621, %v5843
        %v5918 = vadd.f32 %v5622, %v5846
        %v5919 = vadd.f32 %v5623, %v5851
        %v5920 = vadd.f32 %v5624, %v5854
        %v5921 = vadd.f32 %v5625, %v5859
        %v5922 = vadd.f32 %v5626, %v5862
        %v5923 = vadd.f32 %v5627, %v5867
        %v5924 = vadd.f32 %v5628, %v5870
        %v5925 = vadd.f32 %v5629, %v5875
        %v5926 = vadd.f32 %v5630, %v5878
        %v5927 = vadd.f32 %v5631, %v5883
        %v5928 = vadd.f32 %v5632, %v5886
        %v5929 = vadd.f32 %v5633, %v5891
        %v5930 = vadd.f32 %v5634, %v5894
        %v5931 = vadd.f32 %v5635, %v5899
        %v5932 = vadd.f32 %v5636, %v5902
        %v5933 = vadd.f32 %v5637, %v5907
        %v5934 = vadd.f32 %v5638, %v5910
        %v5935 = vld [vmem:[%s3191] sm:$0xf]
        %v5936 = vld [vmem:[%s3191 + $0x4] sm:$0xf]
        %v5937 = vld [vmem:[%s3191 + $0x8] sm:$0x1]
        %v5938 = vld [vmem:[%s3191 + $0xc] sm:$0xf]
        %v5939 = vld [vmem:[%s3191 + $0x10] sm:$0xf]
        %v5940 = vld [vmem:[%s3191 + $0x14] sm:$0x1]
        %v5941 = vld [vmem:[%s3191 + $0x18] sm:$0xf]
        %v5942 = vld [vmem:[%s3191 + $0x1c] sm:$0xf]
        %v5943 = vld [vmem:[%s3191 + $0x20] sm:$0x1]
        %v5944 = vld [vmem:[%s3191 + $0x24] sm:$0xf]
        %v5945 = vld [vmem:[%s3191 + $0x28] sm:$0xf]
        %v5946 = vld [vmem:[%s3191 + $0x2c] sm:$0x1]
        %v5947 = vld [vmem:[%s3191 + $0x30] sm:$0xf]
        %v5948 = vld [vmem:[%s3191 + $0x34] sm:$0xf]
        %v5949 = vld [vmem:[%s3191 + $0x38] sm:$0x1]
        %v5950 = vld [vmem:[%s3191 + $0x3c] sm:$0xf]
        %v5951 = vld [vmem:[%s3191 + $0x40] sm:$0xf]
        %v5952 = vld [vmem:[%s3191 + $0x44] sm:$0x1]
        %v5953 = vld [vmem:[%s3191 + $0x48] sm:$0xf]
        %v5954 = vld [vmem:[%s3191 + $0x4c] sm:$0xf]
        %v5955 = vld [vmem:[%s3191 + $0x50] sm:$0x1]
        %v5956 = vld [vmem:[%s3191 + $0x54] sm:$0xf]
        %v5957 = vld [vmem:[%s3191 + $0x58] sm:$0xf]
        %v5958 = vld [vmem:[%s3191 + $0x5c] sm:$0x1]
        %v5959 = vld [vmem:[%s3191 + $0x60] sm:$0xf]
        %v5960 = vld [vmem:[%s3191 + $0x64] sm:$0xf]
        %v5961 = vld [vmem:[%s3191 + $0x68] sm:$0x1]
        %v5962 = vld [vmem:[%s3191 + $0x6c] sm:$0xf]
        %v5963 = vld [vmem:[%s3191 + $0x70] sm:$0xf]
        %v5964 = vld [vmem:[%s3191 + $0x74] sm:$0x1]
        %v5965 = vld [vmem:[%s3191 + $0x78] sm:$0xf]
        %v5966 = vld [vmem:[%s3191 + $0x7c] sm:$0xf]
        %v5967 = vld [vmem:[%s3191 + $0x80] sm:$0x1]
        %v5969 = vshrl.u32 %v5935, 16
        %v5971 = vrot.slane %v5969, 4
        %v5972 = vshll.u32 %v5935, 16
        %v5974 = vrot.slane %v5972, 5
        %v5975 = vor.u32 %v5971, %v5974
        %v5976 = vrot.slane %v5975, 4
        %v5978 = vshll.u32 %v5936, 16
        %v5980 = vrot.slane %v5978, 5
        %v5981 = vsel %vm1681, %v5976, %v5980
        %v5982 = vshrl.u32 %v5936, 16
        %v5984 = vrot.slane %v5982, 4
        %v5985 = vor.u32 %v5984, %v5980
        %v5986 = vrot.slane %v5985, 4
        %v5988 = vshll.u32 %v5937, 16
        %v5990 = vrot.slane %v5988, 5
        %v5991 = vsel %vm1681, %v5986, %v5990
        %v5993 = vshrl.u32 %v5938, 16
        %v5995 = vrot.slane %v5993, 4
        %v5996 = vshll.u32 %v5938, 16
        %v5998 = vrot.slane %v5996, 5
        %v5999 = vor.u32 %v5995, %v5998
        %v6000 = vrot.slane %v5999, 4
        %v6002 = vshll.u32 %v5939, 16
        %v6004 = vrot.slane %v6002, 5
        %v6005 = vsel %vm1681, %v6000, %v6004
        %v6006 = vshrl.u32 %v5939, 16
        %v6008 = vrot.slane %v6006, 4
        %v6009 = vor.u32 %v6008, %v6004
        %v6010 = vrot.slane %v6009, 4
        %v6012 = vshll.u32 %v5940, 16
        %v6014 = vrot.slane %v6012, 5
        %v6015 = vsel %vm1681, %v6010, %v6014
        %v6017 = vshrl.u32 %v5941, 16
        %v6019 = vrot.slane %v6017, 4
        %v6020 = vshll.u32 %v5941, 16
        %v6022 = vrot.slane %v6020, 5
        %v6023 = vor.u32 %v6019, %v6022
        %v6024 = vrot.slane %v6023, 4
        %v6026 = vshll.u32 %v5942, 16
        %v6028 = vrot.slane %v6026, 5
        %v6029 = vsel %vm1681, %v6024, %v6028
        %v6030 = vshrl.u32 %v5942, 16
        %v6032 = vrot.slane %v6030, 4
        %v6033 = vor.u32 %v6032, %v6028
        %v6034 = vrot.slane %v6033, 4
        %v6036 = vshll.u32 %v5943, 16
        %v6038 = vrot.slane %v6036, 5
        %v6039 = vsel %vm1681, %v6034, %v6038
        %v6041 = vshrl.u32 %v5944, 16
        %v6043 = vrot.slane %v6041, 4
        %v6044 = vshll.u32 %v5944, 16
        %v6046 = vrot.slane %v6044, 5
        %v6047 = vor.u32 %v6043, %v6046
        %v6048 = vrot.slane %v6047, 4
        %v6050 = vshll.u32 %v5945, 16
        %v6052 = vrot.slane %v6050, 5
        %v6053 = vsel %vm1681, %v6048, %v6052
        %v6054 = vshrl.u32 %v5945, 16
        %v6056 = vrot.slane %v6054, 4
        %v6057 = vor.u32 %v6056, %v6052
        %v6058 = vrot.slane %v6057, 4
        %v6060 = vshll.u32 %v5946, 16
        %v6062 = vrot.slane %v6060, 5
        %v6063 = vsel %vm1681, %v6058, %v6062
        %v6065 = vshrl.u32 %v5947, 16
        %v6067 = vrot.slane %v6065, 4
        %v6068 = vshll.u32 %v5947, 16
        %v6070 = vrot.slane %v6068, 5
        %v6071 = vor.u32 %v6067, %v6070
        %v6072 = vrot.slane %v6071, 4
        %v6074 = vshll.u32 %v5948, 16
        %v6076 = vrot.slane %v6074, 5
        %v6077 = vsel %vm1681, %v6072, %v6076
        %v6078 = vshrl.u32 %v5948, 16
        %v6080 = vrot.slane %v6078, 4
        %v6081 = vor.u32 %v6080, %v6076
        %v6082 = vrot.slane %v6081, 4
        %v6084 = vshll.u32 %v5949, 16
        %v6086 = vrot.slane %v6084, 5
        %v6087 = vsel %vm1681, %v6082, %v6086
        %v6089 = vshrl.u32 %v5950, 16
        %v6091 = vrot.slane %v6089, 4
        %v6092 = vshll.u32 %v5950, 16
        %v6094 = vrot.slane %v6092, 5
        %v6095 = vor.u32 %v6091, %v6094
        %v6096 = vrot.slane %v6095, 4
        %v6098 = vshll.u32 %v5951, 16
        %v6100 = vrot.slane %v6098, 5
        %v6101 = vsel %vm1681, %v6096, %v6100
        %v6102 = vshrl.u32 %v5951, 16
        %v6104 = vrot.slane %v6102, 4
        %v6105 = vor.u32 %v6104, %v6100
        %v6106 = vrot.slane %v6105, 4
        %v6108 = vshll.u32 %v5952, 16
        %v6110 = vrot.slane %v6108, 5
        %v6111 = vsel %vm1681, %v6106, %v6110
        %v6113 = vshrl.u32 %v5953, 16
        %v6115 = vrot.slane %v6113, 4
        %v6116 = vshll.u32 %v5953, 16
        %v6118 = vrot.slane %v6116, 5
        %v6119 = vor.u32 %v6115, %v6118
        %v6120 = vrot.slane %v6119, 4
        %v6122 = vshll.u32 %v5954, 16
        %v6124 = vrot.slane %v6122, 5
        %v6125 = vsel %vm1681, %v6120, %v6124
        %v6126 = vshrl.u32 %v5954, 16
        %v6128 = vrot.slane %v6126, 4
        %v6129 = vor.u32 %v6128, %v6124
        %v6130 = vrot.slane %v6129, 4
        %v6132 = vshll.u32 %v5955, 16
        %v6134 = vrot.slane %v6132, 5
        %v6135 = vsel %vm1681, %v6130, %v6134
        %v6137 = vshrl.u32 %v5956, 16
        %v6139 = vrot.slane %v6137, 4
        %v6140 = vshll.u32 %v5956, 16
        %v6142 = vrot.slane %v6140, 5
        %v6143 = vor.u32 %v6139, %v6142
        %v6144 = vrot.slane %v6143, 4
        %v6146 = vshll.u32 %v5957, 16
        %v6148 = vrot.slane %v6146, 5
        %v6149 = vsel %vm1681, %v6144, %v6148
        %v6150 = vshrl.u32 %v5957, 16
        %v6152 = vrot.slane %v6150, 4
        %v6153 = vor.u32 %v6152, %v6148
        %v6154 = vrot.slane %v6153, 4
        %v6156 = vshll.u32 %v5958, 16
        %v6158 = vrot.slane %v6156, 5
        %v6159 = vsel %vm1681, %v6154, %v6158
        %v6161 = vshrl.u32 %v5959, 16
        %v6163 = vrot.slane %v6161, 4
        %v6164 = vshll.u32 %v5959, 16
        %v6166 = vrot.slane %v6164, 5
        %v6167 = vor.u32 %v6163, %v6166
        %v6168 = vrot.slane %v6167, 4
        %v6170 = vshll.u32 %v5960, 16
        %v6172 = vrot.slane %v6170, 5
        %v6173 = vsel %vm1681, %v6168, %v6172
        %v6174 = vshrl.u32 %v5960, 16
        %v6176 = vrot.slane %v6174, 4
        %v6177 = vor.u32 %v6176, %v6172
        %v6178 = vrot.slane %v6177, 4
        %v6180 = vshll.u32 %v5961, 16
        %v6182 = vrot.slane %v6180, 5
        %v6183 = vsel %vm1681, %v6178, %v6182
        %v6185 = vshrl.u32 %v5962, 16
        %v6187 = vrot.slane %v6185, 4
        %v6188 = vshll.u32 %v5962, 16
        %v6190 = vrot.slane %v6188, 5
        %v6191 = vor.u32 %v6187, %v6190
        %v6192 = vrot.slane %v6191, 4
        %v6194 = vshll.u32 %v5963, 16
        %v6196 = vrot.slane %v6194, 5
        %v6197 = vsel %vm1681, %v6192, %v6196
        %v6198 = vshrl.u32 %v5963, 16
        %v6200 = vrot.slane %v6198, 4
        %v6201 = vor.u32 %v6200, %v6196
        %v6202 = vrot.slane %v6201, 4
        %v6204 = vshll.u32 %v5964, 16
        %v6206 = vrot.slane %v6204, 5
        %v6207 = vsel %vm1681, %v6202, %v6206
        %v6209 = vshrl.u32 %v5965, 16
        %v6211 = vrot.slane %v6209, 4
        %v6212 = vshll.u32 %v5965, 16
        %v6214 = vrot.slane %v6212, 5
        %v6215 = vor.u32 %v6211, %v6214
        %v6216 = vrot.slane %v6215, 4
        %v6218 = vshll.u32 %v5966, 16
        %v6220 = vrot.slane %v6218, 5
        %v6221 = vsel %vm1681, %v6216, %v6220
        %v6222 = vshrl.u32 %v5966, 16
        %v6224 = vrot.slane %v6222, 4
        %v6225 = vor.u32 %v6224, %v6220
        %v6226 = vrot.slane %v6225, 4
        %v6228 = vshll.u32 %v5967, 16
        %v6230 = vrot.slane %v6228, 5
        %v6231 = vsel %vm1681, %v6226, %v6230
        %s6232 = scalar_lea.vmem [#allocation8], 448
        %v6233 = vld [vmem:[%s6232] sm:$0xf]
        %v6234 = vld [vmem:[%s6232 + $0x4] sm:$0xf]
        %v6235 = vld [vmem:[%s6232 + $0x8] sm:$0xf]
        %v6236 = vld [vmem:[%s6232 + $0xc] sm:$0xf]
        %v6237 = vld [vmem:[%s6232 + $0x10] sm:$0xf]
        %v6238 = vld [vmem:[%s6232 + $0x14] sm:$0xf]
        %v6239 = vld [vmem:[%s6232 + $0x18] sm:$0xf]
        %v6240 = vld [vmem:[%s6232 + $0x1c] sm:$0xf]
        %v6241 = vld [vmem:[%s6232 + $0x20] sm:$0xf]
        %v6242 = vld [vmem:[%s6232 + $0x24] sm:$0xf]
        %v6243 = vld [vmem:[%s6232 + $0x28] sm:$0xf]
        %v6244 = vld [vmem:[%s6232 + $0x2c] sm:$0xf]
        %v6245 = vld [vmem:[%s6232 + $0x30] sm:$0xf]
        %v6246 = vld [vmem:[%s6232 + $0x34] sm:$0xf]
        %v6247 = vld [vmem:[%s6232 + $0x38] sm:$0xf]
        %v6248 = vld [vmem:[%s6232 + $0x3c] sm:$0xf]
        %v6249 = vunpack.c.l.b16 %v5981
        %v6250 = vunpack.c.l.b16 %v5991
        %v6251 = vunpack.c.l.b16 %v6005
        %v6252 = vunpack.c.l.b16 %v6015
        %v6253 = vunpack.c.l.b16 %v6029
        %v6254 = vunpack.c.l.b16 %v6039
        %v6255 = vunpack.c.l.b16 %v6053
        %v6256 = vunpack.c.l.b16 %v6063
        %v6257 = vunpack.c.l.b16 %v6077
        %v6258 = vunpack.c.l.b16 %v6087
        %v6259 = vunpack.c.l.b16 %v6101
        %v6260 = vunpack.c.l.b16 %v6111
        %v6261 = vunpack.c.l.b16 %v6125
        %v6262 = vunpack.c.l.b16 %v6135
        %v6263 = vunpack.c.l.b16 %v6149
        %v6264 = vunpack.c.l.b16 %v6159
        %v6265 = vunpack.c.l.b16 %v6173
        %v6266 = vunpack.c.l.b16 %v6183
        %v6267 = vunpack.c.l.b16 %v6197
        %v6268 = vunpack.c.l.b16 %v6207
        %v6269 = vunpack.c.l.b16 %v6221
        %v6270 = vunpack.c.l.b16 %v6231
        %v6271 = vpack.c.b16 %v6250, %v6249
        %v6272 = vpack.c.b16 %v6252, %v6251
        %v6273 = vpack.c.b16 %v6254, %v6253
        %v6274 = vpack.c.b16 %v6256, %v6255
        %v6275 = vpack.c.b16 %v6258, %v6257
        %v6276 = vpack.c.b16 %v6260, %v6259
        %v6277 = vpack.c.b16 %v6262, %v6261
        %v6278 = vpack.c.b16 %v6264, %v6263
        %v6279 = vpack.c.b16 %v6266, %v6265
        %v6280 = vpack.c.b16 %v6268, %v6267
        %v6281 = vpack.c.b16 %v6270, %v6269
        %v6309 = vunpack.c.l.b16 %v6233
        %v6310 = vunpack.c.l.b16 %v6234
        %v6311 = vunpack.c.l.b16 %v6235
        %v6312 = vunpack.c.l.b16 %v6236
        %v6313 = vunpack.c.l.b16 %v6237
        %v6314 = vunpack.c.l.b16 %v6238
        %v6315 = vunpack.c.l.b16 %v6239
        %v6316 = vunpack.c.l.b16 %v6240
        %v6317 = vunpack.c.l.b16 %v6241
        %v6318 = vunpack.c.l.b16 %v6242
        %v6319 = vunpack.c.l.b16 %v6243
        %v6320 = vunpack.c.l.b16 %v6244
        %v6321 = vunpack.c.l.b16 %v6245
        %v6322 = vunpack.c.l.b16 %v6246
        %v6323 = vunpack.c.l.b16 %v6247
        %v6324 = vunpack.c.l.b16 %v6248
        %v6325 = vpack.c.b16 %v6310, %v6309
        %v6326 = vpack.c.b16 %v6312, %v6311
        %v6327 = vpack.c.b16 %v6314, %v6313
        %v6328 = vpack.c.b16 %v6316, %v6315
        %v6329 = vpack.c.b16 %v6318, %v6317
        %v6330 = vpack.c.b16 %v6320, %v6319
        %v6331 = vpack.c.b16 %v6322, %v6321
        %v6332 = vpack.c.b16 %v6324, %v6323
        %6341 = vmatprep.subr.bf16.mxu0 0
        %6342 = vmatpush1.bf16.msra.mxu0 %v6325
        %6343 = vmatprep.subr.bf16.mxu0 0
        %6344 = vmatpush1.bf16.msra.mxu0 %v6326
        %6345 = vmatprep.subr.bf16.mxu0 0
        %6346 = vmatpush1.bf16.msra.mxu0 %v6327
        %6347 = vmatprep.subr.bf16.mxu0 0
        %6348 = vmatpush1.bf16.msra.mxu0 %v6328
        %6349 = vmatprep.subr.bf16.mxu0 0
        %6350 = vmatpush1.bf16.msra.mxu0 %v6329
        %6351 = vmatprep.subr.bf16.mxu0 0
        %6352 = vmatpush1.bf16.msra.mxu0 %v6330
        %6353 = vmatprep.subr.bf16.mxu0 0
        %6354 = vmatpush1.bf16.msra.mxu0 %v6331
        %6355 = vmatprep.subr.bf16.mxu0 0
        %6356 = vmatpush1.bf16.msra.mxu0 %v6332
        %6357 = vmatprep.subr.bf16.mxu0 0
        %6358 = vmatpush1.bf16.msra.mxu0 0
        %6359 = vmatprep.subr.bf16.mxu0 0
        %6360 = vmatpush1.bf16.msra.mxu0 0
        %6361 = vmatprep.subr.bf16.mxu0 0
        %6362 = vmatpush1.bf16.msra.mxu0 0
        %6363 = vmatprep.subr.bf16.mxu0 0
        %6364 = vmatpush1.bf16.msra.mxu0 0
        %6365 = vmatprep.subr.bf16.mxu0 0
        %6366 = vmatpush1.bf16.msra.mxu0 0
        %6367 = vmatprep.subr.bf16.mxu0 0
        %6368 = vmatpush1.bf16.msra.mxu0 0
        %6369 = vmatprep.subr.bf16.mxu0 0
        %6370 = vmatpush1.bf16.msra.mxu0 0
        %6371 = vmatprep.subr.bf16.mxu0 0
        %6372 = vmatpush1.bf16.msra.mxu0 0
        %6373 = vmatprep.mubr.bf16.mxu0 0
        %6374 = vmatmul.mubr.bf16.gmra.mrb[0].mxu0 %v6271
        %v6375 = vpop.f32.mrb[0].mxu0
        %v6376 = vadd.f32 0.0, %v6375
        %v6377 = vpop.f32.mrb[0].mxu0
        %v6378 = vpop.f32.mrb[0].mxu0
        %v6379 = vadd.f32 0.0, %v6378
        %v6380 = vpop.f32.mrb[0].mxu0
        %6381 = vmatprep.mubr.bf16.mxu0 0
        %6382 = vmatmul.mubr.bf16.gmra.mrb[0].mxu0 %v6272
        %v6383 = vpop.f32.mrb[0].mxu0
        %v6384 = vadd.f32 0.0, %v6383
        %v6385 = vpop.f32.mrb[0].mxu0
        %v6386 = vpop.f32.mrb[0].mxu0
        %v6387 = vadd.f32 0.0, %v6386
        %v6388 = vpop.f32.mrb[0].mxu0
        %6389 = vmatprep.mubr.bf16.mxu0 0
        %6390 = vmatmul.mubr.bf16.gmra.mrb[0].mxu0 %v6273
        %v6391 = vpop.f32.mrb[0].mxu0
        %v6392 = vadd.f32 0.0, %v6391
        %v6393 = vpop.f32.mrb[0].mxu0
        %v6394 = vpop.f32.mrb[0].mxu0
        %v6395 = vadd.f32 0.0, %v6394
        %v6396 = vpop.f32.mrb[0].mxu0
        %6397 = vmatprep.mubr.bf16.mxu0 0
        %6398 = vmatmul.mubr.bf16.gmra.mrb[0].mxu0 %v6274
        %v6399 = vpop.f32.mrb[0].mxu0
        %v6400 = vadd.f32 0.0, %v6399
        %v6401 = vpop.f32.mrb[0].mxu0
        %v6402 = vpop.f32.mrb[0].mxu0
        %v6403 = vadd.f32 0.0, %v6402
        %v6404 = vpop.f32.mrb[0].mxu0
        %6405 = vmatprep.mubr.bf16.mxu0 0
        %6406 = vmatmul.mubr.bf16.gmra.mrb[0].mxu0 %v6275
        %v6407 = vpop.f32.mrb[0].mxu0
        %v6408 = vadd.f32 0.0, %v6407
        %v6409 = vpop.f32.mrb[0].mxu0
        %v6410 = vpop.f32.mrb[0].mxu0
        %v6411 = vadd.f32 0.0, %v6410
        %v6412 = vpop.f32.mrb[0].mxu0
        %6413 = vmatprep.mubr.bf16.mxu0 0
        %6414 = vmatmul.mubr.bf16.gmra.mrb[0].mxu0 %v6276
        %v6415 = vpop.f32.mrb[0].mxu0
        %v6416 = vadd.f32 0.0, %v6415
        %v6417 = vpop.f32.mrb[0].mxu0
        %v6418 = vpop.f32.mrb[0].mxu0
        %v6419 = vadd.f32 0.0, %v6418
        %v6420 = vpop.f32.mrb[0].mxu0
        %6421 = vmatprep.mubr.bf16.mxu0 0
        %6422 = vmatmul.mubr.bf16.gmra.mrb[0].mxu0 %v6277
        %v6423 = vpop.f32.mrb[0].mxu0
        %v6424 = vadd.f32 0.0, %v6423
        %v6425 = vpop.f32.mrb[0].mxu0
        %v6426 = vpop.f32.mrb[0].mxu0
        %v6427 = vadd.f32 0.0, %v6426
        %v6428 = vpop.f32.mrb[0].mxu0
        %6429 = vmatprep.mubr.bf16.mxu0 0
        %6430 = vmatmul.mubr.bf16.gmra.mrb[0].mxu0 %v6278
        %v6431 = vpop.f32.mrb[0].mxu0
        %v6432 = vadd.f32 0.0, %v6431
        %v6433 = vpop.f32.mrb[0].mxu0
        %v6434 = vpop.f32.mrb[0].mxu0
        %v6435 = vadd.f32 0.0, %v6434
        %v6436 = vpop.f32.mrb[0].mxu0
        %6437 = vmatprep.mubr.bf16.mxu0 0
        %6438 = vmatmul.mubr.bf16.gmra.mrb[0].mxu0 %v6279
        %v6439 = vpop.f32.mrb[0].mxu0
        %v6440 = vadd.f32 0.0, %v6439
        %v6441 = vpop.f32.mrb[0].mxu0
        %v6442 = vpop.f32.mrb[0].mxu0
        %v6443 = vadd.f32 0.0, %v6442
        %v6444 = vpop.f32.mrb[0].mxu0
        %6445 = vmatprep.mubr.bf16.mxu0 0
        %6446 = vmatmul.mubr.bf16.gmra.mrb[0].mxu0 %v6280
        %v6447 = vpop.f32.mrb[0].mxu0
        %v6448 = vadd.f32 0.0, %v6447
        %v6449 = vpop.f32.mrb[0].mxu0
        %v6450 = vpop.f32.mrb[0].mxu0
        %v6451 = vadd.f32 0.0, %v6450
        %v6452 = vpop.f32.mrb[0].mxu0
        %6453 = vmatprep.mubr.bf16.mxu0 0
        %6454 = vmatmul.mubr.bf16.gmra.mrb[0].mxu0 %v6281
        %v6455 = vpop.f32.mrb[0].mxu0
        %v6456 = vadd.f32 0.0, %v6455
        %v6457 = vpop.f32.mrb[0].mxu0
        %v6458 = vpop.f32.mrb[0].mxu0
        %v6459 = vadd.f32 0.0, %v6458
        %v6460 = vpop.f32.mrb[0].mxu0
        %6461 = vdwg.mxu0
        %v6462 = vadd.f32 %v5913, %v6376
        %v6463 = vadd.f32 %v5914, %v6379
        %v6464 = vadd.f32 %v5915, %v6384
        %v6465 = vadd.f32 %v5916, %v6387
        %v6466 = vadd.f32 %v5917, %v6392
        %v6467 = vadd.f32 %v5918, %v6395
        %v6468 = vadd.f32 %v5919, %v6400
        %v6469 = vadd.f32 %v5920, %v6403
        %v6470 = vadd.f32 %v5921, %v6408
        %v6471 = vadd.f32 %v5922, %v6411
        %v6472 = vadd.f32 %v5923, %v6416
        %v6473 = vadd.f32 %v5924, %v6419
        %v6474 = vadd.f32 %v5925, %v6424
        %v6475 = vadd.f32 %v5926, %v6427
        %v6476 = vadd.f32 %v5927, %v6432
        %v6477 = vadd.f32 %v5928, %v6435
        %v6478 = vadd.f32 %v5929, %v6440
        %v6479 = vadd.f32 %v5930, %v6443
        %v6480 = vadd.f32 %v5931, %v6448
        %v6481 = vadd.f32 %v5932, %v6451
        %v6482 = vadd.f32 %v5933, %v6456
        %v6483 = vadd.f32 %v5934, %v6459
        %v6484 = vld [vmem:[%s3191] sm:$0xe]
        %v6485 = vld [vmem:[%s3191 + $0xc] sm:$0xe]
        %v6486 = vld [vmem:[%s3191 + $0x18] sm:$0xe]
        %v6487 = vld [vmem:[%s3191 + $0x24] sm:$0xe]
        %v6488 = vld [vmem:[%s3191 + $0x30] sm:$0xe]
        %v6489 = vld [vmem:[%s3191 + $0x3c] sm:$0xe]
        %v6490 = vld [vmem:[%s3191 + $0x48] sm:$0xe]
        %v6491 = vld [vmem:[%s3191 + $0x54] sm:$0xe]
        %v6492 = vld [vmem:[%s3191 + $0x60] sm:$0xe]
        %v6493 = vld [vmem:[%s3191 + $0x6c] sm:$0xe]
        %v6494 = vld [vmem:[%s3191 + $0x78] sm:$0xe]
        %v6528 = vrot.slane %v6484, 5
        %v6529 = vrot.slane %v6528, 4
        %v6530 = vrot.slane %v5936, 5
        %v6531 = vsel %vm4090, %v6529, %v6530
        %v6532 = vrot.slane %v6530, 4
        %v6533 = vrot.slane %v5937, 5
        %v6534 = vsel %vm4090, %v6532, %v6533
        %v6535 = vrot.slane %v6485, 5
        %v6536 = vrot.slane %v6535, 4
        %v6537 = vrot.slane %v5939, 5
        %v6538 = vsel %vm4090, %v6536, %v6537
        %v6539 = vrot.slane %v6537, 4
        %v6540 = vrot.slane %v5940, 5
        %v6541 = vsel %vm4090, %v6539, %v6540
        %v6542 = vrot.slane %v6486, 5
        %v6543 = vrot.slane %v6542, 4
        %v6544 = vrot.slane %v5942, 5
        %v6545 = vsel %vm4090, %v6543, %v6544
        %v6546 = vrot.slane %v6544, 4
        %v6547 = vrot.slane %v5943, 5
        %v6548 = vsel %vm4090, %v6546, %v6547
        %v6549 = vrot.slane %v6487, 5
        %v6550 = vrot.slane %v6549, 4
        %v6551 = vrot.slane %v5945, 5
        %v6552 = vsel %vm4090, %v6550, %v6551
        %v6553 = vrot.slane %v6551, 4
        %v6554 = vrot.slane %v5946, 5
        %v6555 = vsel %vm4090, %v6553, %v6554
        %v6556 = vrot.slane %v6488, 5
        %v6557 = vrot.slane %v6556, 4
        %v6558 = vrot.slane %v5948, 5
        %v6559 = vsel %vm4090, %v6557, %v6558
        %v6560 = vrot.slane %v6558, 4
        %v6561 = vrot.slane %v5949, 5
        %v6562 = vsel %vm4090, %v6560, %v6561
        %v6563 = vrot.slane %v6489, 5
        %v6564 = vrot.slane %v6563, 4
        %v6565 = vrot.slane %v5951, 5
        %v6566 = vsel %vm4090, %v6564, %v6565
        %v6567 = vrot.slane %v6565, 4
        %v6568 = vrot.slane %v5952, 5
        %v6569 = vsel %vm4090, %v6567, %v6568
        %v6570 = vrot.slane %v6490, 5
        %v6571 = vrot.slane %v6570, 4
        %v6572 = vrot.slane %v5954, 5
        %v6573 = vsel %vm4090, %v6571, %v6572
        %v6574 = vrot.slane %v6572, 4
        %v6575 = vrot.slane %v5955, 5
        %v6576 = vsel %vm4090, %v6574, %v6575
        %v6577 = vrot.slane %v6491, 5
        %v6578 = vrot.slane %v6577, 4
        %v6579 = vrot.slane %v5957, 5
        %v6580 = vsel %vm4090, %v6578, %v6579
        %v6581 = vrot.slane %v6579, 4
        %v6582 = vrot.slane %v5958, 5
        %v6583 = vsel %vm4090, %v6581, %v6582
        %v6584 = vrot.slane %v6492, 5
        %v6585 = vrot.slane %v6584, 4
        %v6586 = vrot.slane %v5960, 5
        %v6587 = vsel %vm4090, %v6585, %v6586
        %v6588 = vrot.slane %v6586, 4
        %v6589 = vrot.slane %v5961, 5
        %v6590 = vsel %vm4090, %v6588, %v6589
        %v6591 = vrot.slane %v6493, 5
        %v6592 = vrot.slane %v6591, 4
        %v6593 = vrot.slane %v5963, 5
        %v6594 = vsel %vm4090, %v6592, %v6593
        %v6595 = vrot.slane %v6593, 4
        %v6596 = vrot.slane %v5964, 5
        %v6597 = vsel %vm4090, %v6595, %v6596
        %v6598 = vrot.slane %v6494, 5
        %v6599 = vrot.slane %v6598, 4
        %v6600 = vrot.slane %v5966, 5
        %v6601 = vsel %vm4090, %v6599, %v6600
        %v6602 = vrot.slane %v6600, 4
        %v6603 = vrot.slane %v5967, 5
        %v6604 = vsel %vm4090, %v6602, %v6603
        %s6605 = scalar_lea.vmem [#allocation8], 512
        %v6606 = vld [vmem:[%s6605] sm:$0xf]
        %v6607 = vld [vmem:[%s6605 + $0x4] sm:$0xf]
        %v6608 = vld [vmem:[%s6605 + $0x8] sm:$0xf]
        %v6609 = vld [vmem:[%s6605 + $0xc] sm:$0xf]
        %v6610 = vld [vmem:[%s6605 + $0x10] sm:$0xf]
        %v6611 = vld [vmem:[%s6605 + $0x14] sm:$0xf]
        %v6612 = vld [vmem:[%s6605 + $0x18] sm:$0xf]
        %v6613 = vld [vmem:[%s6605 + $0x1c] sm:$0xf]
        %v6614 = vld [vmem:[%s6605 + $0x20] sm:$0xf]
        %v6615 = vld [vmem:[%s6605 + $0x24] sm:$0xf]
        %v6616 = vld [vmem:[%s6605 + $0x28] sm:$0xf]
        %v6617 = vld [vmem:[%s6605 + $0x2c] sm:$0xf]
        %v6618 = vld [vmem:[%s6605 + $0x30] sm:$0xf]
        %v6619 = vld [vmem:[%s6605 + $0x34] sm:$0xf]
        %v6620 = vld [vmem:[%s6605 + $0x38] sm:$0xf]
        %v6621 = vld [vmem:[%s6605 + $0x3c] sm:$0xf]
        %v6622 = vunpack.c.l.b16 %v6531
        %v6623 = vunpack.c.l.b16 %v6534
        %v6624 = vunpack.c.l.b16 %v6538
        %v6625 = vunpack.c.l.b16 %v6541
        %v6626 = vunpack.c.l.b16 %v6545
        %v6627 = vunpack.c.l.b16 %v6548
        %v6628 = vunpack.c.l.b16 %v6552
        %v6629 = vunpack.c.l.b16 %v6555
        %v6630 = vunpack.c.l.b16 %v6559
        %v6631 = vunpack.c.l.b16 %v6562
        %v6632 = vunpack.c.l.b16 %v6566
        %v6633 = vunpack.c.l.b16 %v6569
        %v6634 = vunpack.c.l.b16 %v6573
        %v6635 = vunpack.c.l.b16 %v6576
        %v6636 = vunpack.c.l.b16 %v6580
        %v6637 = vunpack.c.l.b16 %v6583
        %v6638 = vunpack.c.l.b16 %v6587
        %v6639 = vunpack.c.l.b16 %v6590
        %v6640 = vunpack.c.l.b16 %v6594
        %v6641 = vunpack.c.l.b16 %v6597
        %v6642 = vunpack.c.l.b16 %v6601
        %v6643 = vunpack.c.l.b16 %v6604
        %v6644 = vpack.c.b16 %v6623, %v6622
        %v6645 = vpack.c.b16 %v6625, %v6624
        %v6646 = vpack.c.b16 %v6627, %v6626
        %v6647 = vpack.c.b16 %v6629, %v6628
        %v6648 = vpack.c.b16 %v6631, %v6630
        %v6649 = vpack.c.b16 %v6633, %v6632
        %v6650 = vpack.c.b16 %v6635, %v6634
        %v6651 = vpack.c.b16 %v6637, %v6636
        %v6652 = vpack.c.b16 %v6639, %v6638
        %v6653 = vpack.c.b16 %v6641, %v6640
        %v6654 = vpack.c.b16 %v6643, %v6642
        %v6682 = vunpack.c.l.b16 %v6606
        %v6683 = vunpack.c.l.b16 %v6607
        %v6684 = vunpack.c.l.b16 %v6608
        %v6685 = vunpack.c.l.b16 %v6609
        %v6686 = vunpack.c.l.b16 %v6610
        %v6687 = vunpack.c.l.b16 %v6611
        %v6688 = vunpack.c.l.b16 %v6612
        %v6689 = vunpack.c.l.b16 %v6613
        %v6690 = vunpack.c.l.b16 %v6614
        %v6691 = vunpack.c.l.b16 %v6615
        %v6692 = vunpack.c.l.b16 %v6616
        %v6693 = vunpack.c.l.b16 %v6617
        %v6694 = vunpack.c.l.b16 %v6618
        %v6695 = vunpack.c.l.b16 %v6619
        %v6696 = vunpack.c.l.b16 %v6620
        %v6697 = vunpack.c.l.b16 %v6621
        %v6698 = vpack.c.b16 %v6683, %v6682
        %v6699 = vpack.c.b16 %v6685, %v6684
        %v6700 = vpack.c.b16 %v6687, %v6686
        %v6701 = vpack.c.b16 %v6689, %v6688
        %v6702 = vpack.c.b16 %v6691, %v6690
        %v6703 = vpack.c.b16 %v6693, %v6692
        %v6704 = vpack.c.b16 %v6695, %v6694
        %v6705 = vpack.c.b16 %v6697, %v6696
        %6714 = vmatprep.subr.bf16.mxu0 0
        %6715 = vmatpush1.bf16.msra.mxu0 %v6698
        %6716 = vmatprep.subr.bf16.mxu0 0
        %6717 = vmatpush1.bf16.msra.mxu0 %v6699
        %6718 = vmatprep.subr.bf16.mxu0 0
        %6719 = vmatpush1.bf16.msra.mxu0 %v6700
        %6720 = vmatprep.subr.bf16.mxu0 0
        %6721 = vmatpush1.bf16.msra.mxu0 %v6701
        %6722 = vmatprep.subr.bf16.mxu0 0
        %6723 = vmatpush1.bf16.msra.mxu0 %v6702
        %6724 = vmatprep.subr.bf16.mxu0 0
        %6725 = vmatpush1.bf16.msra.mxu0 %v6703
        %6726 = vmatprep.subr.bf16.mxu0 0
        %6727 = vmatpush1.bf16.msra.mxu0 %v6704
        %6728 = vmatprep.subr.bf16.mxu0 0
        %6729 = vmatpush1.bf16.msra.mxu0 %v6705
        %6730 = vmatprep.subr.bf16.mxu0 0
        %6731 = vmatpush1.bf16.msra.mxu0 0
        %6732 = vmatprep.subr.bf16.mxu0 0
        %6733 = vmatpush1.bf16.msra.mxu0 0
        %6734 = vmatprep.subr.bf16.mxu0 0
        %6735 = vmatpush1.bf16.msra.mxu0 0
        %6736 = vmatprep.subr.bf16.mxu0 0
        %6737 = vmatpush1.bf16.msra.mxu0 0
        %6738 = vmatprep.subr.bf16.mxu0 0
        %6739 = vmatpush1.bf16.msra.mxu0 0
        %6740 = vmatprep.subr.bf16.mxu0 0
        %6741 = vmatpush1.bf16.msra.mxu0 0
        %6742 = vmatprep.subr.bf16.mxu0 0
        %6743 = vmatpush1.bf16.msra.mxu0 0
        %6744 = vmatprep.subr.bf16.mxu0 0
        %6745 = vmatpush1.bf16.msra.mxu0 0
        %6746 = vmatprep.mubr.bf16.mxu0 0
        %6747 = vmatmul.mubr.bf16.gmra.mrb[0].mxu0 %v6644
        %v6748 = vpop.f32.mrb[0].mxu0
        %v6749 = vadd.f32 0.0, %v6748
        %v6750 = vpop.f32.mrb[0].mxu0
        %v6751 = vpop.f32.mrb[0].mxu0
        %v6752 = vadd.f32 0.0, %v6751
        %v6753 = vpop.f32.mrb[0].mxu0
        %6754 = vmatprep.mubr.bf16.mxu0 0
        %6755 = vmatmul.mubr.bf16.gmra.mrb[0].mxu0 %v6645
        %v6756 = vpop.f32.mrb[0].mxu0
        %v6757 = vadd.f32 0.0, %v6756
        %v6758 = vpop.f32.mrb[0].mxu0
        %v6759 = vpop.f32.mrb[0].mxu0
        %v6760 = vadd.f32 0.0, %v6759
        %v6761 = vpop.f32.mrb[0].mxu0
        %6762 = vmatprep.mubr.bf16.mxu0 0
        %6763 = vmatmul.mubr.bf16.gmra.mrb[0].mxu0 %v6646
        %v6764 = vpop.f32.mrb[0].mxu0
        %v6765 = vadd.f32 0.0, %v6764
        %v6766 = vpop.f32.mrb[0].mxu0
        %v6767 = vpop.f32.mrb[0].mxu0
        %v6768 = vadd.f32 0.0, %v6767
        %v6769 = vpop.f32.mrb[0].mxu0
        %6770 = vmatprep.mubr.bf16.mxu0 0
        %6771 = vmatmul.mubr.bf16.gmra.mrb[0].mxu0 %v6647
        %v6772 = vpop.f32.mrb[0].mxu0
        %v6773 = vadd.f32 0.0, %v6772
        %v6774 = vpop.f32.mrb[0].mxu0
        %v6775 = vpop.f32.mrb[0].mxu0
        %v6776 = vadd.f32 0.0, %v6775
        %v6777 = vpop.f32.mrb[0].mxu0
        %6778 = vmatprep.mubr.bf16.mxu0 0
        %6779 = vmatmul.mubr.bf16.gmra.mrb[0].mxu0 %v6648
        %v6780 = vpop.f32.mrb[0].mxu0
        %v6781 = vadd.f32 0.0, %v6780
        %v6782 = vpop.f32.mrb[0].mxu0
        %v6783 = vpop.f32.mrb[0].mxu0
        %v6784 = vadd.f32 0.0, %v6783
        %v6785 = vpop.f32.mrb[0].mxu0
        %6786 = vmatprep.mubr.bf16.mxu0 0
        %6787 = vmatmul.mubr.bf16.gmra.mrb[0].mxu0 %v6649
        %v6788 = vpop.f32.mrb[0].mxu0
        %v6789 = vadd.f32 0.0, %v6788
        %v6790 = vpop.f32.mrb[0].mxu0
        %v6791 = vpop.f32.mrb[0].mxu0
        %v6792 = vadd.f32 0.0, %v6791
        %v6793 = vpop.f32.mrb[0].mxu0
        %6794 = vmatprep.mubr.bf16.mxu0 0
        %6795 = vmatmul.mubr.bf16.gmra.mrb[0].mxu0 %v6650
        %v6796 = vpop.f32.mrb[0].mxu0
        %v6797 = vadd.f32 0.0, %v6796
        %v6798 = vpop.f32.mrb[0].mxu0
        %v6799 = vpop.f32.mrb[0].mxu0
        %v6800 = vadd.f32 0.0, %v6799
        %v6801 = vpop.f32.mrb[0].mxu0
        %6802 = vmatprep.mubr.bf16.mxu0 0
        %6803 = vmatmul.mubr.bf16.gmra.mrb[0].mxu0 %v6651
        %v6804 = vpop.f32.mrb[0].mxu0
        %v6805 = vadd.f32 0.0, %v6804
        %v6806 = vpop.f32.mrb[0].mxu0
        %v6807 = vpop.f32.mrb[0].mxu0
        %v6808 = vadd.f32 0.0, %v6807
        %v6809 = vpop.f32.mrb[0].mxu0
        %6810 = vmatprep.mubr.bf16.mxu0 0
        %6811 = vmatmul.mubr.bf16.gmra.mrb[0].mxu0 %v6652
        %v6812 = vpop.f32.mrb[0].mxu0
        %v6813 = vadd.f32 0.0, %v6812
        %v6814 = vpop.f32.mrb[0].mxu0
        %v6815 = vpop.f32.mrb[0].mxu0
        %v6816 = vadd.f32 0.0, %v6815
        %v6817 = vpop.f32.mrb[0].mxu0
        %6818 = vmatprep.mubr.bf16.mxu0 0
        %6819 = vmatmul.mubr.bf16.gmra.mrb[0].mxu0 %v6653
        %v6820 = vpop.f32.mrb[0].mxu0
        %v6821 = vadd.f32 0.0, %v6820
        %v6822 = vpop.f32.mrb[0].mxu0
        %v6823 = vpop.f32.mrb[0].mxu0
        %v6824 = vadd.f32 0.0, %v6823
        %v6825 = vpop.f32.mrb[0].mxu0
        %6826 = vmatprep.mubr.bf16.mxu0 0
        %6827 = vmatmul.mubr.bf16.gmra.mrb[0].mxu0 %v6654
        %v6828 = vpop.f32.mrb[0].mxu0
        %v6829 = vadd.f32 0.0, %v6828
        %v6830 = vpop.f32.mrb[0].mxu0
        %v6831 = vpop.f32.mrb[0].mxu0
        %v6832 = vadd.f32 0.0, %v6831
        %v6833 = vpop.f32.mrb[0].mxu0
        %6834 = vdwg.mxu0
        %v6835 = vadd.f32 %v6462, %v6749
        %v6836 = vadd.f32 %v6463, %v6752
        %v6837 = vadd.f32 %v6464, %v6757
        %v6838 = vadd.f32 %v6465, %v6760
        %v6839 = vadd.f32 %v6466, %v6765
        %v6840 = vadd.f32 %v6467, %v6768
        %v6841 = vadd.f32 %v6468, %v6773
        %v6842 = vadd.f32 %v6469, %v6776
        %v6843 = vadd.f32 %v6470, %v6781
        %v6844 = vadd.f32 %v6471, %v6784
        %v6845 = vadd.f32 %v6472, %v6789
        %v6846 = vadd.f32 %v6473, %v6792
        %v6847 = vadd.f32 %v6474, %v6797
        %v6848 = vadd.f32 %v6475, %v6800
        %v6849 = vadd.f32 %v6476, %v6805
        %v6850 = vadd.f32 %v6477, %v6808
        %v6851 = vadd.f32 %v6478, %v6813
        %v6852 = vadd.f32 %v6479, %v6816
        %v6853 = vadd.f32 %v6480, %v6821
        %v6854 = vadd.f32 %v6481, %v6824
        %v6855 = vadd.f32 %v6482, %v6829
        %v6856 = vadd.f32 %v6483, %v6832
        %v6857 = vld [vmem:[%s6] sm:$0x1]
        %v6859 = vlaneseq
        %v6860 = vshrl.u32 %v6859, 7
        %v6861 = vsub.s32 0, %v6860
        %v6862 = vrot.slane %v6857, %v6861
        %v6864 = vadd.f32 %v6835, %v6862
        %v6865 = vadd.f32 %v6836, %v6862
        %v6866 = vadd.f32 %v6837, %v6862
        %v6867 = vadd.f32 %v6838, %v6862
        %v6868 = vadd.f32 %v6839, %v6862
        %v6869 = vadd.f32 %v6840, %v6862
        %v6870 = vadd.f32 %v6841, %v6862
        %v6871 = vadd.f32 %v6842, %v6862
        %v6872 = vadd.f32 %v6843, %v6862
        %v6873 = vadd.f32 %v6844, %v6862
        %v6874 = vadd.f32 %v6845, %v6862
        %v6875 = vadd.f32 %v6846, %v6862
        %v6876 = vadd.f32 %v6847, %v6862
        %v6877 = vadd.f32 %v6848, %v6862
        %v6878 = vadd.f32 %v6849, %v6862
        %v6879 = vadd.f32 %v6850, %v6862
        %v6880 = vadd.f32 %v6851, %v6862
        %v6881 = vadd.f32 %v6852, %v6862
        %v6882 = vadd.f32 %v6853, %v6862
        %v6883 = vadd.f32 %v6854, %v6862
        %v6884 = vadd.f32 %v6855, %v6862
        %v6885 = vadd.f32 %v6856, %v6862
        %6886 = vst [vmem:[%s322] sm:$0xff] %v6864
        %6887 = vst [vmem:[%s322 + $0x8] sm:$0xff] %v6865
        %6888 = vst [vmem:[%s322 + $0x10] sm:$0xff] %v6866
        %6889 = vst [vmem:[%s322 + $0x18] sm:$0xff] %v6867
        %6890 = vst [vmem:[%s322 + $0x20] sm:$0xff] %v6868
        %6891 = vst [vmem:[%s322 + $0x28] sm:$0xff] %v6869
        %6892 = vst [vmem:[%s322 + $0x30] sm:$0xff] %v6870
        %6893 = vst [vmem:[%s322 + $0x38] sm:$0xff] %v6871
        %6894 = vst [vmem:[%s322 + $0x40] sm:$0xff] %v6872
        %6895 = vst [vmem:[%s322 + $0x48] sm:$0xff] %v6873
        %6896 = vst [vmem:[%s322 + $0x50] sm:$0xff] %v6874
        %6897 = vst [vmem:[%s322 + $0x58] sm:$0xff] %v6875
        %6898 = vst [vmem:[%s322 + $0x60] sm:$0xff] %v6876
        %6899 = vst [vmem:[%s322 + $0x68] sm:$0xff] %v6877
        %6900 = vst [vmem:[%s322 + $0x70] sm:$0xff] %v6878
        %6901 = vst [vmem:[%s322 + $0x78] sm:$0xff] %v6879
        %6902 = vst [vmem:[%s322 + $0x80] sm:$0xff] %v6880
        %6903 = vst [vmem:[%s322 + $0x88] sm:$0xff] %v6881
        %6904 = vst [vmem:[%s322 + $0x90] sm:$0xff] %v6882
        %6905 = vst [vmem:[%s322 + $0x98] sm:$0xff] %v6883
        %6906 = vst [vmem:[%s322 + $0xa0] sm:$0xff] %v6884
        %6907 = vst [vmem:[%s322 + $0xa8] sm:$0xff] %v6885
        %p6908 = scmp.lt.s32.totalorder %s20, 1
        %s6909 = scalar_select %p6908, %s20, 1
        %s6910 = smul.addr %s6909, 22
        %s6911 = smul.addr %s6910, 8
        %s6912 = scalar_lea.vmem %s7, %s6911
        // Predicated region
        $region61: #{model_forward.1} parent=47 // pred_check
          %p6913 = pneg %p190
        $region62: #{model_forward.1} parent=47 // pred_check_branch
          %6915 = sbr.rel (%p6913) target = $region64
        $region63: #{model_forward.1} parent=47 // pred_region
          _
        $region64: #{model_forward.1} parent=47 // pred_fallthru
          _
      $region48: #{model_forward.1} parent=5 // pred_fallthru
        _
      %p6916 = scmp.le.s32.totalorder 2, %s15
      // Predicated region
      $region65: #{model_forward.1} parent=5 // pred_check
        %p6917 = pneg %p6916
      $region66: #{model_forward.1} parent=5 // pred_check_branch
        %6919 = sbr.rel (%p6917) target = $region68
      $region67: #{model_forward.1} parent=5 // pred_region
        %s6920 = ssub.s32 %s15, 2
        // Predicated region
        $region69: #{model_forward.1} parent=67 // pred_check
          %p6921 = pneg %p196
        $region70: #{model_forward.1} parent=67 // pred_check_branch
          %6923 = sbr.rel (%p6921) target = $region72
        $region71: #{model_forward.1} parent=67 // pred_region
          %p6924 = scmp.lt.s32.totalorder %s21, 1
          %s6925 = scalar_select %p6924, %s21, 1
          %s6926 = smul.addr %s6925, 22
          %s6927 = smul.addr %s6926, 8
          %s6928 = scalar_lea.vmem %s7, %s6927
        $region72: #{model_forward.1} parent=67 // pred_fallthru
          _
      $region68: #{model_forward.1} parent=5 // pred_fallthru
        _
    $region6: #{model_forward.1} parent=1 // loop_footer
      %s19 = sadd.s32 1, %s15
    $region7: #{model_forward.1} parent=1 // loop_footer_branch
      %14 = sbr.rel target = $region3
    $region8: #{model_forward.1} parent=1 // loop_exit
      _
    %6929 = vsyncpa [#allocation5], 1
    %s6930 = scalar_lea.sflag [#allocation5], 1
    %6931 = vsyncpa %s6930, 1
    %6932 = vsyncpa [#allocation7], 1

</llo_original>
